<compile_context>
chip_gen: v7x
topology: tpu7x:2x2x1
jax: 0.10.0
libtpu: 0.0.40
codegen_flags: <defaults>
</compile_context>

<pallas_src>
import jax
import jax.numpy as jnp
from jax import lax
from jax.experimental import pallas as pl
from jax.experimental.pallas import tpu as pltpu

_EPS = 1e-5
_LANE = 128


# ------------------------------- small helpers -------------------------------

def _round_up(x, m):
    return (x + m - 1) // m * m


def _vmem_limit_bytes():
    """Generation-aware VMEM limit (~75% of physical)."""
    cap = 128 * 1024 * 1024
    try:
        cap = int(getattr(pltpu.get_tpu_info(), "vmem_capacity_bytes", cap))
    except Exception:
        pass
    return (cap * 3) // 4


def _conv_vmem_estimate(R, W, cinp, coutp):
    blk_in = R * W * cinp * 2            # bf16 activation block
    blk_out = R * W * coutp * 2          # bf16 conv-output block
    wgt = 9 * cinp * coutp * 2           # bf16 im2col weights
    pad = (R + 2) * (W + 2) * cinp * 4   # f32 halo'd pad scratch
    col = (R + 2) * W * 3 * cinp * 2     # bf16 dw-only im2col scratch
    tmp = R * W * coutp * 4 + R * W * 3 * cinp * 2   # acc + lhs temporaries
    halo = 2 * W * cinp * 2
    return 2 * (blk_in + blk_out + wgt) + pad + col + tmp + halo


def _pick_row_tile(H, W, cinp, coutp, vmem_limit):
    """Largest row tile (multiple of 8, dividing H) fitting ~40% of the VMEM limit."""
    budget = int(vmem_limit * 0.4)
    best = 8
    for r in range(8, H + 1, 8):
        if H % r == 0 and _conv_vmem_estimate(r, W, cinp, coutp) <= budget:
            best = r
    return best


def _prep_weight(w, cinp, coutp):
    """(3,3,Cin,Cout) HWIO -> (3, 3*Cinp, Coutp) bf16, zero-padded to lane multiples."""
    kh, kw, cin, cout = w.shape
    w = jnp.pad(w, ((0, 0), (0, 0), (0, cinp - cin), (0, coutp - cout)))
    return w.reshape(kh, kw * cinp, coutp).astype(jnp.bfloat16)


# -------------------------------- conv kernels --------------------------------

def _conv_body(x_blk, x_any, scale_ref, shift_ref, w_ref, y_ref, stats_ref,
               pad_sc, col_sc, halo_sc, sum_sc, sq_sc, sem):
    """One (batch n, row-tile r) grid step of conv3x3 (+ optional BN+ReLU on the input).

    x_blk    : (1, R, W, Cp)     bf16  current R-row tile (auto-pipelined)
    x_any    : (N, H, W, Cp)     bf16  same tensor, raw HBM ref for the 2 halo rows
    scale/shift : (1, Cp)        f32   BN scale/shift fused into the conv INPUT (or None)
    w_ref    : (3, 3*Cp, Coutp)  bf16  one (3*Cp, Coutp) slab per kernel row dh
    y_ref    : (1, R, W, Coutp)  bf16  raw conv output (pre-BN)
    stats_ref: (1, 2, Coutp)     f32   per-batch-element [sum; sumsq], flushed at r==T-1
    """
    n = pl.program_id(0)
    r = pl.program_id(1)
    T = pl.num_programs(1)
    _, R, W, Cp = x_blk.shape
    Coutp = y_ref.shape[-1]
    H = R * T

    # Kick off the two halo-row DMAs (image rows r*R-1 and r*R+R, clamped at the
    # edges; boundary rows are overwritten with zeros after the wait).  These tiny
    # copies overlap with the interior BN/ReLU + pad-scratch writes below.
    top_row = jnp.maximum(r * R - 1, 0)
    bot_row = jnp.minimum(r * R + R, H - 1)
    top_cp = pltpu.make_async_copy(x_any.at[n, top_row], halo_sc.at[0], sem.at[0])
    bot_cp = pltpu.make_async_copy(x_any.at[n, bot_row], halo_sc.at[1], sem.at[1])
    top_cp.start()
    bot_cp.start()

    # Once per batch element: zero the left/right zero-padding columns (never written
    # again) and reset the stats accumulators.
    @pl.when(r == 0)
    def _():
        pad_sc[:, 0:1, :] = jnp.zeros((R + 2, 1, Cp), pad_sc.dtype)
        pad_sc[:, W + 1:W + 2, :] = jnp.zeros((R + 2, 1, Cp), pad_sc.dtype)
        sum_sc[...] = jnp.zeros_like(sum_sc)
        sq_sc[...] = jnp.zeros_like(sq_sc)

    def bn_act(v):
        v = v.astype(jnp.float32)
        if scale_ref is not None:                     # BN + ReLU fused into the conv input
            v = jnp.maximum(v * scale_ref[...] + shift_ref[...], 0.0)
        return v.astype(pad_sc.dtype)

    # Interior rows of the halo'd pad scratch (f32: BN math stays on the f32 VPU path).
    pad_sc[1:R + 1, 1:W + 1, :] = bn_act(x_blk[0])

    # Halo rows: BN first, then zero at the image boundary (order matters because
    # BN(0) = shift, which is nonzero in general).
    top_cp.wait()
    bot_cp.wait()
    pad_sc[0:1, 1:W + 1, :] = bn_act(halo_sc[0:1])
    pad_sc[R + 1:R + 2, 1:W + 1, :] = bn_act(halo_sc[1:2])
    zero_row = jnp.zeros((1, W, Cp), pad_sc.dtype)

    @pl.when(r == 0)
    def _():
        pad_sc[0:1, 1:W + 1, :] = zero_row            # conv zero-padding above the image

    @pl.when(r == T - 1)
    def _():
        pad_sc[R + 1:R + 2, 1:W + 1, :] = zero_row    # ... and below

    # dw-only im2col: 3 bf16 copies (lane offsets are multiples of 128 -> aligned vst).
    for dw in range(3):
        col_sc[:, :, dw * Cp:(dw + 1) * Cp] = pad_sc[:, dw:dw + W, :].astype(col_sc.dtype)

    # 3 accumulated MXU matmuls (K = 3*Cp); the dh slice of col_sc is a free
    # leading-dim address offset.
    acc = jnp.zeros((R * W, Coutp), jnp.float32)
    for dh in range(3):
        lhs = col_sc[dh:dh + R].reshape(R * W, 3 * Cp)
        acc = acc + lax.dot_general(
            lhs, w_ref[dh],
            dimension_numbers=(((1,), (0,)), ((), ())),
            preferred_element_type=jnp.float32)
    acc = acc.reshape(R, W, Coutp)

    y_ref[0] = acc.astype(y_ref.dtype)

    # Per-channel sum / sum-of-squares, accumulated in 8-sublane scratches with
    # full-tile adds; flushed to the (1, 2, Coutp) output once per batch element.
    g = R // 8
    acc4 = acc.reshape(g, 8, W, Coutp)
    sum_sc[...] += jnp.sum(acc4, axis=(0, 2))
    sq_sc[...] += jnp.sum(jnp.square(acc4), axis=(0, 2))

    @pl.when(r == T - 1)
    def _():
        stats_ref[0] = jnp.concatenate(
            [jnp.sum(sum_sc[...], axis=0, keepdims=True),
             jnp.sum(sq_sc[...], axis=0, keepdims=True)], axis=0)


def _conv_kernel(x_blk, x_any, w_ref, y_ref, stats_ref,
                 pad_sc, col_sc, halo_sc, sum_sc, sq_sc, sem):
    _conv_body(x_blk, x_any, None, None, w_ref, y_ref, stats_ref,
               pad_sc, col_sc, halo_sc, sum_sc, sq_sc, sem)


def _bnrelu_conv_kernel(x_blk, x_any, scale_ref, shift_ref, w_ref, y_ref, stats_ref,
                        pad_sc, col_sc, halo_sc, sum_sc, sq_sc, sem):
    _conv_body(x_blk, x_any, scale_ref, shift_ref, w_ref, y_ref, stats_ref,
               pad_sc, col_sc, halo_sc, sum_sc, sq_sc, sem)


# ------------------------------- pallas wrappers -------------------------------

def _conv3x3_stats(x, w, scale=None, shift=None, *, row_tile, vmem_limit):
    """conv3x3 (optionally with BN+ReLU fused into its input) + per-n batch stats."""
    N, H, W, Cp = x.shape
    Coutp = w.shape[-1]
    R = row_tile
    T = H // R

    fuse = scale is not None
    kernel = _bnrelu_conv_kernel if fuse else _conv_kernel

    in_specs = [
        pl.BlockSpec((1, R, W, Cp), lambda n, r: (n, r, 0, 0)),   # pipelined row tile
        pl.BlockSpec(memory_space=pl.ANY),                        # raw HBM ref (halo DMAs)
    ]
    args = [x, x]
    if fuse:
        in_specs += [pl.BlockSpec((1, Cp), lambda n, r: (0, 0)),
                     pl.BlockSpec((1, Cp), lambda n, r: (0, 0))]
        args += [scale, shift]
    in_specs += [pl.BlockSpec((3, 3 * Cp, Coutp), lambda n, r: (0, 0, 0))]
    args += [w]

    return pl.pallas_call(
        kernel,
        out_shape=(jax.ShapeDtypeStruct((N, H, W, Coutp), jnp.bfloat16),
                   jax.ShapeDtypeStruct((N, 2, Coutp), jnp.float32)),
        grid=(N, T),
        in_specs=in_specs,
        out_specs=(pl.BlockSpec((1, R, W, Coutp), lambda n, r: (n, r, 0, 0)),
                   pl.BlockSpec((1, 2, Coutp), lambda n, r: (n, 0, 0))),
        scratch_shapes=[
            pltpu.VMEM((R + 2, W + 2, Cp), jnp.float32),    # halo'd pad scratch (f32 BN math)
            pltpu.VMEM((R + 2, W, 3 * Cp), jnp.bfloat16),   # dw-only im2col scratch (bf16)
            pltpu.VMEM((2, W, Cp), jnp.bfloat16),           # halo-row DMA staging
            pltpu.VMEM((8, Coutp), jnp.float32),            # per-channel sum accumulator
            pltpu.VMEM((8, Coutp), jnp.float32),            # per-channel sumsq accumulator
            pltpu.SemaphoreType.DMA((2,)),
        ],
        compiler_params=pltpu.CompilerParams(
            # batch axis is parallel-safe (per-n partial stats) -> both TCs on v7x;
            # row-tile axis carries the resident stats accumulator -> arbitrary.
            dimension_semantics=("parallel", "arbitrary"),
            vmem_limit_bytes=vmem_limit),
    )(*args)


def _bn_scale_shift(stats, gamma, beta, count):
    """Finalize training-mode BN (biased variance, eps=1e-5) -> padded (scale, shift)."""
    cp = stats.shape[-1]
    s = jnp.sum(stats, axis=0)                          # reduce per-batch-element partials
    mean = s[0] / count
    var = jnp.maximum(s[1] / count - mean * mean, 0.0)
    g = jnp.pad(gamma.astype(jnp.float32), (0, cp - gamma.shape[0]))
    b = jnp.pad(beta.astype(jnp.float32), (0, cp - beta.shape[0]))
    scale = g * lax.rsqrt(var + _EPS)
    shift = b - mean * scale
    return scale.reshape(1, cp), shift.reshape(1, cp)


def vgg_block(x_nchw, params, *, row_tile=None):
    """Forward pass equivalent to VGGBlock.forward (training-mode BN). NCHW in/out, f32."""
    N, Cin, H, W = x_nchw.shape
    C1 = params["w1"].shape[-1]
    C2 = params["w2"].shape[-1]
    assert H % 8 == 0 and W % 8 == 0, "spatial dims must be multiples of 8"
    Cinp, C1p, C2p = (_round_up(c, _LANE) for c in (Cin, C1, C2))
    count = N * H * W

    vmem_limit = _vmem_limit_bytes()
    if row_tile is None:
        row_tile = _pick_row_tile(H, W, max(Cinp, C1p), max(C1p, C2p), vmem_limit)
    assert row_tile % 8 == 0 and H % row_tile == 0

    # NCHW -> NHWC, lane-pad channels to a multiple of 128, bf16 MXU operands.
    # (one fused XLA pass; folding it into the first conv kernel is a TODO above).
    x = jnp.transpose(x_nchw, (0, 2, 3, 1)).astype(jnp.bfloat16)
    x = jnp.pad(x, ((0, 0), (0, 0), (0, 0), (0, Cinp - Cin)))
    w1 = _prep_weight(params["w1"], Cinp, C1p)
    w2 = _prep_weight(params["w2"], C1p, C2p)
    # NOTE: conv biases b1/b2 are not applied -- a per-channel constant is exactly
    # cancelled by the training-mode BN mean subtraction that follows each conv.

    y1, stats1 = _conv3x3_stats(x, w1, row_tile=row_tile, vmem_limit=vmem_limit)
    scale1, shift1 = _bn_scale_shift(stats1, params["g1"], params["beta1"], count)

    y2, stats2 = _conv3x3_stats(y1, w2, scale1, shift1,
                                row_tile=row_tile, vmem_limit=vmem_limit)
    scale2, shift2 = _bn_scale_shift(stats2, params["g2"], params["beta2"], count)

    # Final BN2 + ReLU + channel un-pad + NHWC->NCHW: one fused, memory-bound XLA
    # pass (single read of y2, single write of the output) -- replaces the previous
    # Pallas elementwise kernel + wrapper transpose (two extra HBM round trips).
    out = jnp.maximum(
        y2[..., :C2].astype(jnp.float32) * scale2[0, :C2] + shift2[0, :C2], 0.0)
    return jnp.transpose(out, (0, 3, 1, 2))


# ------------------------------ reference & init ------------------------------

def vgg_block_reference(x_nchw, params):
    """Pure-JAX reference mirroring the kernels' dtype pathway (bf16 conv operands /
    HBM intermediates, f32 BN math).  Conv biases are omitted exactly as in the
    kernels: in training-mode BN the batch-mean subtraction cancels any per-channel
    constant, so the forward values are unchanged."""
    def conv(a_bf16, w):
        return lax.conv_general_dilated(
            a_bf16.astype(jnp.float32),
            w.astype(jnp.bfloat16).astype(jnp.float32),
            window_strides=(1, 1), padding="SAME",
            dimension_numbers=("NHWC", "HWIO", "NHWC"),
            precision=lax.Precision.HIGHEST)

    def bn_relu(acc, gamma, beta):
        mean = jnp.mean(acc, axis=(0, 1, 2))
        var = jnp.mean(jnp.square(acc), axis=(0, 1, 2)) - jnp.square(mean)
        y = acc.astype(jnp.bfloat16).astype(jnp.float32)   # HBM round trip of raw conv out
        return jnp.maximum((y - mean) * (gamma * lax.rsqrt(var + _EPS)) + beta, 0.0)

    a0 = jnp.transpose(x_nchw, (0, 2, 3, 1)).astype(jnp.bfloat16)
    a1 = bn_relu(conv(a0, params["w1"]), params["g1"], params["beta1"])
    a2 = bn_relu(conv(a1.astype(jnp.bfloat16), params["w2"]), params["g2"], params["beta2"])
    return jnp.transpose(a2, (0, 3, 1, 2))


def init_params(key, in_channels, out_channels):
    """Deterministic init.  BN gamma/beta are randomized (PyTorch default is 1/0) so the
    fused scale/shift paths -- including the halo rows -- are actually exercised."""
    ks = jax.random.split(key, 8)
    bound = 1.0 / jnp.sqrt(in_channels * 9)
    return {
        # conv weights stored HWIO: (3, 3, Cin, Cout)
        "w1": jax.random.uniform(ks[0], (3, 3, in_channels, in_channels),
                                 jnp.float32, -bound, bound),
        # b1/b2 kept for parameter parity with nn.Conv2d; unused (cancelled by BN).
        "b1": jax.random.uniform(ks[1], (in_channels,), jnp.float32, -bound, bound),
        "g1": 1.0 + 0.1 * jax.random.normal(ks[2], (in_channels,), jnp.float32),
        "beta1": 0.1 * jax.random.normal(ks[3], (in_channels,), jnp.float32),
        "w2": jax.random.uniform(ks[4], (3, 3, in_channels, out_channels),
                                 jnp.float32, -bound, bound),
        "b2": jax.random.uniform(ks[5], (out_channels,), jnp.float32, -bound, bound),
        "g2": 1.0 + 0.1 * jax.random.normal(ks[6], (out_channels,), jnp.float32),
        "beta2": 0.1 * jax.random.normal(ks[7], (out_channels,), jnp.float32),
    }


if __name__ == "__main__":
    key = jax.random.PRNGKey(0)
    kx, kp = jax.random.split(key)

    N, Cin, Cout, H, W = 2, 4, 8, 16, 16
    x = jax.random.normal(kx, (N, Cin, H, W), jnp.float32)   # NCHW like PyTorch
    params = init_params(kp, Cin, Cout)

    # row_tile=8 -> 2 row tiles per image, exercising the halo-DMA / boundary paths.
    fwd = jax.jit(lambda a, p: vgg_block(a, p, row_tile=8))
    out = jax.block_until_ready(fwd(x, params))

    assert out.shape == (N, Cout, H, W), out.shape
    assert out.dtype == jnp.float32
    assert bool(jnp.all(out >= 0.0))                          # ReLU output is non-negative

    ref = jax.block_until_ready(jax.jit(vgg_block_reference)(x, params))
    max_err = float(jnp.max(jnp.abs(out - ref)))
    assert jnp.allclose(out, ref, atol=3e-2, rtol=3e-2), max_err

    print("KERNEL_OK")
</pallas_src>

<mosaic_0001>
module attributes {stable_mosaic.version = 11 : i64} {
  func.func @_bnrelu_conv_kernel(%arg0: i32, %arg1: i32, %arg2: memref<1x8x16x128xbf16, #tpu.memory_space<vmem>>, %arg3: memref<2x16x16x128xbf16, #tpu.memory_space<any>>, %arg4: memref<1x128xf32, #tpu.memory_space<vmem>>, %arg5: memref<1x128xf32, #tpu.memory_space<vmem>>, %arg6: memref<3x384x128xbf16, #tpu.memory_space<vmem>>, %arg7: memref<1x8x16x128xbf16, #tpu.memory_space<vmem>>, %arg8: memref<1x2x128xf32, #tpu.memory_space<vmem>>, %arg9: memref<10x18x128xf32, #tpu.memory_space<vmem>>, %arg10: memref<10x16x384xbf16, #tpu.memory_space<vmem>>, %arg11: memref<2x16x128xbf16, #tpu.memory_space<vmem>>, %arg12: memref<8x128xf32, #tpu.memory_space<vmem>>, %arg13: memref<8x128xf32, #tpu.memory_space<vmem>>, %arg14: memref<2x!tpu.dma_semaphore, #tpu.memory_space<semaphore_mem>>) attributes {dimension_semantics = [#tpu.dimension_semantics<parallel>, #tpu.dimension_semantics<arbitrary>], iteration_bounds = array<i64: 2, 2>, scalar_prefetch = 0 : i64, scratch_operands = 6 : i64, tpu.core_type = #tpu.core_type<tc>, window_params = [{transform_indices = @transform_0, window_bounds = array<i64: 1, 8, 16, 128>}, {}, {pipeline_mode = #tpu.pipeline_mode<synchronous>, transform_indices = @transform_2, window_bounds = array<i64: 1, 128>}, {pipeline_mode = #tpu.pipeline_mode<synchronous>, transform_indices = @transform_3, window_bounds = array<i64: 1, 128>}, {pipeline_mode = #tpu.pipeline_mode<synchronous>, transform_indices = @transform_4, window_bounds = array<i64: 3, 384, 128>}, {transform_indices = @transform_5, window_bounds = array<i64: 1, 8, 16, 128>}, {transform_indices = @transform_6, window_bounds = array<i64: 1, 2, 128>}]} {
    %c8_i32 = arith.constant 8 : i32
    %0 = arith.muli %arg1, %c8_i32 : i32
    %c1_i32 = arith.constant 1 : i32
    %1 = arith.subi %0, %c1_i32 : i32
    %c0_i32 = arith.constant 0 : i32
    %2 = arith.maxsi %1, %c0_i32 : i32
    %c8_i32_0 = arith.constant 8 : i32
    %3 = arith.muli %arg1, %c8_i32_0 : i32
    %c8_i32_1 = arith.constant 8 : i32
    %4 = arith.addi %3, %c8_i32_1 : i32
    %c15_i32 = arith.constant 15 : i32
    %5 = arith.minsi %4, %c15_i32 : i32
    %c0_i32_2 = arith.constant 0 : i32
    %c0_i32_3 = arith.constant 0 : i32
    %c0_i32_4 = arith.constant 0 : i32
    %c0_i32_5 = arith.constant 0 : i32
    %6 = tpu.memref_slice %arg3[%arg0, %2, %c0_i32_4, %c0_i32_5] : memref<2x16x16x128xbf16, #tpu.memory_space<any>> -> memref<1x1x16x128xbf16, #tpu.memory_space<any>>
    %7 = tpu.memref_squeeze %6 : memref<1x1x16x128xbf16, #tpu.memory_space<any>> -> memref<16x128xbf16, #tpu.memory_space<any>>
    %c0_i32_6 = arith.constant 0 : i32
    %c0_i32_7 = arith.constant 0 : i32
    %8 = tpu.memref_slice %arg11[%c0_i32_2, %c0_i32_6, %c0_i32_7] : memref<2x16x128xbf16, #tpu.memory_space<vmem>> -> memref<1x16x128xbf16, #tpu.memory_space<vmem>>
    %9 = tpu.memref_squeeze %8 : memref<1x16x128xbf16, #tpu.memory_space<vmem>> -> memref<16x128xbf16, #tpu.memory_space<vmem>>
    %10 = tpu.memref_slice %arg14[%c0_i32_3] : memref<2x!tpu.dma_semaphore, #tpu.memory_space<semaphore_mem>> -> memref<1x!tpu.dma_semaphore, #tpu.memory_space<semaphore_mem>>
    %11 = tpu.memref_squeeze %10 : memref<1x!tpu.dma_semaphore, #tpu.memory_space<semaphore_mem>> -> memref<!tpu.dma_semaphore, #tpu.memory_space<semaphore_mem>>
    tpu.enqueue_dma source(%7 : memref<16x128xbf16, #tpu.memory_space<any>>) target(%9 : memref<16x128xbf16, #tpu.memory_space<vmem>>) target_semaphore(%11 : memref<!tpu.dma_semaphore, #tpu.memory_space<semaphore_mem>>)
    %c1_i32_8 = arith.constant 1 : i32
    %c1_i32_9 = arith.constant 1 : i32
    %c0_i32_10 = arith.constant 0 : i32
    %c0_i32_11 = arith.constant 0 : i32
    %12 = tpu.memref_slice %arg3[%arg0, %5, %c0_i32_10, %c0_i32_11] : memref<2x16x16x128xbf16, #tpu.memory_space<any>> -> memref<1x1x16x128xbf16, #tpu.memory_space<any>>
    %13 = tpu.memref_squeeze %12 : memref<1x1x16x128xbf16, #tpu.memory_space<any>> -> memref<16x128xbf16, #tpu.memory_space<any>>
    %c0_i32_12 = arith.constant 0 : i32
    %c0_i32_13 = arith.constant 0 : i32
    %14 = tpu.memref_slice %arg11[%c1_i32_8, %c0_i32_12, %c0_i32_13] : memref<2x16x128xbf16, #tpu.memory_space<vmem>> -> memref<1x16x128xbf16, #tpu.memory_space<vmem>>
    %15 = tpu.memref_squeeze %14 : memref<1x16x128xbf16, #tpu.memory_space<vmem>> -> memref<16x128xbf16, #tpu.memory_space<vmem>>
    %16 = tpu.memref_slice %arg14[%c1_i32_9] : memref<2x!tpu.dma_semaphore, #tpu.memory_space<semaphore_mem>> -> memref<1x!tpu.dma_semaphore, #tpu.memory_space<semaphore_mem>>
    %17 = tpu.memref_squeeze %16 : memref<1x!tpu.dma_semaphore, #tpu.memory_space<semaphore_mem>> -> memref<!tpu.dma_semaphore, #tpu.memory_space<semaphore_mem>>
    tpu.enqueue_dma source(%13 : memref<16x128xbf16, #tpu.memory_space<any>>) target(%15 : memref<16x128xbf16, #tpu.memory_space<vmem>>) target_semaphore(%17 : memref<!tpu.dma_semaphore, #tpu.memory_space<semaphore_mem>>)
    %c0_i32_14 = arith.constant 0 : i32
    %18 = arith.cmpi eq, %arg1, %c0_i32_14 : i32
    %19 = arith.extui %18 : i1 to i32
    %c0_i32_15 = arith.constant 0 : i32
    %20 = arith.cmpi ne, %19, %c0_i32_15 : i32
    scf.if %20 {
      %cst_116 = arith.constant 0.000000e+00 : f32
      %126 = vector.broadcast %cst_116 : f32 to vector<10x1x128xf32>
      %c0_117 = arith.constant 0 : index
      %c0_118 = arith.constant 0 : index
      %c0_119 = arith.constant 0 : index
      %127 = vector.load %arg9[%c0_117, %c0_118, %c0_119] : memref<10x18x128xf32, #tpu.memory_space<vmem>>, vector<10x1x128xf32>
      tpu.vector_store %arg9[%c0_117, %c0_118, %c0_119], %126 {strides = array<i32>} : memref<10x18x128xf32, #tpu.memory_space<vmem>>, vector<10x1x128xf32>,
      %cst_120 = arith.constant 0.000000e+00 : f32
      %128 = vector.broadcast %cst_120 : f32 to vector<10x1x128xf32>
      %c0_121 = arith.constant 0 : index
      %c17 = arith.constant 17 : index
      %c0_122 = arith.constant 0 : index
      %129 = vector.load %arg9[%c0_121, %c17, %c0_122] : memref<10x18x128xf32, #tpu.memory_space<vmem>>, vector<10x1x128xf32>
      tpu.vector_store %arg9[%c0_121, %c17, %c0_122], %128 {strides = array<i32>} : memref<10x18x128xf32, #tpu.memory_space<vmem>>, vector<10x1x128xf32>,
      %cst_123 = arith.constant 0.000000e+00 : f32
      %130 = vector.broadcast %cst_123 : f32 to vector<8x128xf32>
      %c0_124 = arith.constant 0 : index
      %c0_125 = arith.constant 0 : index
      %131 = vector.load %arg12[%c0_124, %c0_125] : memref<8x128xf32, #tpu.memory_space<vmem>>, vector<8x128xf32>
      tpu.vector_store %arg12[%c0_124, %c0_125], %130 {strides = array<i32>} : memref<8x128xf32, #tpu.memory_space<vmem>>, vector<8x128xf32>,
      %cst_126 = arith.constant 0.000000e+00 : f32
      %132 = vector.broadcast %cst_126 : f32 to vector<8x128xf32>
      %c0_127 = arith.constant 0 : index
      %c0_128 = arith.constant 0 : index
      %133 = vector.load %arg13[%c0_127, %c0_128] : memref<8x128xf32, #tpu.memory_space<vmem>>, vector<8x128xf32>
      tpu.vector_store %arg13[%c0_127, %c0_128], %132 {strides = array<i32>} : memref<8x128xf32, #tpu.memory_space<vmem>>, vector<8x128xf32>,
    } else {
    }
    %c0 = arith.constant 0 : index
    %c0_16 = arith.constant 0 : index
    %c0_17 = arith.constant 0 : index
    %c0_18 = arith.constant 0 : index
    %21 = vector.load %arg2[%c0, %c0_16, %c0_17, %c0_18] : memref<1x8x16x128xbf16, #tpu.memory_space<vmem>>, vector<1x8x16x128xbf16>
    %22 = vector.shape_cast %21 : vector<1x8x16x128xbf16> to vector<8x16x128xbf16>
    %23 = arith.extf %22 : vector<8x16x128xbf16> to vector<8x16x128xf32>
    %c0_19 = arith.constant 0 : index
    %c0_20 = arith.constant 0 : index
    %24 = vector.load %arg4[%c0_19, %c0_20] : memref<1x128xf32, #tpu.memory_space<vmem>>, vector<1x128xf32>
    %25 = vector.shape_cast %24 : vector<1x128xf32> to vector<1x1x128xf32>
    %26 = vector.broadcast %25 : vector<1x1x128xf32> to vector<8x16x128xf32>
    %27 = arith.mulf %23, %26 : vector<8x16x128xf32>
    %c0_21 = arith.constant 0 : index
    %c0_22 = arith.constant 0 : index
    %28 = vector.load %arg5[%c0_21, %c0_22] : memref<1x128xf32, #tpu.memory_space<vmem>>, vector<1x128xf32>
    %29 = vector.shape_cast %28 : vector<1x128xf32> to vector<1x1x128xf32>
    %30 = vector.broadcast %29 : vector<1x1x128xf32> to vector<8x16x128xf32>
    %31 = arith.addf %27, %30 : vector<8x16x128xf32>
    %cst = arith.constant 0.000000e+00 : f32
    %32 = vector.broadcast %cst : f32 to vector<8x16x128xf32>
    %33 = arith.maximumf %31, %32 : vector<8x16x128xf32>
    %c1 = arith.constant 1 : index
    %c1_23 = arith.constant 1 : index
    %c0_24 = arith.constant 0 : index
    %34 = vector.load %arg9[%c1, %c1_23, %c0_24] : memref<10x18x128xf32, #tpu.memory_space<vmem>>, vector<8x16x128xf32>
    tpu.vector_store %arg9[%c1, %c1_23, %c0_24], %33 {strides = array<i32>} : memref<10x18x128xf32, #tpu.memory_space<vmem>>, vector<8x16x128xf32>,
    %c0_i32_25 = arith.constant 0 : i32
    %c0_i32_26 = arith.constant 0 : i32
    %c0_i32_27 = arith.constant 0 : i32
    %c0_i32_28 = arith.constant 0 : i32
    %35 = tpu.memref_slice %arg3[%arg0, %2, %c0_i32_27, %c0_i32_28] : memref<2x16x16x128xbf16, #tpu.memory_space<any>> -> memref<1x1x16x128xbf16, #tpu.memory_space<any>>
    %36 = tpu.memref_squeeze %35 : memref<1x1x16x128xbf16, #tpu.memory_space<any>> -> memref<16x128xbf16, #tpu.memory_space<any>>
    %c0_i32_29 = arith.constant 0 : i32
    %c0_i32_30 = arith.constant 0 : i32
    %37 = tpu.memref_slice %arg11[%c0_i32_25, %c0_i32_29, %c0_i32_30] : memref<2x16x128xbf16, #tpu.memory_space<vmem>> -> memref<1x16x128xbf16, #tpu.memory_space<vmem>>
    %38 = tpu.memref_squeeze %37 : memref<1x16x128xbf16, #tpu.memory_space<vmem>> -> memref<16x128xbf16, #tpu.memory_space<vmem>>
    %39 = tpu.memref_slice %arg14[%c0_i32_26] : memref<2x!tpu.dma_semaphore, #tpu.memory_space<semaphore_mem>> -> memref<1x!tpu.dma_semaphore, #tpu.memory_space<semaphore_mem>>
    %40 = tpu.memref_squeeze %39 : memref<1x!tpu.dma_semaphore, #tpu.memory_space<semaphore_mem>> -> memref<!tpu.dma_semaphore, #tpu.memory_space<semaphore_mem>>
    tpu.wait_dma2 semaphore(%40 : memref<!tpu.dma_semaphore, #tpu.memory_space<semaphore_mem>>) src(%36 : memref<16x128xbf16, #tpu.memory_space<any>>) dst(%38 : memref<16x128xbf16, #tpu.memory_space<vmem>>)
    %c1_i32_31 = arith.constant 1 : i32
    %c1_i32_32 = arith.constant 1 : i32
    %c0_i32_33 = arith.constant 0 : i32
    %c0_i32_34 = arith.constant 0 : i32
    %41 = tpu.memref_slice %arg3[%arg0, %5, %c0_i32_33, %c0_i32_34] : memref<2x16x16x128xbf16, #tpu.memory_space<any>> -> memref<1x1x16x128xbf16, #tpu.memory_space<any>>
    %42 = tpu.memref_squeeze %41 : memref<1x1x16x128xbf16, #tpu.memory_space<any>> -> memref<16x128xbf16, #tpu.memory_space<any>>
    %c0_i32_35 = arith.constant 0 : i32
    %c0_i32_36 = arith.constant 0 : i32
    %43 = tpu.memref_slice %arg11[%c1_i32_31, %c0_i32_35, %c0_i32_36] : memref<2x16x128xbf16, #tpu.memory_space<vmem>> -> memref<1x16x128xbf16, #tpu.memory_space<vmem>>
    %44 = tpu.memref_squeeze %43 : memref<1x16x128xbf16, #tpu.memory_space<vmem>> -> memref<16x128xbf16, #tpu.memory_space<vmem>>
    %45 = tpu.memref_slice %arg14[%c1_i32_32] : memref<2x!tpu.dma_semaphore, #tpu.memory_space<semaphore_mem>> -> memref<1x!tpu.dma_semaphore, #tpu.memory_space<semaphore_mem>>
    %46 = tpu.memref_squeeze %45 : memref<1x!tpu.dma_semaphore, #tpu.memory_space<semaphore_mem>> -> memref<!tpu.dma_semaphore, #tpu.memory_space<semaphore_mem>>
    tpu.wait_dma2 semaphore(%46 : memref<!tpu.dma_semaphore, #tpu.memory_space<semaphore_mem>>) src(%42 : memref<16x128xbf16, #tpu.memory_space<any>>) dst(%44 : memref<16x128xbf16, #tpu.memory_space<vmem>>)
    %c0_37 = arith.constant 0 : index
    %c0_38 = arith.constant 0 : index
    %c0_39 = arith.constant 0 : index
    %47 = vector.load %arg11[%c0_37, %c0_38, %c0_39] : memref<2x16x128xbf16, #tpu.memory_space<vmem>>, vector<1x16x128xbf16>
    %48 = arith.extf %47 : vector<1x16x128xbf16> to vector<1x16x128xf32>
    %c0_40 = arith.constant 0 : index
    %c0_41 = arith.constant 0 : index
    %49 = vector.load %arg4[%c0_40, %c0_41] : memref<1x128xf32, #tpu.memory_space<vmem>>, vector<1x128xf32>
    %50 = vector.shape_cast %49 : vector<1x128xf32> to vector<1x1x128xf32>
    %51 = vector.broadcast %50 : vector<1x1x128xf32> to vector<1x16x128xf32>
    %52 = arith.mulf %48, %51 : vector<1x16x128xf32>
    %c0_42 = arith.constant 0 : index
    %c0_43 = arith.constant 0 : index
    %53 = vector.load %arg5[%c0_42, %c0_43] : memref<1x128xf32, #tpu.memory_space<vmem>>, vector<1x128xf32>
    %54 = vector.shape_cast %53 : vector<1x128xf32> to vector<1x1x128xf32>
    %55 = vector.broadcast %54 : vector<1x1x128xf32> to vector<1x16x128xf32>
    %56 = arith.addf %52, %55 : vector<1x16x128xf32>
    %cst_44 = arith.constant 0.000000e+00 : f32
    %57 = vector.broadcast %cst_44 : f32 to vector<1x16x128xf32>
    %58 = arith.maximumf %56, %57 : vector<1x16x128xf32>
    %c0_45 = arith.constant 0 : index
    %c1_46 = arith.constant 1 : index
    %c0_47 = arith.constant 0 : index
    %59 = vector.load %arg9[%c0_45, %c1_46, %c0_47] : memref<10x18x128xf32, #tpu.memory_space<vmem>>, vector<1x16x128xf32>
    tpu.vector_store %arg9[%c0_45, %c1_46, %c0_47], %58 {strides = array<i32>} : memref<10x18x128xf32, #tpu.memory_space<vmem>>, vector<1x16x128xf32>,
    %c1_48 = arith.constant 1 : index
    %c0_49 = arith.constant 0 : index
    %c0_50 = arith.constant 0 : index
    %60 = vector.load %arg11[%c1_48, %c0_49, %c0_50] : memref<2x16x128xbf16, #tpu.memory_space<vmem>>, vector<1x16x128xbf16>
    %61 = arith.extf %60 : vector<1x16x128xbf16> to vector<1x16x128xf32>
    %c0_51 = arith.constant 0 : index
    %c0_52 = arith.constant 0 : index
    %62 = vector.load %arg4[%c0_51, %c0_52] : memref<1x128xf32, #tpu.memory_space<vmem>>, vector<1x128xf32>
    %63 = vector.shape_cast %62 : vector<1x128xf32> to vector<1x1x128xf32>
    %64 = vector.broadcast %63 : vector<1x1x128xf32> to vector<1x16x128xf32>
    %65 = arith.mulf %61, %64 : vector<1x16x128xf32>
    %c0_53 = arith.constant 0 : index
    %c0_54 = arith.constant 0 : index
    %66 = vector.load %arg5[%c0_53, %c0_54] : memref<1x128xf32, #tpu.memory_space<vmem>>, vector<1x128xf32>
    %67 = vector.shape_cast %66 : vector<1x128xf32> to vector<1x1x128xf32>
    %68 = vector.broadcast %67 : vector<1x1x128xf32> to vector<1x16x128xf32>
    %69 = arith.addf %65, %68 : vector<1x16x128xf32>
    %cst_55 = arith.constant 0.000000e+00 : f32
    %70 = vector.broadcast %cst_55 : f32 to vector<1x16x128xf32>
    %71 = arith.maximumf %69, %70 : vector<1x16x128xf32>
    %c9 = arith.constant 9 : index
    %c1_56 = arith.constant 1 : index
    %c0_57 = arith.constant 0 : index
    %72 = vector.load %arg9[%c9, %c1_56, %c0_57] : memref<10x18x128xf32, #tpu.memory_space<vmem>>, vector<1x16x128xf32>
    tpu.vector_store %arg9[%c9, %c1_56, %c0_57], %71 {strides = array<i32>} : memref<10x18x128xf32, #tpu.memory_space<vmem>>, vector<1x16x128xf32>,
    %cst_58 = arith.constant 0.000000e+00 : f32
    %73 = vector.broadcast %cst_58 : f32 to vector<1x16x128xf32>
    %c0_i32_59 = arith.constant 0 : i32
    %74 = arith.cmpi eq, %arg1, %c0_i32_59 : i32
    %75 = arith.extui %74 : i1 to i32
    %c0_i32_60 = arith.constant 0 : i32
    %76 = arith.cmpi ne, %75, %c0_i32_60 : i32
    scf.if %76 {
      %c0_116 = arith.constant 0 : index
      %c1_117 = arith.constant 1 : index
      %c0_118 = arith.constant 0 : index
      %126 = vector.load %arg9[%c0_116, %c1_117, %c0_118] : memref<10x18x128xf32, #tpu.memory_space<vmem>>, vector<1x16x128xf32>
      tpu.vector_store %arg9[%c0_116, %c1_117, %c0_118], %73 {strides = array<i32>} : memref<10x18x128xf32, #tpu.memory_space<vmem>>, vector<1x16x128xf32>,
    } else {
    }
    %c1_i32_61 = arith.constant 1 : i32
    %77 = arith.cmpi eq, %arg1, %c1_i32_61 : i32
    %78 = arith.extui %77 : i1 to i32
    %c0_i32_62 = arith.constant 0 : i32
    %79 = arith.cmpi ne, %78, %c0_i32_62 : i32
    scf.if %79 {
      %c9_116 = arith.constant 9 : index
      %c1_117 = arith.constant 1 : index
      %c0_118 = arith.constant 0 : index
      %126 = vector.load %arg9[%c9_116, %c1_117, %c0_118] : memref<10x18x128xf32, #tpu.memory_space<vmem>>, vector<1x16x128xf32>
      tpu.vector_store %arg9[%c9_116, %c1_117, %c0_118], %73 {strides = array<i32>} : memref<10x18x128xf32, #tpu.memory_space<vmem>>, vector<1x16x128xf32>,
    } else {
    }
    %c0_63 = arith.constant 0 : index
    %c0_64 = arith.constant 0 : index
    %c0_65 = arith.constant 0 : index
    %80 = vector.load %arg9[%c0_63, %c0_64, %c0_65] : memref<10x18x128xf32, #tpu.memory_space<vmem>>, vector<10x16x128xf32>
    %81 = arith.truncf %80 : vector<10x16x128xf32> to vector<10x16x128xbf16>
    %c0_66 = arith.constant 0 : index
    %c0_67 = arith.constant 0 : index
    %c0_68 = arith.constant 0 : index
    %82 = vector.load %arg10[%c0_66, %c0_67, %c0_68] : memref<10x16x384xbf16, #tpu.memory_space<vmem>>, vector<10x16x128xbf16>
    tpu.vector_store %arg10[%c0_66, %c0_67, %c0_68], %81 {strides = array<i32>} : memref<10x16x384xbf16, #tpu.memory_space<vmem>>, vector<10x16x128xbf16>,
    %c0_69 = arith.constant 0 : index
    %c1_70 = arith.constant 1 : index
    %c0_71 = arith.constant 0 : index
    %83 = vector.load %arg9[%c0_69, %c1_70, %c0_71] : memref<10x18x128xf32, #tpu.memory_space<vmem>>, vector<10x16x128xf32>
    %84 = arith.truncf %83 : vector<10x16x128xf32> to vector<10x16x128xbf16>
    %c0_72 = arith.constant 0 : index
    %c0_73 = arith.constant 0 : index
    %c128 = arith.constant 128 : index
    %85 = vector.load %arg10[%c0_72, %c0_73, %c128] : memref<10x16x384xbf16, #tpu.memory_space<vmem>>, vector<10x16x128xbf16>
    tpu.vector_store %arg10[%c0_72, %c0_73, %c128], %84 {strides = array<i32>} : memref<10x16x384xbf16, #tpu.memory_space<vmem>>, vector<10x16x128xbf16>,
    %c0_74 = arith.constant 0 : index
    %c2 = arith.constant 2 : index
    %c0_75 = arith.constant 0 : index
    %86 = vector.load %arg9[%c0_74, %c2, %c0_75] : memref<10x18x128xf32, #tpu.memory_space<vmem>>, vector<10x16x128xf32>
    %87 = arith.truncf %86 : vector<10x16x128xf32> to vector<10x16x128xbf16>
    %c0_76 = arith.constant 0 : index
    %c0_77 = arith.constant 0 : index
    %c256 = arith.constant 256 : index
    %88 = vector.load %arg10[%c0_76, %c0_77, %c256] : memref<10x16x384xbf16, #tpu.memory_space<vmem>>, vector<10x16x128xbf16>
    tpu.vector_store %arg10[%c0_76, %c0_77, %c256], %87 {strides = array<i32>} : memref<10x16x384xbf16, #tpu.memory_space<vmem>>, vector<10x16x128xbf16>,
    %cst_78 = arith.constant 0.000000e+00 : f32
    %89 = vector.broadcast %cst_78 : f32 to vector<128x128xf32>
    %c0_79 = arith.constant 0 : index
    %c0_80 = arith.constant 0 : index
    %c0_81 = arith.constant 0 : index
    %90 = vector.load %arg10[%c0_79, %c0_80, %c0_81] : memref<10x16x384xbf16, #tpu.memory_space<vmem>>, vector<8x16x384xbf16>
    %91 = vector.shape_cast %90 : vector<8x16x384xbf16> to vector<128x384xbf16>
    %c0_82 = arith.constant 0 : index
    %c0_83 = arith.constant 0 : index
    %c0_84 = arith.constant 0 : index
    %92 = vector.load %arg6[%c0_82, %c0_83, %c0_84] : memref<3x384x128xbf16, #tpu.memory_space<vmem>>, vector<1x384x128xbf16>
    %93 = vector.shape_cast %92 : vector<1x384x128xbf16> to vector<384x128xbf16>
    %cst_85 = arith.constant dense<0.000000e+00> : vector<128x128xf32>
    %94 = tpu.matmul %91, %93, %cst_85 {dimension_numbers = #tpu.dot_dimension_numbers<[1], [0], [0], [1], [0, 0, 1, 1], [], []>} : vector<128x384xbf16>, vector<384x128xbf16>, vector<128x128xf32> -> vector<128x128xf32>
    %95 = arith.addf %89, %94 : vector<128x128xf32>
    %c1_86 = arith.constant 1 : index
    %c0_87 = arith.constant 0 : index
    %c0_88 = arith.constant 0 : index
    %96 = vector.load %arg10[%c1_86, %c0_87, %c0_88] : memref<10x16x384xbf16, #tpu.memory_space<vmem>>, vector<8x16x384xbf16>
    %97 = vector.shape_cast %96 : vector<8x16x384xbf16> to vector<128x384xbf16>
    %c1_89 = arith.constant 1 : index
    %c0_90 = arith.constant 0 : index
    %c0_91 = arith.constant 0 : index
    %98 = vector.load %arg6[%c1_89, %c0_90, %c0_91] : memref<3x384x128xbf16, #tpu.memory_space<vmem>>, vector<1x384x128xbf16>
    %99 = vector.shape_cast %98 : vector<1x384x128xbf16> to vector<384x128xbf16>
    %cst_92 = arith.constant dense<0.000000e+00> : vector<128x128xf32>
    %100 = tpu.matmul %97, %99, %cst_92 {dimension_numbers = #tpu.dot_dimension_numbers<[1], [0], [0], [1], [0, 0, 1, 1], [], []>} : vector<128x384xbf16>, vector<384x128xbf16>, vector<128x128xf32> -> vector<128x128xf32>
    %101 = arith.addf %95, %100 : vector<128x128xf32>
    %c2_93 = arith.constant 2 : index
    %c0_94 = arith.constant 0 : index
    %c0_95 = arith.constant 0 : index
    %102 = vector.load %arg10[%c2_93, %c0_94, %c0_95] : memref<10x16x384xbf16, #tpu.memory_space<vmem>>, vector<8x16x384xbf16>
    %103 = vector.shape_cast %102 : vector<8x16x384xbf16> to vector<128x384xbf16>
    %c2_96 = arith.constant 2 : index
    %c0_97 = arith.constant 0 : index
    %c0_98 = arith.constant 0 : index
    %104 = vector.load %arg6[%c2_96, %c0_97, %c0_98] : memref<3x384x128xbf16, #tpu.memory_space<vmem>>, vector<1x384x128xbf16>
    %105 = vector.shape_cast %104 : vector<1x384x128xbf16> to vector<384x128xbf16>
    %cst_99 = arith.constant dense<0.000000e+00> : vector<128x128xf32>
    %106 = tpu.matmul %103, %105, %cst_99 {dimension_numbers = #tpu.dot_dimension_numbers<[1], [0], [0], [1], [0, 0, 1, 1], [], []>} : vector<128x384xbf16>, vector<384x128xbf16>, vector<128x128xf32> -> vector<128x128xf32>
    %107 = arith.addf %101, %106 : vector<128x128xf32>
    %108 = vector.shape_cast %107 : vector<128x128xf32> to vector<8x16x128xf32>
    %109 = arith.truncf %108 : vector<8x16x128xf32> to vector<8x16x128xbf16>
    %c0_100 = arith.constant 0 : index
    %c0_101 = arith.constant 0 : index
    %c0_102 = arith.constant 0 : index
    %c0_103 = arith.constant 0 : index
    %110 = vector.load %arg7[%c0_100, %c0_101, %c0_102, %c0_103] : memref<1x8x16x128xbf16, #tpu.memory_space<vmem>>, vector<1x8x16x128xbf16>
    %111 = vector.shape_cast %110 : vector<1x8x16x128xbf16> to vector<8x16x128xbf16>
    %112 = vector.shape_cast %109 : vector<8x16x128xbf16> to vector<1x8x16x128xbf16>
    tpu.vector_store %arg7[%c0_100, %c0_101, %c0_102, %c0_103], %112 {strides = array<i32>} : memref<1x8x16x128xbf16, #tpu.memory_space<vmem>>, vector<1x8x16x128xbf16>,
    %113 = vector.shape_cast %108 : vector<8x16x128xf32> to vector<1x8x16x128xf32>
    %c0_104 = arith.constant 0 : index
    %c0_105 = arith.constant 0 : index
    %114 = vector.load %arg12[%c0_104, %c0_105] : memref<8x128xf32, #tpu.memory_space<vmem>>, vector<8x128xf32>
    %cst_106 = arith.constant dense<0.000000e+00> : vector<8x128xf32>
    %115 = vector.multi_reduction <add>, %113, %cst_106 [0, 2] : vector<1x8x16x128xf32> to vector<8x128xf32>
    %116 = arith.addf %114, %115 : vector<8x128xf32>
    %c0_107 = arith.constant 0 : index
    %c0_108 = arith.constant 0 : index
    %117 = vector.load %arg12[%c0_107, %c0_108] : memref<8x128xf32, #tpu.memory_space<vmem>>, vector<8x128xf32>
    tpu.vector_store %arg12[%c0_107, %c0_108], %116 {strides = array<i32>} : memref<8x128xf32, #tpu.memory_space<vmem>>, vector<8x128xf32>,
    %c0_109 = arith.constant 0 : index
    %c0_110 = arith.constant 0 : index
    %118 = vector.load %arg13[%c0_109, %c0_110] : memref<8x128xf32, #tpu.memory_space<vmem>>, vector<8x128xf32>
    %119 = arith.mulf %113, %113 : vector<1x8x16x128xf32>
    %cst_111 = arith.constant dense<0.000000e+00> : vector<8x128xf32>
    %120 = vector.multi_reduction <add>, %119, %cst_111 [0, 2] : vector<1x8x16x128xf32> to vector<8x128xf32>
    %121 = arith.addf %118, %120 : vector<8x128xf32>
    %c0_112 = arith.constant 0 : index
    %c0_113 = arith.constant 0 : index
    %122 = vector.load %arg13[%c0_112, %c0_113] : memref<8x128xf32, #tpu.memory_space<vmem>>, vector<8x128xf32>
    tpu.vector_store %arg13[%c0_112, %c0_113], %121 {strides = array<i32>} : memref<8x128xf32, #tpu.memory_space<vmem>>, vector<8x128xf32>,
    %c1_i32_114 = arith.constant 1 : i32
    %123 = arith.cmpi eq, %arg1, %c1_i32_114 : i32
    %124 = arith.extui %123 : i1 to i32
    %c0_i32_115 = arith.constant 0 : i32
    %125 = arith.cmpi ne, %124, %c0_i32_115 : i32
    scf.if %125 {
      %c0_116 = arith.constant 0 : index
      %c0_117 = arith.constant 0 : index
      %126 = vector.load %arg12[%c0_116, %c0_117] : memref<8x128xf32, #tpu.memory_space<vmem>>, vector<8x128xf32>
      %cst_118 = arith.constant dense<0.000000e+00> : vector<128xf32>
      %127 = vector.multi_reduction <add>, %126, %cst_118 [0] : vector<8x128xf32> to vector<128xf32>
      %128 = vector.shape_cast %127 : vector<128xf32> to vector<1x128xf32>
      %c0_119 = arith.constant 0 : index
      %c0_120 = arith.constant 0 : index
      %129 = vector.load %arg13[%c0_119, %c0_120] : memref<8x128xf32, #tpu.memory_space<vmem>>, vector<8x128xf32>
      %cst_121 = arith.constant dense<0.000000e+00> : vector<128xf32>
      %130 = vector.multi_reduction <add>, %129, %cst_121 [0] : vector<8x128xf32> to vector<128xf32>
      %131 = vector.shape_cast %130 : vector<128xf32> to vector<1x128xf32>
      %132 = tpu.concatenate %128, %131 in 0 : vector<1x128xf32>, vector<1x128xf32> -> vector<2x128xf32>
      %c0_122 = arith.constant 0 : index
      %c0_123 = arith.constant 0 : index
      %c0_124 = arith.constant 0 : index
      %133 = vector.load %arg8[%c0_122, %c0_123, %c0_124] : memref<1x2x128xf32, #tpu.memory_space<vmem>>, vector<1x2x128xf32>
      %134 = vector.shape_cast %133 : vector<1x2x128xf32> to vector<2x128xf32>
      %135 = vector.shape_cast %132 : vector<2x128xf32> to vector<1x2x128xf32>
      tpu.vector_store %arg8[%c0_122, %c0_123, %c0_124], %135 {strides = array<i32>} : memref<1x2x128xf32, #tpu.memory_space<vmem>>, vector<1x2x128xf32>,
    } else {
    }
    return
  }
  func.func @transform_0(%arg0: i32, %arg1: i32) -> (i32, i32, i32, i32) {
    %c0_i32 = arith.constant 0 : i32
    %c0_i32_0 = arith.constant 0 : i32
    %c0_i32_1 = arith.constant 0 : i32
    return %arg0, %arg1, %c0_i32, %c0_i32_0 : i32, i32, i32, i32
  }
  func.func @transform_2(%arg0: i32, %arg1: i32) -> (i32, i32) {
    %c0_i32 = arith.constant 0 : i32
    %c0_i32_0 = arith.constant 0 : i32
    %c0_i32_1 = arith.constant 0 : i32
    return %c0_i32, %c0_i32_0 : i32, i32
  }
  func.func @transform_3(%arg0: i32, %arg1: i32) -> (i32, i32) {
    %c0_i32 = arith.constant 0 : i32
    %c0_i32_0 = arith.constant 0 : i32
    %c0_i32_1 = arith.constant 0 : i32
    return %c0_i32, %c0_i32_0 : i32, i32
  }
  func.func @transform_4(%arg0: i32, %arg1: i32) -> (i32, i32, i32) {
    %c0_i32 = arith.constant 0 : i32
    %c0_i32_0 = arith.constant 0 : i32
    %c0_i32_1 = arith.constant 0 : i32
    %c0_i32_2 = arith.constant 0 : i32
    return %c0_i32, %c0_i32_0, %c0_i32_1 : i32, i32, i32
  }
  func.func @transform_5(%arg0: i32, %arg1: i32) -> (i32, i32, i32, i32) {
    %c0_i32 = arith.constant 0 : i32
    %c0_i32_0 = arith.constant 0 : i32
    %c0_i32_1 = arith.constant 0 : i32
    return %arg0, %arg1, %c0_i32, %c0_i32_0 : i32, i32, i32, i32
  }
  func.func @transform_6(%arg0: i32, %arg1: i32) -> (i32, i32, i32) {
    %c0_i32 = arith.constant 0 : i32
    %c0_i32_0 = arith.constant 0 : i32
    %c0_i32_1 = arith.constant 0 : i32
    return %arg0, %c0_i32, %c0_i32_0 : i32, i32, i32
  }
}

module attributes {stable_mosaic.version = 11 : i64} {
  func.func @_conv_kernel(%arg0: i32, %arg1: i32, %arg2: memref<1x8x16x128xbf16, #tpu.memory_space<vmem>>, %arg3: memref<2x16x16x128xbf16, #tpu.memory_space<any>>, %arg4: memref<3x384x128xbf16, #tpu.memory_space<vmem>>, %arg5: memref<1x8x16x128xbf16, #tpu.memory_space<vmem>>, %arg6: memref<1x2x128xf32, #tpu.memory_space<vmem>>, %arg7: memref<10x18x128xf32, #tpu.memory_space<vmem>>, %arg8: memref<10x16x384xbf16, #tpu.memory_space<vmem>>, %arg9: memref<2x16x128xbf16, #tpu.memory_space<vmem>>, %arg10: memref<8x128xf32, #tpu.memory_space<vmem>>, %arg11: memref<8x128xf32, #tpu.memory_space<vmem>>, %arg12: memref<2x!tpu.dma_semaphore, #tpu.memory_space<semaphore_mem>>) attributes {dimension_semantics = [#tpu.dimension_semantics<parallel>, #tpu.dimension_semantics<arbitrary>], iteration_bounds = array<i64: 2, 2>, scalar_prefetch = 0 : i64, scratch_operands = 6 : i64, tpu.core_type = #tpu.core_type<tc>, window_params = [{transform_indices = @transform_0, window_bounds = array<i64: 1, 8, 16, 128>}, {}, {pipeline_mode = #tpu.pipeline_mode<synchronous>, transform_indices = @transform_2, window_bounds = array<i64: 3, 384, 128>}, {transform_indices = @transform_3, window_bounds = array<i64: 1, 8, 16, 128>}, {transform_indices = @transform_4, window_bounds = array<i64: 1, 2, 128>}]} {
    %c8_i32 = arith.constant 8 : i32
    %0 = arith.muli %arg1, %c8_i32 : i32
    %c1_i32 = arith.constant 1 : i32
    %1 = arith.subi %0, %c1_i32 : i32
    %c0_i32 = arith.constant 0 : i32
    %2 = arith.maxsi %1, %c0_i32 : i32
    %c8_i32_0 = arith.constant 8 : i32
    %3 = arith.muli %arg1, %c8_i32_0 : i32
    %c8_i32_1 = arith.constant 8 : i32
    %4 = arith.addi %3, %c8_i32_1 : i32
    %c15_i32 = arith.constant 15 : i32
    %5 = arith.minsi %4, %c15_i32 : i32
    %c0_i32_2 = arith.constant 0 : i32
    %c0_i32_3 = arith.constant 0 : i32
    %c0_i32_4 = arith.constant 0 : i32
    %c0_i32_5 = arith.constant 0 : i32
    %6 = tpu.memref_slice %arg3[%arg0, %2, %c0_i32_4, %c0_i32_5] : memref<2x16x16x128xbf16, #tpu.memory_space<any>> -> memref<1x1x16x128xbf16, #tpu.memory_space<any>>
    %7 = tpu.memref_squeeze %6 : memref<1x1x16x128xbf16, #tpu.memory_space<any>> -> memref<16x128xbf16, #tpu.memory_space<any>>
    %c0_i32_6 = arith.constant 0 : i32
    %c0_i32_7 = arith.constant 0 : i32
    %8 = tpu.memref_slice %arg9[%c0_i32_2, %c0_i32_6, %c0_i32_7] : memref<2x16x128xbf16, #tpu.memory_space<vmem>> -> memref<1x16x128xbf16, #tpu.memory_space<vmem>>
    %9 = tpu.memref_squeeze %8 : memref<1x16x128xbf16, #tpu.memory_space<vmem>> -> memref<16x128xbf16, #tpu.memory_space<vmem>>
    %10 = tpu.memref_slice %arg12[%c0_i32_3] : memref<2x!tpu.dma_semaphore, #tpu.memory_space<semaphore_mem>> -> memref<1x!tpu.dma_semaphore, #tpu.memory_space<semaphore_mem>>
    %11 = tpu.memref_squeeze %10 : memref<1x!tpu.dma_semaphore, #tpu.memory_space<semaphore_mem>> -> memref<!tpu.dma_semaphore, #tpu.memory_space<semaphore_mem>>
    tpu.enqueue_dma source(%7 : memref<16x128xbf16, #tpu.memory_space<any>>) target(%9 : memref<16x128xbf16, #tpu.memory_space<vmem>>) target_semaphore(%11 : memref<!tpu.dma_semaphore, #tpu.memory_space<semaphore_mem>>)
    %c1_i32_8 = arith.constant 1 : i32
    %c1_i32_9 = arith.constant 1 : i32
    %c0_i32_10 = arith.constant 0 : i32
    %c0_i32_11 = arith.constant 0 : i32
    %12 = tpu.memref_slice %arg3[%arg0, %5, %c0_i32_10, %c0_i32_11] : memref<2x16x16x128xbf16, #tpu.memory_space<any>> -> memref<1x1x16x128xbf16, #tpu.memory_space<any>>
    %13 = tpu.memref_squeeze %12 : memref<1x1x16x128xbf16, #tpu.memory_space<any>> -> memref<16x128xbf16, #tpu.memory_space<any>>
    %c0_i32_12 = arith.constant 0 : i32
    %c0_i32_13 = arith.constant 0 : i32
    %14 = tpu.memref_slice %arg9[%c1_i32_8, %c0_i32_12, %c0_i32_13] : memref<2x16x128xbf16, #tpu.memory_space<vmem>> -> memref<1x16x128xbf16, #tpu.memory_space<vmem>>
    %15 = tpu.memref_squeeze %14 : memref<1x16x128xbf16, #tpu.memory_space<vmem>> -> memref<16x128xbf16, #tpu.memory_space<vmem>>
    %16 = tpu.memref_slice %arg12[%c1_i32_9] : memref<2x!tpu.dma_semaphore, #tpu.memory_space<semaphore_mem>> -> memref<1x!tpu.dma_semaphore, #tpu.memory_space<semaphore_mem>>
    %17 = tpu.memref_squeeze %16 : memref<1x!tpu.dma_semaphore, #tpu.memory_space<semaphore_mem>> -> memref<!tpu.dma_semaphore, #tpu.memory_space<semaphore_mem>>
    tpu.enqueue_dma source(%13 : memref<16x128xbf16, #tpu.memory_space<any>>) target(%15 : memref<16x128xbf16, #tpu.memory_space<vmem>>) target_semaphore(%17 : memref<!tpu.dma_semaphore, #tpu.memory_space<semaphore_mem>>)
    %c0_i32_14 = arith.constant 0 : i32
    %18 = arith.cmpi eq, %arg1, %c0_i32_14 : i32
    %19 = arith.extui %18 : i1 to i32
    %c0_i32_15 = arith.constant 0 : i32
    %20 = arith.cmpi ne, %19, %c0_i32_15 : i32
    scf.if %20 {
      %cst_101 = arith.constant 0.000000e+00 : f32
      %96 = vector.broadcast %cst_101 : f32 to vector<10x1x128xf32>
      %c0_102 = arith.constant 0 : index
      %c0_103 = arith.constant 0 : index
      %c0_104 = arith.constant 0 : index
      %97 = vector.load %arg7[%c0_102, %c0_103, %c0_104] : memref<10x18x128xf32, #tpu.memory_space<vmem>>, vector<10x1x128xf32>
      tpu.vector_store %arg7[%c0_102, %c0_103, %c0_104], %96 {strides = array<i32>} : memref<10x18x128xf32, #tpu.memory_space<vmem>>, vector<10x1x128xf32>,
      %cst_105 = arith.constant 0.000000e+00 : f32
      %98 = vector.broadcast %cst_105 : f32 to vector<10x1x128xf32>
      %c0_106 = arith.constant 0 : index
      %c17 = arith.constant 17 : index
      %c0_107 = arith.constant 0 : index
      %99 = vector.load %arg7[%c0_106, %c17, %c0_107] : memref<10x18x128xf32, #tpu.memory_space<vmem>>, vector<10x1x128xf32>
      tpu.vector_store %arg7[%c0_106, %c17, %c0_107], %98 {strides = array<i32>} : memref<10x18x128xf32, #tpu.memory_space<vmem>>, vector<10x1x128xf32>,
      %cst_108 = arith.constant 0.000000e+00 : f32
      %100 = vector.broadcast %cst_108 : f32 to vector<8x128xf32>
      %c0_109 = arith.constant 0 : index
      %c0_110 = arith.constant 0 : index
      %101 = vector.load %arg10[%c0_109, %c0_110] : memref<8x128xf32, #tpu.memory_space<vmem>>, vector<8x128xf32>
      tpu.vector_store %arg10[%c0_109, %c0_110], %100 {strides = array<i32>} : memref<8x128xf32, #tpu.memory_space<vmem>>, vector<8x128xf32>,
      %cst_111 = arith.constant 0.000000e+00 : f32
      %102 = vector.broadcast %cst_111 : f32 to vector<8x128xf32>
      %c0_112 = arith.constant 0 : index
      %c0_113 = arith.constant 0 : index
      %103 = vector.load %arg11[%c0_112, %c0_113] : memref<8x128xf32, #tpu.memory_space<vmem>>, vector<8x128xf32>
      tpu.vector_store %arg11[%c0_112, %c0_113], %102 {strides = array<i32>} : memref<8x128xf32, #tpu.memory_space<vmem>>, vector<8x128xf32>,
    } else {
    }
    %c0 = arith.constant 0 : index
    %c0_16 = arith.constant 0 : index
    %c0_17 = arith.constant 0 : index
    %c0_18 = arith.constant 0 : index
    %21 = vector.load %arg2[%c0, %c0_16, %c0_17, %c0_18] : memref<1x8x16x128xbf16, #tpu.memory_space<vmem>>, vector<1x8x16x128xbf16>
    %22 = vector.shape_cast %21 : vector<1x8x16x128xbf16> to vector<8x16x128xbf16>
    %23 = arith.extf %22 : vector<8x16x128xbf16> to vector<8x16x128xf32>
    %c1 = arith.constant 1 : index
    %c1_19 = arith.constant 1 : index
    %c0_20 = arith.constant 0 : index
    %24 = vector.load %arg7[%c1, %c1_19, %c0_20] : memref<10x18x128xf32, #tpu.memory_space<vmem>>, vector<8x16x128xf32>
    tpu.vector_store %arg7[%c1, %c1_19, %c0_20], %23 {strides = array<i32>} : memref<10x18x128xf32, #tpu.memory_space<vmem>>, vector<8x16x128xf32>,
    %c0_i32_21 = arith.constant 0 : i32
    %c0_i32_22 = arith.constant 0 : i32
    %c0_i32_23 = arith.constant 0 : i32
    %c0_i32_24 = arith.constant 0 : i32
    %25 = tpu.memref_slice %arg3[%arg0, %2, %c0_i32_23, %c0_i32_24] : memref<2x16x16x128xbf16, #tpu.memory_space<any>> -> memref<1x1x16x128xbf16, #tpu.memory_space<any>>
    %26 = tpu.memref_squeeze %25 : memref<1x1x16x128xbf16, #tpu.memory_space<any>> -> memref<16x128xbf16, #tpu.memory_space<any>>
    %c0_i32_25 = arith.constant 0 : i32
    %c0_i32_26 = arith.constant 0 : i32
    %27 = tpu.memref_slice %arg9[%c0_i32_21, %c0_i32_25, %c0_i32_26] : memref<2x16x128xbf16, #tpu.memory_space<vmem>> -> memref<1x16x128xbf16, #tpu.memory_space<vmem>>
    %28 = tpu.memref_squeeze %27 : memref<1x16x128xbf16, #tpu.memory_space<vmem>> -> memref<16x128xbf16, #tpu.memory_space<vmem>>
    %29 = tpu.memref_slice %arg12[%c0_i32_22] : memref<2x!tpu.dma_semaphore, #tpu.memory_space<semaphore_mem>> -> memref<1x!tpu.dma_semaphore, #tpu.memory_space<semaphore_mem>>
    %30 = tpu.memref_squeeze %29 : memref<1x!tpu.dma_semaphore, #tpu.memory_space<semaphore_mem>> -> memref<!tpu.dma_semaphore, #tpu.memory_space<semaphore_mem>>
    tpu.wait_dma2 semaphore(%30 : memref<!tpu.dma_semaphore, #tpu.memory_space<semaphore_mem>>) src(%26 : memref<16x128xbf16, #tpu.memory_space<any>>) dst(%28 : memref<16x128xbf16, #tpu.memory_space<vmem>>)
    %c1_i32_27 = arith.constant 1 : i32
    %c1_i32_28 = arith.constant 1 : i32
    %c0_i32_29 = arith.constant 0 : i32
    %c0_i32_30 = arith.constant 0 : i32
    %31 = tpu.memref_slice %arg3[%arg0, %5, %c0_i32_29, %c0_i32_30] : memref<2x16x16x128xbf16, #tpu.memory_space<any>> -> memref<1x1x16x128xbf16, #tpu.memory_space<any>>
    %32 = tpu.memref_squeeze %31 : memref<1x1x16x128xbf16, #tpu.memory_space<any>> -> memref<16x128xbf16, #tpu.memory_space<any>>
    %c0_i32_31 = arith.constant 0 : i32
    %c0_i32_32 = arith.constant 0 : i32
    %33 = tpu.memref_slice %arg9[%c1_i32_27, %c0_i32_31, %c0_i32_32] : memref<2x16x128xbf16, #tpu.memory_space<vmem>> -> memref<1x16x128xbf16, #tpu.memory_space<vmem>>
    %34 = tpu.memref_squeeze %33 : memref<1x16x128xbf16, #tpu.memory_space<vmem>> -> memref<16x128xbf16, #tpu.memory_space<vmem>>
    %35 = tpu.memref_slice %arg12[%c1_i32_28] : memref<2x!tpu.dma_semaphore, #tpu.memory_space<semaphore_mem>> -> memref<1x!tpu.dma_semaphore, #tpu.memory_space<semaphore_mem>>
    %36 = tpu.memref_squeeze %35 : memref<1x!tpu.dma_semaphore, #tpu.memory_space<semaphore_mem>> -> memref<!tpu.dma_semaphore, #tpu.memory_space<semaphore_mem>>
    tpu.wait_dma2 semaphore(%36 : memref<!tpu.dma_semaphore, #tpu.memory_space<semaphore_mem>>) src(%32 : memref<16x128xbf16, #tpu.memory_space<any>>) dst(%34 : memref<16x128xbf16, #tpu.memory_space<vmem>>)
    %c0_33 = arith.constant 0 : index
    %c0_34 = arith.constant 0 : index
    %c0_35 = arith.constant 0 : index
    %37 = vector.load %arg9[%c0_33, %c0_34, %c0_35] : memref<2x16x128xbf16, #tpu.memory_space<vmem>>, vector<1x16x128xbf16>
    %38 = arith.extf %37 : vector<1x16x128xbf16> to vector<1x16x128xf32>
    %c0_36 = arith.constant 0 : index
    %c1_37 = arith.constant 1 : index
    %c0_38 = arith.constant 0 : index
    %39 = vector.load %arg7[%c0_36, %c1_37, %c0_38] : memref<10x18x128xf32, #tpu.memory_space<vmem>>, vector<1x16x128xf32>
    tpu.vector_store %arg7[%c0_36, %c1_37, %c0_38], %38 {strides = array<i32>} : memref<10x18x128xf32, #tpu.memory_space<vmem>>, vector<1x16x128xf32>,
    %c1_39 = arith.constant 1 : index
    %c0_40 = arith.constant 0 : index
    %c0_41 = arith.constant 0 : index
    %40 = vector.load %arg9[%c1_39, %c0_40, %c0_41] : memref<2x16x128xbf16, #tpu.memory_space<vmem>>, vector<1x16x128xbf16>
    %41 = arith.extf %40 : vector<1x16x128xbf16> to vector<1x16x128xf32>
    %c9 = arith.constant 9 : index
    %c1_42 = arith.constant 1 : index
    %c0_43 = arith.constant 0 : index
    %42 = vector.load %arg7[%c9, %c1_42, %c0_43] : memref<10x18x128xf32, #tpu.memory_space<vmem>>, vector<1x16x128xf32>
    tpu.vector_store %arg7[%c9, %c1_42, %c0_43], %41 {strides = array<i32>} : memref<10x18x128xf32, #tpu.memory_space<vmem>>, vector<1x16x128xf32>,
    %cst = arith.constant 0.000000e+00 : f32
    %43 = vector.broadcast %cst : f32 to vector<1x16x128xf32>
    %c0_i32_44 = arith.constant 0 : i32
    %44 = arith.cmpi eq, %arg1, %c0_i32_44 : i32
    %45 = arith.extui %44 : i1 to i32
    %c0_i32_45 = arith.constant 0 : i32
    %46 = arith.cmpi ne, %45, %c0_i32_45 : i32
    scf.if %46 {
      %c0_101 = arith.constant 0 : index
      %c1_102 = arith.constant 1 : index
      %c0_103 = arith.constant 0 : index
      %96 = vector.load %arg7[%c0_101, %c1_102, %c0_103] : memref<10x18x128xf32, #tpu.memory_space<vmem>>, vector<1x16x128xf32>
      tpu.vector_store %arg7[%c0_101, %c1_102, %c0_103], %43 {strides = array<i32>} : memref<10x18x128xf32, #tpu.memory_space<vmem>>, vector<1x16x128xf32>,
    } else {
    }
    %c1_i32_46 = arith.constant 1 : i32
    %47 = arith.cmpi eq, %arg1, %c1_i32_46 : i32
    %48 = arith.extui %47 : i1 to i32
    %c0_i32_47 = arith.constant 0 : i32
    %49 = arith.cmpi ne, %48, %c0_i32_47 : i32
    scf.if %49 {
      %c9_101 = arith.constant 9 : index
      %c1_102 = arith.constant 1 : index
      %c0_103 = arith.constant 0 : index
      %96 = vector.load %arg7[%c9_101, %c1_102, %c0_103] : memref<10x18x128xf32, #tpu.memory_space<vmem>>, vector<1x16x128xf32>
      tpu.vector_store %arg7[%c9_101, %c1_102, %c0_103], %43 {strides = array<i32>} : memref<10x18x128xf32, #tpu.memory_space<vmem>>, vector<1x16x128xf32>,
    } else {
    }
    %c0_48 = arith.constant 0 : index
    %c0_49 = arith.constant 0 : index
    %c0_50 = arith.constant 0 : index
    %50 = vector.load %arg7[%c0_48, %c0_49, %c0_50] : memref<10x18x128xf32, #tpu.memory_space<vmem>>, vector<10x16x128xf32>
    %51 = arith.truncf %50 : vector<10x16x128xf32> to vector<10x16x128xbf16>
    %c0_51 = arith.constant 0 : index
    %c0_52 = arith.constant 0 : index
    %c0_53 = arith.constant 0 : index
    %52 = vector.load %arg8[%c0_51, %c0_52, %c0_53] : memref<10x16x384xbf16, #tpu.memory_space<vmem>>, vector<10x16x128xbf16>
    tpu.vector_store %arg8[%c0_51, %c0_52, %c0_53], %51 {strides = array<i32>} : memref<10x16x384xbf16, #tpu.memory_space<vmem>>, vector<10x16x128xbf16>,
    %c0_54 = arith.constant 0 : index
    %c1_55 = arith.constant 1 : index
    %c0_56 = arith.constant 0 : index
    %53 = vector.load %arg7[%c0_54, %c1_55, %c0_56] : memref<10x18x128xf32, #tpu.memory_space<vmem>>, vector<10x16x128xf32>
    %54 = arith.truncf %53 : vector<10x16x128xf32> to vector<10x16x128xbf16>
    %c0_57 = arith.constant 0 : index
    %c0_58 = arith.constant 0 : index
    %c128 = arith.constant 128 : index
    %55 = vector.load %arg8[%c0_57, %c0_58, %c128] : memref<10x16x384xbf16, #tpu.memory_space<vmem>>, vector<10x16x128xbf16>
    tpu.vector_store %arg8[%c0_57, %c0_58, %c128], %54 {strides = array<i32>} : memref<10x16x384xbf16, #tpu.memory_space<vmem>>, vector<10x16x128xbf16>,
    %c0_59 = arith.constant 0 : index
    %c2 = arith.constant 2 : index
    %c0_60 = arith.constant 0 : index
    %56 = vector.load %arg7[%c0_59, %c2, %c0_60] : memref<10x18x128xf32, #tpu.memory_space<vmem>>, vector<10x16x128xf32>
    %57 = arith.truncf %56 : vector<10x16x128xf32> to vector<10x16x128xbf16>
    %c0_61 = arith.constant 0 : index
    %c0_62 = arith.constant 0 : index
    %c256 = arith.constant 256 : index
    %58 = vector.load %arg8[%c0_61, %c0_62, %c256] : memref<10x16x384xbf16, #tpu.memory_space<vmem>>, vector<10x16x128xbf16>
    tpu.vector_store %arg8[%c0_61, %c0_62, %c256], %57 {strides = array<i32>} : memref<10x16x384xbf16, #tpu.memory_space<vmem>>, vector<10x16x128xbf16>,
    %cst_63 = arith.constant 0.000000e+00 : f32
    %59 = vector.broadcast %cst_63 : f32 to vector<128x128xf32>
    %c0_64 = arith.constant 0 : index
    %c0_65 = arith.constant 0 : index
    %c0_66 = arith.constant 0 : index
    %60 = vector.load %arg8[%c0_64, %c0_65, %c0_66] : memref<10x16x384xbf16, #tpu.memory_space<vmem>>, vector<8x16x384xbf16>
    %61 = vector.shape_cast %60 : vector<8x16x384xbf16> to vector<128x384xbf16>
    %c0_67 = arith.constant 0 : index
    %c0_68 = arith.constant 0 : index
    %c0_69 = arith.constant 0 : index
    %62 = vector.load %arg4[%c0_67, %c0_68, %c0_69] : memref<3x384x128xbf16, #tpu.memory_space<vmem>>, vector<1x384x128xbf16>
    %63 = vector.shape_cast %62 : vector<1x384x128xbf16> to vector<384x128xbf16>
    %cst_70 = arith.constant dense<0.000000e+00> : vector<128x128xf32>
    %64 = tpu.matmul %61, %63, %cst_70 {dimension_numbers = #tpu.dot_dimension_numbers<[1], [0], [0], [1], [0, 0, 1, 1], [], []>} : vector<128x384xbf16>, vector<384x128xbf16>, vector<128x128xf32> -> vector<128x128xf32>
    %65 = arith.addf %59, %64 : vector<128x128xf32>
    %c1_71 = arith.constant 1 : index
    %c0_72 = arith.constant 0 : index
    %c0_73 = arith.constant 0 : index
    %66 = vector.load %arg8[%c1_71, %c0_72, %c0_73] : memref<10x16x384xbf16, #tpu.memory_space<vmem>>, vector<8x16x384xbf16>
    %67 = vector.shape_cast %66 : vector<8x16x384xbf16> to vector<128x384xbf16>
    %c1_74 = arith.constant 1 : index
    %c0_75 = arith.constant 0 : index
    %c0_76 = arith.constant 0 : index
    %68 = vector.load %arg4[%c1_74, %c0_75, %c0_76] : memref<3x384x128xbf16, #tpu.memory_space<vmem>>, vector<1x384x128xbf16>
    %69 = vector.shape_cast %68 : vector<1x384x128xbf16> to vector<384x128xbf16>
    %cst_77 = arith.constant dense<0.000000e+00> : vector<128x128xf32>
    %70 = tpu.matmul %67, %69, %cst_77 {dimension_numbers = #tpu.dot_dimension_numbers<[1], [0], [0], [1], [0, 0, 1, 1], [], []>} : vector<128x384xbf16>, vector<384x128xbf16>, vector<128x128xf32> -> vector<128x128xf32>
    %71 = arith.addf %65, %70 : vector<128x128xf32>
    %c2_78 = arith.constant 2 : index
    %c0_79 = arith.constant 0 : index
    %c0_80 = arith.constant 0 : index
    %72 = vector.load %arg8[%c2_78, %c0_79, %c0_80] : memref<10x16x384xbf16, #tpu.memory_space<vmem>>, vector<8x16x384xbf16>
    %73 = vector.shape_cast %72 : vector<8x16x384xbf16> to vector<128x384xbf16>
    %c2_81 = arith.constant 2 : index
    %c0_82 = arith.constant 0 : index
    %c0_83 = arith.constant 0 : index
    %74 = vector.load %arg4[%c2_81, %c0_82, %c0_83] : memref<3x384x128xbf16, #tpu.memory_space<vmem>>, vector<1x384x128xbf16>
    %75 = vector.shape_cast %74 : vector<1x384x128xbf16> to vector<384x128xbf16>
    %cst_84 = arith.constant dense<0.000000e+00> : vector<128x128xf32>
    %76 = tpu.matmul %73, %75, %cst_84 {dimension_numbers = #tpu.dot_dimension_numbers<[1], [0], [0], [1], [0, 0, 1, 1], [], []>} : vector<128x384xbf16>, vector<384x128xbf16>, vector<128x128xf32> -> vector<128x128xf32>
    %77 = arith.addf %71, %76 : vector<128x128xf32>
    %78 = vector.shape_cast %77 : vector<128x128xf32> to vector<8x16x128xf32>
    %79 = arith.truncf %78 : vector<8x16x128xf32> to vector<8x16x128xbf16>
    %c0_85 = arith.constant 0 : index
    %c0_86 = arith.constant 0 : index
    %c0_87 = arith.constant 0 : index
    %c0_88 = arith.constant 0 : index
    %80 = vector.load %arg5[%c0_85, %c0_86, %c0_87, %c0_88] : memref<1x8x16x128xbf16, #tpu.memory_space<vmem>>, vector<1x8x16x128xbf16>
    %81 = vector.shape_cast %80 : vector<1x8x16x128xbf16> to vector<8x16x128xbf16>
    %82 = vector.shape_cast %79 : vector<8x16x128xbf16> to vector<1x8x16x128xbf16>
    tpu.vector_store %arg5[%c0_85, %c0_86, %c0_87, %c0_88], %82 {strides = array<i32>} : memref<1x8x16x128xbf16, #tpu.memory_space<vmem>>, vector<1x8x16x128xbf16>,
    %83 = vector.shape_cast %78 : vector<8x16x128xf32> to vector<1x8x16x128xf32>
    %c0_89 = arith.constant 0 : index
    %c0_90 = arith.constant 0 : index
    %84 = vector.load %arg10[%c0_89, %c0_90] : memref<8x128xf32, #tpu.memory_space<vmem>>, vector<8x128xf32>
    %cst_91 = arith.constant dense<0.000000e+00> : vector<8x128xf32>
    %85 = vector.multi_reduction <add>, %83, %cst_91 [0, 2] : vector<1x8x16x128xf32> to vector<8x128xf32>
    %86 = arith.addf %84, %85 : vector<8x128xf32>
    %c0_92 = arith.constant 0 : index
    %c0_93 = arith.constant 0 : index
    %87 = vector.load %arg10[%c0_92, %c0_93] : memref<8x128xf32, #tpu.memory_space<vmem>>, vector<8x128xf32>
    tpu.vector_store %arg10[%c0_92, %c0_93], %86 {strides = array<i32>} : memref<8x128xf32, #tpu.memory_space<vmem>>, vector<8x128xf32>,
    %c0_94 = arith.constant 0 : index
    %c0_95 = arith.constant 0 : index
    %88 = vector.load %arg11[%c0_94, %c0_95] : memref<8x128xf32, #tpu.memory_space<vmem>>, vector<8x128xf32>
    %89 = arith.mulf %83, %83 : vector<1x8x16x128xf32>
    %cst_96 = arith.constant dense<0.000000e+00> : vector<8x128xf32>
    %90 = vector.multi_reduction <add>, %89, %cst_96 [0, 2] : vector<1x8x16x128xf32> to vector<8x128xf32>
    %91 = arith.addf %88, %90 : vector<8x128xf32>
    %c0_97 = arith.constant 0 : index
    %c0_98 = arith.constant 0 : index
    %92 = vector.load %arg11[%c0_97, %c0_98] : memref<8x128xf32, #tpu.memory_space<vmem>>, vector<8x128xf32>
    tpu.vector_store %arg11[%c0_97, %c0_98], %91 {strides = array<i32>} : memref<8x128xf32, #tpu.memory_space<vmem>>, vector<8x128xf32>,
    %c1_i32_99 = arith.constant 1 : i32
    %93 = arith.cmpi eq, %arg1, %c1_i32_99 : i32
    %94 = arith.extui %93 : i1 to i32
    %c0_i32_100 = arith.constant 0 : i32
    %95 = arith.cmpi ne, %94, %c0_i32_100 : i32
    scf.if %95 {
      %c0_101 = arith.constant 0 : index
      %c0_102 = arith.constant 0 : index
      %96 = vector.load %arg10[%c0_101, %c0_102] : memref<8x128xf32, #tpu.memory_space<vmem>>, vector<8x128xf32>
      %cst_103 = arith.constant dense<0.000000e+00> : vector<128xf32>
      %97 = vector.multi_reduction <add>, %96, %cst_103 [0] : vector<8x128xf32> to vector<128xf32>
      %98 = vector.shape_cast %97 : vector<128xf32> to vector<1x128xf32>
      %c0_104 = arith.constant 0 : index
      %c0_105 = arith.constant 0 : index
      %99 = vector.load %arg11[%c0_104, %c0_105] : memref<8x128xf32, #tpu.memory_space<vmem>>, vector<8x128xf32>
      %cst_106 = arith.constant dense<0.000000e+00> : vector<128xf32>
      %100 = vector.multi_reduction <add>, %99, %cst_106 [0] : vector<8x128xf32> to vector<128xf32>
      %101 = vector.shape_cast %100 : vector<128xf32> to vector<1x128xf32>
      %102 = tpu.concatenate %98, %101 in 0 : vector<1x128xf32>, vector<1x128xf32> -> vector<2x128xf32>
      %c0_107 = arith.constant 0 : index
      %c0_108 = arith.constant 0 : index
      %c0_109 = arith.constant 0 : index
      %103 = vector.load %arg6[%c0_107, %c0_108, %c0_109] : memref<1x2x128xf32, #tpu.memory_space<vmem>>, vector<1x2x128xf32>
      %104 = vector.shape_cast %103 : vector<1x2x128xf32> to vector<2x128xf32>
      %105 = vector.shape_cast %102 : vector<2x128xf32> to vector<1x2x128xf32>
      tpu.vector_store %arg6[%c0_107, %c0_108, %c0_109], %105 {strides = array<i32>} : memref<1x2x128xf32, #tpu.memory_space<vmem>>, vector<1x2x128xf32>,
    } else {
    }
    return
  }
  func.func @transform_0(%arg0: i32, %arg1: i32) -> (i32, i32, i32, i32) {
    %c0_i32 = arith.constant 0 : i32
    %c0_i32_0 = arith.constant 0 : i32
    %c0_i32_1 = arith.constant 0 : i32
    return %arg0, %arg1, %c0_i32, %c0_i32_0 : i32, i32, i32, i32
  }
  func.func @transform_2(%arg0: i32, %arg1: i32) -> (i32, i32, i32) {
    %c0_i32 = arith.constant 0 : i32
    %c0_i32_0 = arith.constant 0 : i32
    %c0_i32_1 = arith.constant 0 : i32
    %c0_i32_2 = arith.constant 0 : i32
    return %c0_i32, %c0_i32_0, %c0_i32_1 : i32, i32, i32
  }
  func.func @transform_3(%arg0: i32, %arg1: i32) -> (i32, i32, i32, i32) {
    %c0_i32 = arith.constant 0 : i32
    %c0_i32_0 = arith.constant 0 : i32
    %c0_i32_1 = arith.constant 0 : i32
    return %arg0, %arg1, %c0_i32, %c0_i32_0 : i32, i32, i32, i32
  }
  func.func @transform_4(%arg0: i32, %arg1: i32) -> (i32, i32, i32) {
    %c0_i32 = arith.constant 0 : i32
    %c0_i32_0 = arith.constant 0 : i32
    %c0_i32_1 = arith.constant 0 : i32
    return %arg0, %c0_i32, %c0_i32_0 : i32, i32, i32
  }
}

</mosaic_0001>

<llo_original>
// kernel: _lambda_.3
$region0: #{_lambda_.3}
  #allocation0 [shape = 'u32[]', space=smem, size = 0x4, offset = 0x4, fixed_abs, tag = 'smem constant byte address 0x4 - core index']
  #allocation1 [shape = 'u32[144,128]{1,0:T(1,128)}', space=vmem, size = 0x12000, scoped, tag = 'internal scratch']
  #allocation2 [shape = 'f32[10,18,128]{2,1,0:T(8,128)}', space=vmem, size = 0x1e000, scoped, tag = 'scratch operand']
  #allocation3 [shape = 'bf16[10,16,384]{2,1,0:T(16,128)(2,1)}', space=vmem, size = 0x1e000, scoped, tag = 'scratch operand']
  #allocation4 [shape = 'bf16[2,16,128]{2,1,0:T(16,128)(2,1)}', space=vmem, size = 0x2000, scoped, tag = 'scratch operand']
  #allocation5 [shape = 'f32[8,128]{1,0:T(8,128)}', space=vmem, size = 0x1000, scoped, tag = 'scratch operand']
  #allocation6 [shape = 'f32[8,128]{1,0:T(8,128)}', space=vmem, size = 0x1000, scoped, tag = 'scratch operand']
  #allocation7 [shape = 's32[2]{0}', space=sflag, size = 0x8, scoped, tag = 'scratch operand']
  #allocation19 [shape = 's32[]', space=sflag, size = 0x4, offset = 0, fixed_abs, tag = 'sflag constant byte address 0x0 - dummy sync flag']
  #allocation20 [shape = 's32[]', space=sflag, size = 0x4, offset = 0, fixed_abs, tag = 'sflag constant byte address 0x0 - dummy sync flag']
  #allocation21 [shape = 'u32[]', space=smem, size = 0x4, offset = 0x44, fixed_abs, tag = 'smem constant byte address 0x44 - assertion arg 0']
  #allocation22 [shape = 'u32[]', space=smem, size = 0x4, offset = 0x48, fixed_abs, tag = 'smem constant byte address 0x48 - assertion arg 1']
  #allocation23 [shape = 's32[]', space=sflag, size = 0x4, offset = 0, fixed_abs, tag = 'sflag constant byte address 0x0 - dummy sync flag']
  #allocation24 [shape = 's32[]', space=sflag, size = 0x4, offset = 0, fixed_abs, tag = 'sflag constant byte address 0x0 - dummy sync flag']
  %s0 = inlined_call_operand.hbm [shape: bf16[2,16,16,128], index: 0, kind: input, shape index: {}, may-alias: {0,1}]
  %s1 = inlined_call_operand.hbm [shape: bf16[2,16,16,128], index: 1, kind: input, shape index: {}, may-alias: {0,1}]
  %s2 = inlined_call_operand.hbm [shape: f32[1,128], index: 2, kind: input, shape index: {}]
  %s3 = inlined_call_operand.hbm [shape: f32[1,128], index: 3, kind: input, shape index: {}]
  %s4 = inlined_call_operand.hbm [shape: bf16[3,384,128], index: 4, kind: input, shape index: {}]
  %s5 = inlined_call_operand.hbm [shape: bf16[2,16,16,128], index: 5, kind: output, shape index: {0}]
  %s6 = inlined_call_operand.hbm [shape: f32[2,2,128], index: 6, kind: output, shape index: {1}]
  %7 = xla_tuple %s5, %s6
  %s8 = sld [smem:[#allocation0]]
  $region97: #{_lambda_.3} parent=0
    _
  %s10 = ssub.s32 1, %s8
  %s11 = scalar_select 0, %s10, %s8
  $region1: #{_lambda_.3} parent=0
    #allocation8 [shape = 'u8[65536]{0}', space=vmem, size = 0x10000, scoped, tag = 'input window, operand 0']
    #allocation9 [shape = 's32[2]{0}', space=sflag, size = 0x8, scoped, tag = 'scoped memory for _lambda_.3']
    #allocation10 [shape = 's32[2]{0}', space=sflag, size = 0x8, scoped, tag = 'scoped memory for _lambda_.3']
    #allocation11 [shape = 'u8[512]{0}', space=vmem, size = 0x400, scoped, tag = 'input window, operand 2, single buffered']
    #allocation12 [shape = 's32[1]{0}', space=sflag, size = 0x4, scoped, tag = 'scoped memory for _lambda_.3']
    #allocation13 [shape = 'u8[512]{0}', space=vmem, size = 0x400, scoped, tag = 'input window, operand 3, single buffered']
    #allocation14 [shape = 'u8[294912]{0}', space=vmem, size = 0x48000, scoped, tag = 'input window, operand 4, single buffered']
    #allocation15 [shape = 's32[1]{0}', space=sflag, size = 0x4, scoped, tag = 'scoped memory for _lambda_.3']
    #allocation16 [shape = 'u8[65536]{0}', space=vmem, size = 0x10000, scoped, tag = 'output window, operand 0']
    #allocation17 [shape = 'u8[2048]{0}', space=vmem, size = 0x800, scoped, tag = 'output window, operand 1']
    #allocation18 [shape = 's32[2]{0}', space=sflag, size = 0x8, scoped, tag = 'scoped memory for _lambda_.3']
    %12 = vsyncpa [#allocation9], 0
    %s13 = scalar_lea.sflag [#allocation9], 1
    %14 = vsyncpa %s13, 0
    %15 = vsyncpa [#allocation12], 0
    %16 = vsyncpa [#allocation15], 0
    %17 = vsyncpa [#allocation10], 0
    %s18 = scalar_lea.sflag [#allocation10], 1
    %19 = vsyncpa %s18, 0
    %20 = vsyncpa [#allocation18], 0
    %s21 = scalar_lea.sflag [#allocation18], 1
    %22 = vsyncpa %s21, 0
    loop: start=0, step=1, limit=6
    $region2: #{_lambda_.3} parent=1 // loop_pre_header
      _
    $region3: #{_lambda_.3} parent=1 // loop_header
      %s24 = sphi 0, %s28
      %p25 = scmp.ge.s32.totalorder %s24, 6
      %s31 = sphi 0, %s43
      %s32 = sphi 0, %s39
      %s33 = sphi 0, %s31
      %s34 = sphi 0, %s32
      %s35 = sphi 0, %s33
      %s36 = sphi 0, %s34
      %s48 = sphi 0, %s50
      %s51 = sphi 0, %s48
      %s52 = sphi 0, %s51
      %s68 = sphi 0, %s52
      %s72 = sphi 0, %s72
      %s74 = sphi 0, %s72
      %s75 = sphi 0, %s74
      %s89 = sphi 0, %s75
      %s93 = sphi 0, %s93
      %s95 = sphi 0, %s93
      %s96 = sphi 0, %s95
      %s110 = sphi 0, %s96
      %s114 = sphi 0, %s114
      %s116 = sphi 0, %s114
      %s117 = sphi 0, %s116
      %s131 = sphi 0, %s117
      %s139 = sphi 0, %s141
      %s142 = sphi 0, %s139
      %s143 = sphi 0, %s142
      %s159 = sphi 0, %s143
      %s165 = sphi 0, %s167
      %s168 = sphi 0, %s165
      %s169 = sphi 0, %s168
      %s185 = sphi 0, %s169
    $region4: #{_lambda_.3} parent=1 // loop_header_branch
      %27 = sbr.rel (%p25) target = $region8
    $region5: #{_lambda_.3} parent=1 // loop_body
      %s29 = ssub.s32 %s24, 1
      %s30 = ssub.s32 %s24, 2
      %s37 = sadd.s32 1, %s32
      %p38 = scmp.ge.s32.totalorder %s37, 2
      %s39 = scalar_select %p38, 0, %s37
      %s40 = sadd.s32 1, %s31
      %s41 = scalar_select %p38, %s40, %s31
      %p42 = scmp.ge.s32.totalorder %s41, 2
      %s43 = scalar_select %p42, 0, %s41
      %s44 = ssub.s32 %s31, %s43
      %s45 = ssub.s32 %s32, %s39
      %s46 = sor.u32 %s44, %s45
      %p47 = scmp.eq.s32.totalorder %s46, 0
      %s49 = sadd.s32 %s48, 1
      %s50 = scalar_select %p47, %s48, %s49
      %p53 = pneg %p47
      %p54 = scmp.eq.s32.totalorder %s24, 3
      %p55 = por %p53, %p54
      %p56 = scmp.ne.s32.totalorder %s48, %s51
      %p57 = scmp.eq.s32.totalorder %s24, 0
      %p58 = por %p56, %p57
      %p59 = scmp.ne.s32.totalorder %s48, %s51
      %p60 = scmp.eq.s32.totalorder %s29, 3
      %p61 = por %p59, %p60
      %p62 = scmp.ne.s32.totalorder %s51, %s52
      %p63 = scmp.eq.s32.totalorder %s29, 0
      %p64 = por %p62, %p63
      %p65 = scmp.ne.s32.totalorder %s51, %s52
      %p66 = scmp.eq.s32.totalorder %s30, 3
      %p67 = por %p65, %p66
      %p69 = scmp.ne.s32.totalorder %s52, %s68
      %p70 = scmp.eq.s32.totalorder %s30, 0
      %p71 = por %p69, %p70
      %s73 = sadd.s32 %s72, 1
      %p76 = scmp.eq.s32.totalorder %s24, 3
      %p77 = scmp.ne.s32.totalorder %s72, %s74
      %p78 = scmp.eq.s32.totalorder %s24, 0
      %p79 = por %p77, %p78
      %p80 = scmp.ne.s32.totalorder %s72, %s74
      %p81 = scmp.eq.s32.totalorder %s29, 3
      %p82 = por %p80, %p81
      %p83 = scmp.ne.s32.totalorder %s74, %s75
      %p84 = scmp.eq.s32.totalorder %s29, 0
      %p85 = por %p83, %p84
      %p86 = scmp.ne.s32.totalorder %s74, %s75
      %p87 = scmp.eq.s32.totalorder %s30, 3
      %p88 = por %p86, %p87
      %p90 = scmp.ne.s32.totalorder %s75, %s89
      %p91 = scmp.eq.s32.totalorder %s30, 0
      %p92 = por %p90, %p91
      %s94 = sadd.s32 %s93, 1
      %p97 = scmp.eq.s32.totalorder %s24, 3
      %p98 = scmp.ne.s32.totalorder %s93, %s95
      %p99 = scmp.eq.s32.totalorder %s24, 0
      %p100 = por %p98, %p99
      %p101 = scmp.ne.s32.totalorder %s93, %s95
      %p102 = scmp.eq.s32.totalorder %s29, 3
      %p103 = por %p101, %p102
      %p104 = scmp.ne.s32.totalorder %s95, %s96
      %p105 = scmp.eq.s32.totalorder %s29, 0
      %p106 = por %p104, %p105
      %p107 = scmp.ne.s32.totalorder %s95, %s96
      %p108 = scmp.eq.s32.totalorder %s30, 3
      %p109 = por %p107, %p108
      %p111 = scmp.ne.s32.totalorder %s96, %s110
      %p112 = scmp.eq.s32.totalorder %s30, 0
      %p113 = por %p111, %p112
      %s115 = sadd.s32 %s114, 1
      %p118 = scmp.eq.s32.totalorder %s24, 3
      %p119 = scmp.ne.s32.totalorder %s114, %s116
      %p120 = scmp.eq.s32.totalorder %s24, 0
      %p121 = por %p119, %p120
      %p122 = scmp.ne.s32.totalorder %s114, %s116
      %p123 = scmp.eq.s32.totalorder %s29, 3
      %p124 = por %p122, %p123
      %p125 = scmp.ne.s32.totalorder %s116, %s117
      %p126 = scmp.eq.s32.totalorder %s29, 0
      %p127 = por %p125, %p126
      %p128 = scmp.ne.s32.totalorder %s116, %s117
      %p129 = scmp.eq.s32.totalorder %s30, 3
      %p130 = por %p128, %p129
      %p132 = scmp.ne.s32.totalorder %s117, %s131
      %p133 = scmp.eq.s32.totalorder %s30, 0
      %p134 = por %p132, %p133
      %s135 = ssub.s32 %s31, %s43
      %s136 = ssub.s32 %s32, %s39
      %s137 = sor.u32 %s135, %s136
      %p138 = scmp.eq.s32.totalorder %s137, 0
      %s140 = sadd.s32 %s139, 1
      %s141 = scalar_select %p138, %s139, %s140
      %p144 = pneg %p138
      %p145 = scmp.eq.s32.totalorder %s24, 3
      %p146 = por %p144, %p145
      %p147 = scmp.ne.s32.totalorder %s139, %s142
      %p148 = scmp.eq.s32.totalorder %s24, 0
      %p149 = por %p147, %p148
      %p150 = scmp.ne.s32.totalorder %s139, %s142
      %p151 = scmp.eq.s32.totalorder %s29, 3
      %p152 = por %p150, %p151
      %p153 = scmp.ne.s32.totalorder %s142, %s143
      %p154 = scmp.eq.s32.totalorder %s29, 0
      %p155 = por %p153, %p154
      %p156 = scmp.ne.s32.totalorder %s142, %s143
      %p157 = scmp.eq.s32.totalorder %s30, 3
      %p158 = por %p156, %p157
      %p160 = scmp.ne.s32.totalorder %s143, %s159
      %p161 = scmp.eq.s32.totalorder %s30, 0
      %p162 = por %p160, %p161
      %s163 = ssub.s32 %s31, %s43
      %p164 = scmp.eq.s32.totalorder %s163, 0
      %s166 = sadd.s32 %s165, 1
      %s167 = scalar_select %p164, %s165, %s166
      %p170 = pneg %p164
      %p171 = scmp.eq.s32.totalorder %s24, 3
      %p172 = por %p170, %p171
      %p173 = scmp.ne.s32.totalorder %s165, %s168
      %p174 = scmp.eq.s32.totalorder %s24, 0
      %p175 = por %p173, %p174
      %p176 = scmp.ne.s32.totalorder %s165, %s168
      %p177 = scmp.eq.s32.totalorder %s29, 3
      %p178 = por %p176, %p177
      %p179 = scmp.ne.s32.totalorder %s168, %s169
      %p180 = scmp.eq.s32.totalorder %s29, 0
      %p181 = por %p179, %p180
      %p182 = scmp.ne.s32.totalorder %s168, %s169
      %p183 = scmp.eq.s32.totalorder %s30, 3
      %p184 = por %p182, %p183
      %p186 = scmp.ne.s32.totalorder %s169, %s185
      %p187 = scmp.eq.s32.totalorder %s30, 0
      %p188 = por %p186, %p187
      %p189 = scmp.le.s32.totalorder 1, %s24
      %p190 = scmp.lt.s32.totalorder %s24, 5
      %p191 = pnand %p189, %p190
      %p192 = pneg %p191
      // Predicated region
      $region9: #{_lambda_.3} parent=5 // pred_check
        _
      $region10: #{_lambda_.3} parent=5 // pred_check_branch
        %194 = sbr.rel (%p191) target = $region12
      $region11: #{_lambda_.3} parent=5 // pred_region
        %s195 = ssub.s32 %s24, 1
        // Predicated region
        $region13: #{_lambda_.3} parent=11 // pred_check
          %p196 = pneg %p85
        $region14: #{_lambda_.3} parent=11 // pred_check_branch
          %198 = sbr.rel (%p196) target = $region16
        $region15: #{_lambda_.3} parent=11 // pred_region
          %s200 = ssub.s32 16, 16
          %201 = vsyncadd [#allocation12], %s200
          %s203 = sshll.u32 [#allocation11], 4
          %s204 = int_to_ptr.vmem [resolvable:$true] %s203
          %206 = dma.hbm_to_vmem [thread:$0]  %s2, 16, %s204, [#allocation12]
        $region16: #{_lambda_.3} parent=11 // pred_fallthru
          _
        // Predicated region
        $region17: #{_lambda_.3} parent=11 // pred_check
          %p207 = pneg %p106
        $region18: #{_lambda_.3} parent=11 // pred_check_branch
          %209 = sbr.rel (%p207) target = $region20
        $region19: #{_lambda_.3} parent=11 // pred_region
          %s211 = ssub.s32 16, 16
          %212 = vsyncadd [#allocation12], %s211
          %s214 = sshll.u32 [#allocation13], 4
          %s215 = int_to_ptr.vmem [resolvable:$true] %s214
          %217 = dma.hbm_to_vmem [thread:$0]  %s3, 16, %s215, [#allocation12]
        $region20: #{_lambda_.3} parent=11 // pred_fallthru
          _
        // Predicated region
        $region21: #{_lambda_.3} parent=11 // pred_check
          %p218 = pneg %p127
        $region22: #{_lambda_.3} parent=11 // pred_check_branch
          %220 = sbr.rel (%p218) target = $region24
        $region23: #{_lambda_.3} parent=11 // pred_region
          %s222 = ssub.s32 9216, 9216
          %223 = vsyncadd [#allocation15], %s222
          %s224 = sshll.u32 [#allocation14], 4
          %s225 = int_to_ptr.vmem [resolvable:$true] %s224
          %230 = dma.hbm_to_vmem [thread:$0]  %s4, 9216, %s225, [#allocation15], 64, 64, 4
        $region24: #{_lambda_.3} parent=11 // pred_fallthru
          _
      $region12: #{_lambda_.3} parent=5 // pred_fallthru
        _
      %p231 = scmp.lt.s32.totalorder %s24, 4
      // Predicated region
      $region25: #{_lambda_.3} parent=5 // pred_check
        %p232 = pneg %p231
      $region26: #{_lambda_.3} parent=5 // pred_check_branch
        %234 = sbr.rel (%p232) target = $region28
      $region27: #{_lambda_.3} parent=5 // pred_region
        // Predicated region
        $region29: #{_lambda_.3} parent=27 // pred_check
          %p235 = pneg %p58
        $region30: #{_lambda_.3} parent=27 // pred_check_branch
          %237 = sbr.rel (%p235) target = $region32
        $region31: #{_lambda_.3} parent=27 // pred_region
          %s238 = sand.u32 %s48, 1
          %s239 = scalar_lea.sflag [#allocation9], %s238
          %s240 = sand.u32 %s48, 1
          %s241 = smul.addr %s240, 64
          %s242 = scalar_lea.vmem [#allocation8], %s241
          %s243 = smul.u32 8, %s32
          %s245 = ssub.s32 1024, 1024
          %246 = vsyncadd %s239, %s245
          %s247 = smul.addr %s243, 2
          %s248 = smul.addr %s31, 32
          %s249 = sadd.s32 %s247, %s248
          %s250 = smul.addr %s249, 64
          %s251 = scalar_lea.hbm %s0, %s250
          %s252 = sshll.u32 %s242, 4
          %s253 = int_to_ptr.vmem [resolvable:$true] %s252
          %258 = dma.hbm_to_vmem [thread:$0]  %s251, 1024, %s253, %s239, 64, 64, 4
        $region32: #{_lambda_.3} parent=27 // pred_fallthru
          _
      $region28: #{_lambda_.3} parent=5 // pred_fallthru
        _
      %p259 = scmp.le.s32.totalorder 1, %s24
      %p260 = scmp.lt.s32.totalorder %s24, 5
      %p261 = pnand %p259, %p260
      %p262 = pneg %p261
      // Predicated region
      $region33: #{_lambda_.3} parent=5 // pred_check
        _
      $region34: #{_lambda_.3} parent=5 // pred_check_branch
        %264 = sbr.rel (%p261) target = $region36
      $region35: #{_lambda_.3} parent=5 // pred_region
        %s265 = ssub.s32 %s24, 1
        %s266 = sand.u32 %s51, 1
        %s267 = scalar_lea.sflag [#allocation9], %s266
        %s268 = sand.u32 %s51, 1
        %s269 = smul.addr %s268, 64
        %s270 = scalar_lea.vmem [#allocation8], %s269
        // Predicated region
        $region37: #{_lambda_.3} parent=35 // pred_check
          %p271 = pneg %p64
        $region38: #{_lambda_.3} parent=35 // pred_check_branch
          %273 = sbr.rel (%p271) target = $region40
        $region39: #{_lambda_.3} parent=35 // pred_region
          %274 = dma.done %s267, 1024
        $region40: #{_lambda_.3} parent=35 // pred_fallthru
          _
        // Predicated region
        $region41: #{_lambda_.3} parent=35 // pred_check
          %p275 = pneg %p85
        $region42: #{_lambda_.3} parent=35 // pred_check_branch
          %277 = sbr.rel (%p275) target = $region44
        $region43: #{_lambda_.3} parent=35 // pred_region
          %278 = dma.done [#allocation12], 16
        $region44: #{_lambda_.3} parent=35 // pred_fallthru
          _
        // Predicated region
        $region45: #{_lambda_.3} parent=35 // pred_check
          %p279 = pneg %p106
        $region46: #{_lambda_.3} parent=35 // pred_check_branch
          %281 = sbr.rel (%p279) target = $region48
        $region47: #{_lambda_.3} parent=35 // pred_region
          %282 = dma.done [#allocation12], 16
        $region48: #{_lambda_.3} parent=35 // pred_fallthru
          _
        // Predicated region
        $region49: #{_lambda_.3} parent=35 // pred_check
          %p283 = pneg %p127
        $region50: #{_lambda_.3} parent=35 // pred_check_branch
          %285 = sbr.rel (%p283) target = $region52
        $region51: #{_lambda_.3} parent=35 // pred_region
          %286 = dma.done [#allocation15], 9216
        $region52: #{_lambda_.3} parent=35 // pred_fallthru
          _
        %s287 = sand.u32 %s51, 1
        %s288 = scalar_lea.sflag [#allocation9], %s287
        %s289 = sand.u32 %s51, 1
        %s290 = smul.addr %s289, 64
        %s291 = scalar_lea.vmem [#allocation8], %s290
        %p292 = pneg %p64
        %p293 = pneg %p61
        %p294 = pneg %p85
        %p295 = pneg %p82
        %p296 = pneg %p106
        %p297 = pneg %p103
        %p298 = pneg %p127
        %p299 = pneg %p124
        %p300 = pneg %p155
        %p301 = pneg %p152
        %s302 = sand.u32 %s142, 1
        %s303 = scalar_lea.sflag [#allocation10], %s302
        %s304 = sand.u32 %s142, 1
        %s305 = smul.addr %s304, 64
        %s306 = scalar_lea.vmem [#allocation16], %s305
        %p307 = pneg %p181
        %p308 = pneg %p178
        %s309 = sand.u32 %s168, 1
        %s310 = scalar_lea.sflag [#allocation18], %s309
        %s311 = sand.u32 %s168, 1
        %s312 = smul.addr %s311, 2
        %s313 = scalar_lea.vmem [#allocation17], %s312
        %s314 = smul.u32 8, %s34
        %s315 = smul.u32 8, %s34
        %s317 = smul.u32 %s34, 8
        %s318 = ssub.s32 %s317, 1
        %p319 = scmp.gt.s32.totalorder %s318, 0
        %s320 = scalar_select %p319, %s318, 0
        %s321 = sadd.s32 %s317, 8
        %p322 = scmp.lt.s32.totalorder %s321, 15
        %s323 = scalar_select %p322, %s321, 15
        %s324 = smul.u32 %s320, 2
        %s325 = smul.u32 %s33, 32
        %s326 = sadd.s32 %s324, %s325
        %s327 = smul.addr %s326, 64
        %s328 = scalar_lea.hbm %s1, %s327
        // Predicated region
        $region53: #{_lambda_.3} parent=35 // pred_check
          _
        $region54: #{_lambda_.3} parent=35 // pred_check_branch
          %330 = sbr.rel target = $region56
        $region55: #{_lambda_.3} parent=35 // pred_region
          %331 = sst [smem:[#allocation21]] [#allocation20]
          %332 = sst [smem:[#allocation22]] [#allocation19]
        $region56: #{_lambda_.3} parent=35 // pred_fallthru
          _
        %334 = shalt.err (0)
        %s336 = sshll.u32 [#allocation4], 4
        %s337 = int_to_ptr.vmem [resolvable:$true] %s336
        %339 = dma.hbm_to_vmem [thread:$0]  %s328, 128, %s337, [#allocation7]
        %s340 = smul.u32 %s323, 2
        %s341 = sadd.s32 %s340, %s325
        %s342 = smul.addr %s341, 64
        %s343 = scalar_lea.hbm %s1, %s342
        %s344 = scalar_lea.vmem [#allocation4], 8
        %s345 = scalar_lea.sflag [#allocation7], 1
        // Predicated region
        $region57: #{_lambda_.3} parent=35 // pred_check
          _
        $region58: #{_lambda_.3} parent=35 // pred_check_branch
          %347 = sbr.rel target = $region60
        $region59: #{_lambda_.3} parent=35 // pred_region
          %348 = sst [smem:[#allocation21]] [#allocation24]
          %349 = sst [smem:[#allocation22]] [#allocation23]
        $region60: #{_lambda_.3} parent=35 // pred_fallthru
          _
        %351 = shalt.err (0)
        %s353 = sshll.u32 %s344, 4
        %s354 = int_to_ptr.vmem [resolvable:$true] %s353
        %356 = dma.hbm_to_vmem [thread:$0]  %s343, 128, %s354, %s345
        %p357 = scmp.eq.s32.totalorder %s34, 0
        // Predicated region
        $region61: #{_lambda_.3} parent=35 // pred_check
          %p358 = pneg %p357
        $region62: #{_lambda_.3} parent=35 // pred_check_branch
          %360 = sbr.rel (%p358) target = $region64
        $region63: #{_lambda_.3} parent=35 // pred_region
          %361 = vst [vmem:[#allocation2] sm:$0x1] 0.0
          %362 = vst [vmem:[#allocation2 + $0x18] sm:$0x1] 0.0
          %363 = vst [vmem:[#allocation2 + $0x30] sm:$0x1] 0.0
          %364 = vst [vmem:[#allocation2 + $0x48] sm:$0x1] 0.0
          %365 = vst [vmem:[#allocation2 + $0x60] sm:$0x1] 0.0
          %366 = vst [vmem:[#allocation2 + $0x78] sm:$0x1] 0.0
          %367 = vst [vmem:[#allocation2 + $0x90] sm:$0x1] 0.0
          %368 = vst [vmem:[#allocation2 + $0xa8] sm:$0x1] 0.0
          %369 = vst [vmem:[#allocation2 + $0xc0] sm:$0x1] 0.0
          %370 = vst [vmem:[#allocation2 + $0xd8] sm:$0x1] 0.0
          %371 = vst [vmem:[#allocation2 + $0x11] sm:$0x1] 0.0
          %372 = vst [vmem:[#allocation2 + $0x29] sm:$0x1] 0.0
          %373 = vst [vmem:[#allocation2 + $0x41] sm:$0x1] 0.0
          %374 = vst [vmem:[#allocation2 + $0x59] sm:$0x1] 0.0
          %375 = vst [vmem:[#allocation2 + $0x71] sm:$0x1] 0.0
          %376 = vst [vmem:[#allocation2 + $0x89] sm:$0x1] 0.0
          %377 = vst [vmem:[#allocation2 + $0xa1] sm:$0x1] 0.0
          %378 = vst [vmem:[#allocation2 + $0xb9] sm:$0x1] 0.0
          %379 = vst [vmem:[#allocation2 + $0xd1] sm:$0x1] 0.0
          %380 = vst [vmem:[#allocation2 + $0xe9] sm:$0x1] 0.0
          %381 = vst [vmem:[#allocation5] sm:$0xff] 0.0
          %382 = vst [vmem:[#allocation6] sm:$0xff] 0.0
        $region64: #{_lambda_.3} parent=35 // pred_fallthru
          _
        %v383 = vld [vmem:[%s270] sm:$0xf]
        %v384 = vld [vmem:[%s270 + $0x4] sm:$0xf]
        %v385 = vld [vmem:[%s270 + $0x8] sm:$0xf]
        %v386 = vld [vmem:[%s270 + $0xc] sm:$0xf]
        %v387 = vld [vmem:[%s270 + $0x10] sm:$0xf]
        %v388 = vld [vmem:[%s270 + $0x14] sm:$0xf]
        %v389 = vld [vmem:[%s270 + $0x18] sm:$0xf]
        %v390 = vld [vmem:[%s270 + $0x1c] sm:$0xf]
        %v391 = vld [vmem:[%s270 + $0x20] sm:$0xf]
        %v392 = vld [vmem:[%s270 + $0x24] sm:$0xf]
        %v393 = vld [vmem:[%s270 + $0x28] sm:$0xf]
        %v394 = vld [vmem:[%s270 + $0x2c] sm:$0xf]
        %v395 = vld [vmem:[%s270 + $0x30] sm:$0xf]
        %v396 = vld [vmem:[%s270 + $0x34] sm:$0xf]
        %v397 = vld [vmem:[%s270 + $0x38] sm:$0xf]
        %v398 = vld [vmem:[%s270 + $0x3c] sm:$0xf]
        %v399 = vunpack.c.l.bf16 %v383
        %v400 = vunpack.c.l.bf16 %v384
        %v401 = vunpack.c.l.bf16 %v385
        %v402 = vunpack.c.l.bf16 %v386
        %v403 = vunpack.c.l.bf16 %v387
        %v404 = vunpack.c.l.bf16 %v388
        %v405 = vunpack.c.l.bf16 %v389
        %v406 = vunpack.c.l.bf16 %v390
        %v407 = vunpack.c.l.bf16 %v391
        %v408 = vunpack.c.l.bf16 %v392
        %v409 = vunpack.c.l.bf16 %v393
        %v410 = vunpack.c.l.bf16 %v394
        %v411 = vunpack.c.l.bf16 %v395
        %v412 = vunpack.c.l.bf16 %v396
        %v413 = vunpack.c.l.bf16 %v397
        %v414 = vunpack.c.l.bf16 %v398
        %v415 = vld [vmem:[#allocation11] sm:$0x1]
        %v417 = vlaneseq
        %v418 = vshrl.u32 %v417, 7
        %v419 = vsub.s32 0, %v418
        %v420 = vrot.slane %v415, %v419
        %v422 = vmul.f32 %v399, %v420
        %v423 = vmul.f32 %v400, %v420
        %v424 = vmul.f32 %v401, %v420
        %v425 = vmul.f32 %v402, %v420
        %v426 = vmul.f32 %v403, %v420
        %v427 = vmul.f32 %v404, %v420
        %v428 = vmul.f32 %v405, %v420
        %v429 = vmul.f32 %v406, %v420
        %v430 = vmul.f32 %v407, %v420
        %v431 = vmul.f32 %v408, %v420
        %v432 = vmul.f32 %v409, %v420
        %v433 = vmul.f32 %v410, %v420
        %v434 = vmul.f32 %v411, %v420
        %v435 = vmul.f32 %v412, %v420
        %v436 = vmul.f32 %v413, %v420
        %v437 = vmul.f32 %v414, %v420
        %v438 = vld [vmem:[#allocation13] sm:$0x1]
        %v440 = vlaneseq
        %v441 = vshrl.u32 %v440, 7
        %v442 = vsub.s32 0, %v441
        %v443 = vrot.slane %v438, %v442
        %v445 = vadd.f32 %v422, %v443
        %v446 = vadd.f32 %v423, %v443
        %v447 = vadd.f32 %v424, %v443
        %v448 = vadd.f32 %v425, %v443
        %v449 = vadd.f32 %v426, %v443
        %v450 = vadd.f32 %v427, %v443
        %v451 = vadd.f32 %v428, %v443
        %v452 = vadd.f32 %v429, %v443
        %v453 = vadd.f32 %v430, %v443
        %v454 = vadd.f32 %v431, %v443
        %v455 = vadd.f32 %v432, %v443
        %v456 = vadd.f32 %v433, %v443
        %v457 = vadd.f32 %v434, %v443
        %v458 = vadd.f32 %v435, %v443
        %v459 = vadd.f32 %v436, %v443
        %v460 = vadd.f32 %v437, %v443
        %v461 = vmax.f32 %v445, 0.0
        %v462 = vmax.f32 %v446, 0.0
        %v463 = vmax.f32 %v447, 0.0
        %v464 = vmax.f32 %v448, 0.0
        %v465 = vmax.f32 %v449, 0.0
        %v466 = vmax.f32 %v450, 0.0
        %v467 = vmax.f32 %v451, 0.0
        %v468 = vmax.f32 %v452, 0.0
        %v469 = vmax.f32 %v453, 0.0
        %v470 = vmax.f32 %v454, 0.0
        %v471 = vmax.f32 %v455, 0.0
        %v472 = vmax.f32 %v456, 0.0
        %v473 = vmax.f32 %v457, 0.0
        %v474 = vmax.f32 %v458, 0.0
        %v475 = vmax.f32 %v459, 0.0
        %v476 = vmax.f32 %v460, 0.0
        %s477 = scalar_lea.vmem [#allocation2], 24
        %478 = vst [vmem:[%s477 + $0x1] sm:$0xff] %v461
        %479 = vst [vmem:[%s477 + $0x9] sm:$0xff] %v462
        %480 = vst [vmem:[%s477 + $0x19] sm:$0xff] %v463
        %481 = vst [vmem:[%s477 + $0x21] sm:$0xff] %v464
        %482 = vst [vmem:[%s477 + $0x31] sm:$0xff] %v465
        %483 = vst [vmem:[%s477 + $0x39] sm:$0xff] %v466
        %484 = vst [vmem:[%s477 + $0x49] sm:$0xff] %v467
        %485 = vst [vmem:[%s477 + $0x51] sm:$0xff] %v468
        %486 = vst [vmem:[%s477 + $0x61] sm:$0xff] %v469
        %487 = vst [vmem:[%s477 + $0x69] sm:$0xff] %v470
        %488 = vst [vmem:[%s477 + $0x79] sm:$0xff] %v471
        %489 = vst [vmem:[%s477 + $0x81] sm:$0xff] %v472
        %490 = vst [vmem:[%s477 + $0x91] sm:$0xff] %v473
        %491 = vst [vmem:[%s477 + $0x99] sm:$0xff] %v474
        %492 = vst [vmem:[%s477 + $0xa9] sm:$0xff] %v475
        %493 = vst [vmem:[%s477 + $0xb1] sm:$0xff] %v476
        %s494 = smul.u32 4, 2
        %s495 = smul.u32 %s494, 1
        %s496 = sshll.u32 %s495, 4
        %497 = dma.done [#allocation7], %s496
        %s498 = sshll.u32 %s495, 4
        %499 = dma.done %s345, %s498
        %v500 = vld [vmem:[#allocation4] sm:$0xff]
        %v501 = vunpack.c.l.bf16 %v500
        %v502 = vunpack.c.h.bf16 %v500
        %v503 = vld [vmem:[#allocation11] sm:$0x1]
        %v505 = vlaneseq
        %v506 = vshrl.u32 %v505, 7
        %v507 = vsub.s32 0, %v506
        %v508 = vrot.slane %v503, %v507
        %v510 = vmul.f32 %v501, %v508
        %v511 = vmul.f32 %v502, %v508
        %v512 = vld [vmem:[#allocation13] sm:$0x1]
        %v514 = vlaneseq
        %v515 = vshrl.u32 %v514, 7
        %v516 = vsub.s32 0, %v515
        %v517 = vrot.slane %v512, %v516
        %v519 = vadd.f32 %v510, %v517
        %v520 = vadd.f32 %v511, %v517
        %v521 = vmax.f32 %v519, 0.0
        %v522 = vmax.f32 %v520, 0.0
        %523 = vst [vmem:[#allocation2 + $0x1] sm:$0xff] %v521
        %524 = vst [vmem:[#allocation2 + $0x9] sm:$0xff] %v522
        %v525 = vld [vmem:[%s344] sm:$0xff]
        %v526 = vunpack.c.l.bf16 %v525
        %v527 = vunpack.c.h.bf16 %v525
        %v528 = vld [vmem:[#allocation11] sm:$0x1]
        %v530 = vlaneseq
        %v531 = vshrl.u32 %v530, 7
        %v532 = vsub.s32 0, %v531
        %v533 = vrot.slane %v528, %v532
        %v535 = vmul.f32 %v526, %v533
        %v536 = vmul.f32 %v527, %v533
        %v537 = vld [vmem:[#allocation13] sm:$0x1]
        %v539 = vlaneseq
        %v540 = vshrl.u32 %v539, 7
        %v541 = vsub.s32 0, %v540
        %v542 = vrot.slane %v537, %v541
        %v544 = vadd.f32 %v535, %v542
        %v545 = vadd.f32 %v536, %v542
        %v546 = vmax.f32 %v544, 0.0
        %v547 = vmax.f32 %v545, 0.0
        %s548 = scalar_lea.vmem [#allocation2], 216
        %549 = vst [vmem:[%s548 + $0x1] sm:$0xff] %v546
        %550 = vst [vmem:[%s548 + $0x9] sm:$0xff] %v547
        // Predicated region
        $region65: #{_lambda_.3} parent=35 // pred_check
          %p551 = pneg %p357
        $region66: #{_lambda_.3} parent=35 // pred_check_branch
          %553 = sbr.rel (%p551) target = $region68
        $region67: #{_lambda_.3} parent=35 // pred_region
          %554 = vst [vmem:[#allocation2 + $0x1] sm:$0xff] 0.0
          %555 = vst [vmem:[#allocation2 + $0x9] sm:$0xff] 0.0
        $region68: #{_lambda_.3} parent=35 // pred_fallthru
          _
        %p556 = scmp.eq.s32.totalorder %s34, 1
        // Predicated region
        $region69: #{_lambda_.3} parent=35 // pred_check
          %p557 = pneg %p556
        $region70: #{_lambda_.3} parent=35 // pred_check_branch
          %559 = sbr.rel (%p557) target = $region72
        $region71: #{_lambda_.3} parent=35 // pred_region
          %560 = vst [vmem:[%s548 + $0x1] sm:$0xff] 0.0
          %561 = vst [vmem:[%s548 + $0x9] sm:$0xff] 0.0
        $region72: #{_lambda_.3} parent=35 // pred_fallthru
          _
        %v562 = vld [vmem:[#allocation2] sm:$0xff]
        %v563 = vld [vmem:[#allocation2 + $0x8] sm:$0xff]
        %v564 = vld [vmem:[#allocation2 + $0x18] sm:$0xff]
        %v565 = vld [vmem:[#allocation2 + $0x20] sm:$0xff]
        %v566 = vld [vmem:[#allocation2 + $0x30] sm:$0xff]
        %v567 = vld [vmem:[#allocation2 + $0x38] sm:$0xff]
        %v568 = vld [vmem:[#allocation2 + $0x48] sm:$0xff]
        %v569 = vld [vmem:[#allocation2 + $0x50] sm:$0xff]
        %v570 = vld [vmem:[#allocation2 + $0x60] sm:$0xff]
        %v571 = vld [vmem:[#allocation2 + $0x68] sm:$0xff]
        %v572 = vld [vmem:[#allocation2 + $0x78] sm:$0xff]
        %v573 = vld [vmem:[#allocation2 + $0x80] sm:$0xff]
        %v574 = vld [vmem:[#allocation2 + $0x90] sm:$0xff]
        %v575 = vld [vmem:[#allocation2 + $0x98] sm:$0xff]
        %v576 = vld [vmem:[#allocation2 + $0xa8] sm:$0xff]
        %v577 = vld [vmem:[#allocation2 + $0xb0] sm:$0xff]
        %v578 = vld [vmem:[#allocation2 + $0xc0] sm:$0xff]
        %v579 = vld [vmem:[#allocation2 + $0xc8] sm:$0xff]
        %v580 = vld [vmem:[#allocation2 + $0xd8] sm:$0xff]
        %v581 = vld [vmem:[#allocation2 + $0xe0] sm:$0xff]
        %v582 = vpack.c.bf16 %v563, %v562
        %v583 = vpack.c.bf16 %v565, %v564
        %v584 = vpack.c.bf16 %v567, %v566
        %v585 = vpack.c.bf16 %v569, %v568
        %v586 = vpack.c.bf16 %v571, %v570
        %v587 = vpack.c.bf16 %v573, %v572
        %v588 = vpack.c.bf16 %v575, %v574
        %v589 = vpack.c.bf16 %v577, %v576
        %v590 = vpack.c.bf16 %v579, %v578
        %v591 = vpack.c.bf16 %v581, %v580
        %592 = vst [vmem:[#allocation3] sm:$0xff] %v582
        %593 = vst [vmem:[#allocation3 + $0x18] sm:$0xff] %v583
        %594 = vst [vmem:[#allocation3 + $0x30] sm:$0xff] %v584
        %595 = vst [vmem:[#allocation3 + $0x48] sm:$0xff] %v585
        %596 = vst [vmem:[#allocation3 + $0x60] sm:$0xff] %v586
        %597 = vst [vmem:[#allocation3 + $0x78] sm:$0xff] %v587
        %598 = vst [vmem:[#allocation3 + $0x90] sm:$0xff] %v588
        %599 = vst [vmem:[#allocation3 + $0xa8] sm:$0xff] %v589
        %600 = vst [vmem:[#allocation3 + $0xc0] sm:$0xff] %v590
        %601 = vst [vmem:[#allocation3 + $0xd8] sm:$0xff] %v591
        %v602 = vld [vmem:[#allocation2 + $0x1] sm:$0xff]
        %v603 = vld [vmem:[#allocation2 + $0x9] sm:$0xff]
        %v604 = vld [vmem:[#allocation2 + $0x19] sm:$0xff]
        %v605 = vld [vmem:[#allocation2 + $0x21] sm:$0xff]
        %v606 = vld [vmem:[#allocation2 + $0x31] sm:$0xff]
        %v607 = vld [vmem:[#allocation2 + $0x39] sm:$0xff]
        %v608 = vld [vmem:[#allocation2 + $0x49] sm:$0xff]
        %v609 = vld [vmem:[#allocation2 + $0x51] sm:$0xff]
        %v610 = vld [vmem:[#allocation2 + $0x61] sm:$0xff]
        %v611 = vld [vmem:[#allocation2 + $0x69] sm:$0xff]
        %v612 = vld [vmem:[#allocation2 + $0x79] sm:$0xff]
        %v613 = vld [vmem:[#allocation2 + $0x81] sm:$0xff]
        %v614 = vld [vmem:[#allocation2 + $0x91] sm:$0xff]
        %v615 = vld [vmem:[#allocation2 + $0x99] sm:$0xff]
        %v616 = vld [vmem:[#allocation2 + $0xa9] sm:$0xff]
        %v617 = vld [vmem:[#allocation2 + $0xb1] sm:$0xff]
        %v618 = vld [vmem:[#allocation2 + $0xc1] sm:$0xff]
        %v619 = vld [vmem:[#allocation2 + $0xc9] sm:$0xff]
        %v620 = vld [vmem:[#allocation2 + $0xd9] sm:$0xff]
        %v621 = vld [vmem:[#allocation2 + $0xe1] sm:$0xff]
        %v622 = vpack.c.bf16 %v603, %v602
        %v623 = vpack.c.bf16 %v605, %v604
        %v624 = vpack.c.bf16 %v607, %v606
        %v625 = vpack.c.bf16 %v609, %v608
        %v626 = vpack.c.bf16 %v611, %v610
        %v627 = vpack.c.bf16 %v613, %v612
        %v628 = vpack.c.bf16 %v615, %v614
        %v629 = vpack.c.bf16 %v617, %v616
        %v630 = vpack.c.bf16 %v619, %v618
        %v631 = vpack.c.bf16 %v621, %v620
        %632 = vst [vmem:[#allocation3 + $0x8] sm:$0xff] %v622
        %633 = vst [vmem:[#allocation3 + $0x20] sm:$0xff] %v623
        %634 = vst [vmem:[#allocation3 + $0x38] sm:$0xff] %v624
        %635 = vst [vmem:[#allocation3 + $0x50] sm:$0xff] %v625
        %636 = vst [vmem:[#allocation3 + $0x68] sm:$0xff] %v626
        %637 = vst [vmem:[#allocation3 + $0x80] sm:$0xff] %v627
        %638 = vst [vmem:[#allocation3 + $0x98] sm:$0xff] %v628
        %639 = vst [vmem:[#allocation3 + $0xb0] sm:$0xff] %v629
        %640 = vst [vmem:[#allocation3 + $0xc8] sm:$0xff] %v630
        %641 = vst [vmem:[#allocation3 + $0xe0] sm:$0xff] %v631
        %v642 = vld [vmem:[#allocation2 + $0x2] sm:$0xff]
        %v643 = vld [vmem:[#allocation2 + $0xa] sm:$0xff]
        %v644 = vld [vmem:[#allocation2 + $0x1a] sm:$0xff]
        %v645 = vld [vmem:[#allocation2 + $0x22] sm:$0xff]
        %v646 = vld [vmem:[#allocation2 + $0x32] sm:$0xff]
        %v647 = vld [vmem:[#allocation2 + $0x3a] sm:$0xff]
        %v648 = vld [vmem:[#allocation2 + $0x4a] sm:$0xff]
        %v649 = vld [vmem:[#allocation2 + $0x52] sm:$0xff]
        %v650 = vld [vmem:[#allocation2 + $0x62] sm:$0xff]
        %v651 = vld [vmem:[#allocation2 + $0x6a] sm:$0xff]
        %v652 = vld [vmem:[#allocation2 + $0x7a] sm:$0xff]
        %v653 = vld [vmem:[#allocation2 + $0x82] sm:$0xff]
        %v654 = vld [vmem:[#allocation2 + $0x92] sm:$0xff]
        %v655 = vld [vmem:[#allocation2 + $0x9a] sm:$0xff]
        %v656 = vld [vmem:[#allocation2 + $0xaa] sm:$0xff]
        %v657 = vld [vmem:[#allocation2 + $0xb2] sm:$0xff]
        %v658 = vld [vmem:[#allocation2 + $0xc2] sm:$0xff]
        %v659 = vld [vmem:[#allocation2 + $0xca] sm:$0xff]
        %v660 = vld [vmem:[#allocation2 + $0xda] sm:$0xff]
        %v661 = vld [vmem:[#allocation2 + $0xe2] sm:$0xff]
        %v662 = vpack.c.bf16 %v643, %v642
        %v663 = vpack.c.bf16 %v645, %v644
        %v664 = vpack.c.bf16 %v647, %v646
        %v665 = vpack.c.bf16 %v649, %v648
        %v666 = vpack.c.bf16 %v651, %v650
        %v667 = vpack.c.bf16 %v653, %v652
        %v668 = vpack.c.bf16 %v655, %v654
        %v669 = vpack.c.bf16 %v657, %v656
        %v670 = vpack.c.bf16 %v659, %v658
        %v671 = vpack.c.bf16 %v661, %v660
        %672 = vst [vmem:[#allocation3 + $0x10] sm:$0xff] %v662
        %673 = vst [vmem:[#allocation3 + $0x28] sm:$0xff] %v663
        %674 = vst [vmem:[#allocation3 + $0x40] sm:$0xff] %v664
        %675 = vst [vmem:[#allocation3 + $0x58] sm:$0xff] %v665
        %676 = vst [vmem:[#allocation3 + $0x70] sm:$0xff] %v666
        %677 = vst [vmem:[#allocation3 + $0x88] sm:$0xff] %v667
        %678 = vst [vmem:[#allocation3 + $0xa0] sm:$0xff] %v668
        %679 = vst [vmem:[#allocation3 + $0xb8] sm:$0xff] %v669
        %680 = vst [vmem:[#allocation3 + $0xd0] sm:$0xff] %v670
        %681 = vst [vmem:[#allocation3 + $0xe8] sm:$0xff] %v671
        %v682 = vld [vmem:[#allocation3] sm:$0xff]
        %v683 = vld [vmem:[#allocation3 + $0x8] sm:$0xff]
        %v684 = vld [vmem:[#allocation3 + $0x10] sm:$0xff]
        %v685 = vld [vmem:[#allocation3 + $0x18] sm:$0xff]
        %v686 = vld [vmem:[#allocation3 + $0x20] sm:$0xff]
        %v687 = vld [vmem:[#allocation3 + $0x28] sm:$0xff]
        %v688 = vld [vmem:[#allocation3 + $0x30] sm:$0xff]
        %v689 = vld [vmem:[#allocation3 + $0x38] sm:$0xff]
        %v690 = vld [vmem:[#allocation3 + $0x40] sm:$0xff]
        %v691 = vld [vmem:[#allocation3 + $0x48] sm:$0xff]
        %v692 = vld [vmem:[#allocation3 + $0x50] sm:$0xff]
        %v693 = vld [vmem:[#allocation3 + $0x58] sm:$0xff]
        %v694 = vld [vmem:[#allocation3 + $0x60] sm:$0xff]
        %v695 = vld [vmem:[#allocation3 + $0x68] sm:$0xff]
        %v696 = vld [vmem:[#allocation3 + $0x70] sm:$0xff]
        %v697 = vld [vmem:[#allocation3 + $0x78] sm:$0xff]
        %v698 = vld [vmem:[#allocation3 + $0x80] sm:$0xff]
        %v699 = vld [vmem:[#allocation3 + $0x88] sm:$0xff]
        %v700 = vld [vmem:[#allocation3 + $0x90] sm:$0xff]
        %v701 = vld [vmem:[#allocation3 + $0x98] sm:$0xff]
        %v702 = vld [vmem:[#allocation3 + $0xa0] sm:$0xff]
        %v703 = vld [vmem:[#allocation3 + $0xa8] sm:$0xff]
        %v704 = vld [vmem:[#allocation3 + $0xb0] sm:$0xff]
        %v705 = vld [vmem:[#allocation3 + $0xb8] sm:$0xff]
        %v706 = vld [vmem:[#allocation14] sm:$0xf]
        %v707 = vld [vmem:[#allocation14 + $0x4] sm:$0xf]
        %v708 = vld [vmem:[#allocation14 + $0x8] sm:$0xf]
        %v709 = vld [vmem:[#allocation14 + $0xc] sm:$0xf]
        %v710 = vld [vmem:[#allocation14 + $0x10] sm:$0xf]
        %v711 = vld [vmem:[#allocation14 + $0x14] sm:$0xf]
        %v712 = vld [vmem:[#allocation14 + $0x18] sm:$0xf]
        %v713 = vld [vmem:[#allocation14 + $0x1c] sm:$0xf]
        %v714 = vld [vmem:[#allocation14 + $0x20] sm:$0xf]
        %v715 = vld [vmem:[#allocation14 + $0x24] sm:$0xf]
        %v716 = vld [vmem:[#allocation14 + $0x28] sm:$0xf]
        %v717 = vld [vmem:[#allocation14 + $0x2c] sm:$0xf]
        %v718 = vld [vmem:[#allocation14 + $0x30] sm:$0xf]
        %v719 = vld [vmem:[#allocation14 + $0x34] sm:$0xf]
        %v720 = vld [vmem:[#allocation14 + $0x38] sm:$0xf]
        %v721 = vld [vmem:[#allocation14 + $0x3c] sm:$0xf]
        %v722 = vld [vmem:[#allocation14 + $0x40] sm:$0xf]
        %v723 = vld [vmem:[#allocation14 + $0x44] sm:$0xf]
        %v724 = vld [vmem:[#allocation14 + $0x48] sm:$0xf]
        %v725 = vld [vmem:[#allocation14 + $0x4c] sm:$0xf]
        %v726 = vld [vmem:[#allocation14 + $0x50] sm:$0xf]
        %v727 = vld [vmem:[#allocation14 + $0x54] sm:$0xf]
        %v728 = vld [vmem:[#allocation14 + $0x58] sm:$0xf]
        %v729 = vld [vmem:[#allocation14 + $0x5c] sm:$0xf]
        %v730 = vld [vmem:[#allocation14 + $0x60] sm:$0xf]
        %v731 = vld [vmem:[#allocation14 + $0x64] sm:$0xf]
        %v732 = vld [vmem:[#allocation14 + $0x68] sm:$0xf]
        %v733 = vld [vmem:[#allocation14 + $0x6c] sm:$0xf]
        %v734 = vld [vmem:[#allocation14 + $0x70] sm:$0xf]
        %v735 = vld [vmem:[#allocation14 + $0x74] sm:$0xf]
        %v736 = vld [vmem:[#allocation14 + $0x78] sm:$0xf]
        %v737 = vld [vmem:[#allocation14 + $0x7c] sm:$0xf]
        %v738 = vld [vmem:[#allocation14 + $0x80] sm:$0xf]
        %v739 = vld [vmem:[#allocation14 + $0x84] sm:$0xf]
        %v740 = vld [vmem:[#allocation14 + $0x88] sm:$0xf]
        %v741 = vld [vmem:[#allocation14 + $0x8c] sm:$0xf]
        %v742 = vld [vmem:[#allocation14 + $0x90] sm:$0xf]
        %v743 = vld [vmem:[#allocation14 + $0x94] sm:$0xf]
        %v744 = vld [vmem:[#allocation14 + $0x98] sm:$0xf]
        %v745 = vld [vmem:[#allocation14 + $0x9c] sm:$0xf]
        %v746 = vld [vmem:[#allocation14 + $0xa0] sm:$0xf]
        %v747 = vld [vmem:[#allocation14 + $0xa4] sm:$0xf]
        %v748 = vld [vmem:[#allocation14 + $0xa8] sm:$0xf]
        %v749 = vld [vmem:[#allocation14 + $0xac] sm:$0xf]
        %v750 = vld [vmem:[#allocation14 + $0xb0] sm:$0xf]
        %v751 = vld [vmem:[#allocation14 + $0xb4] sm:$0xf]
        %v752 = vld [vmem:[#allocation14 + $0xb8] sm:$0xf]
        %v753 = vld [vmem:[#allocation14 + $0xbc] sm:$0xf]
        %s754 = scalar_lea.vmem [#allocation3], 24
        %v755 = vld [vmem:[%s754] sm:$0xff]
        %v756 = vld [vmem:[%s754 + $0x8] sm:$0xff]
        %v757 = vld [vmem:[%s754 + $0x10] sm:$0xff]
        %v758 = vld [vmem:[%s754 + $0x18] sm:$0xff]
        %v759 = vld [vmem:[%s754 + $0x20] sm:$0xff]
        %v760 = vld [vmem:[%s754 + $0x28] sm:$0xff]
        %v761 = vld [vmem:[%s754 + $0x30] sm:$0xff]
        %v762 = vld [vmem:[%s754 + $0x38] sm:$0xff]
        %v763 = vld [vmem:[%s754 + $0x40] sm:$0xff]
        %v764 = vld [vmem:[%s754 + $0x48] sm:$0xff]
        %v765 = vld [vmem:[%s754 + $0x50] sm:$0xff]
        %v766 = vld [vmem:[%s754 + $0x58] sm:$0xff]
        %v767 = vld [vmem:[%s754 + $0x60] sm:$0xff]
        %v768 = vld [vmem:[%s754 + $0x68] sm:$0xff]
        %v769 = vld [vmem:[%s754 + $0x70] sm:$0xff]
        %v770 = vld [vmem:[%s754 + $0x78] sm:$0xff]
        %v771 = vld [vmem:[%s754 + $0x80] sm:$0xff]
        %v772 = vld [vmem:[%s754 + $0x88] sm:$0xff]
        %v773 = vld [vmem:[%s754 + $0x90] sm:$0xff]
        %v774 = vld [vmem:[%s754 + $0x98] sm:$0xff]
        %v775 = vld [vmem:[%s754 + $0xa0] sm:$0xff]
        %v776 = vld [vmem:[%s754 + $0xa8] sm:$0xff]
        %v777 = vld [vmem:[%s754 + $0xb0] sm:$0xff]
        %v778 = vld [vmem:[%s754 + $0xb8] sm:$0xff]
        %s779 = scalar_lea.vmem [#allocation14], 192
        %v780 = vld [vmem:[%s779] sm:$0xf]
        %v781 = vld [vmem:[%s779 + $0x4] sm:$0xf]
        %v782 = vld [vmem:[%s779 + $0x8] sm:$0xf]
        %v783 = vld [vmem:[%s779 + $0xc] sm:$0xf]
        %v784 = vld [vmem:[%s779 + $0x10] sm:$0xf]
        %v785 = vld [vmem:[%s779 + $0x14] sm:$0xf]
        %v786 = vld [vmem:[%s779 + $0x18] sm:$0xf]
        %v787 = vld [vmem:[%s779 + $0x1c] sm:$0xf]
        %v788 = vld [vmem:[%s779 + $0x20] sm:$0xf]
        %v789 = vld [vmem:[%s779 + $0x24] sm:$0xf]
        %v790 = vld [vmem:[%s779 + $0x28] sm:$0xf]
        %v791 = vld [vmem:[%s779 + $0x2c] sm:$0xf]
        %v792 = vld [vmem:[%s779 + $0x30] sm:$0xf]
        %v793 = vld [vmem:[%s779 + $0x34] sm:$0xf]
        %v794 = vld [vmem:[%s779 + $0x38] sm:$0xf]
        %v795 = vld [vmem:[%s779 + $0x3c] sm:$0xf]
        %v796 = vld [vmem:[%s779 + $0x40] sm:$0xf]
        %v797 = vld [vmem:[%s779 + $0x44] sm:$0xf]
        %v798 = vld [vmem:[%s779 + $0x48] sm:$0xf]
        %v799 = vld [vmem:[%s779 + $0x4c] sm:$0xf]
        %v800 = vld [vmem:[%s779 + $0x50] sm:$0xf]
        %v801 = vld [vmem:[%s779 + $0x54] sm:$0xf]
        %v802 = vld [vmem:[%s779 + $0x58] sm:$0xf]
        %v803 = vld [vmem:[%s779 + $0x5c] sm:$0xf]
        %v804 = vld [vmem:[%s779 + $0x60] sm:$0xf]
        %v805 = vld [vmem:[%s779 + $0x64] sm:$0xf]
        %v806 = vld [vmem:[%s779 + $0x68] sm:$0xf]
        %v807 = vld [vmem:[%s779 + $0x6c] sm:$0xf]
        %v808 = vld [vmem:[%s779 + $0x70] sm:$0xf]
        %v809 = vld [vmem:[%s779 + $0x74] sm:$0xf]
        %v810 = vld [vmem:[%s779 + $0x78] sm:$0xf]
        %v811 = vld [vmem:[%s779 + $0x7c] sm:$0xf]
        %v812 = vld [vmem:[%s779 + $0x80] sm:$0xf]
        %v813 = vld [vmem:[%s779 + $0x84] sm:$0xf]
        %v814 = vld [vmem:[%s779 + $0x88] sm:$0xf]
        %v815 = vld [vmem:[%s779 + $0x8c] sm:$0xf]
        %v816 = vld [vmem:[%s779 + $0x90] sm:$0xf]
        %v817 = vld [vmem:[%s779 + $0x94] sm:$0xf]
        %v818 = vld [vmem:[%s779 + $0x98] sm:$0xf]
        %v819 = vld [vmem:[%s779 + $0x9c] sm:$0xf]
        %v820 = vld [vmem:[%s779 + $0xa0] sm:$0xf]
        %v821 = vld [vmem:[%s779 + $0xa4] sm:$0xf]
        %v822 = vld [vmem:[%s779 + $0xa8] sm:$0xf]
        %v823 = vld [vmem:[%s779 + $0xac] sm:$0xf]
        %v824 = vld [vmem:[%s779 + $0xb0] sm:$0xf]
        %v825 = vld [vmem:[%s779 + $0xb4] sm:$0xf]
        %v826 = vld [vmem:[%s779 + $0xb8] sm:$0xf]
        %v827 = vld [vmem:[%s779 + $0xbc] sm:$0xf]
        %v876 = vunpack.c.l.b16 %v780
        %v877 = vunpack.c.l.b16 %v781
        %v878 = vunpack.c.l.b16 %v782
        %v879 = vunpack.c.l.b16 %v783
        %v880 = vunpack.c.l.b16 %v784
        %v881 = vunpack.c.l.b16 %v785
        %v882 = vunpack.c.l.b16 %v786
        %v883 = vunpack.c.l.b16 %v787
        %v884 = vunpack.c.l.b16 %v788
        %v885 = vunpack.c.l.b16 %v789
        %v886 = vunpack.c.l.b16 %v790
        %v887 = vunpack.c.l.b16 %v791
        %v888 = vunpack.c.l.b16 %v792
        %v889 = vunpack.c.l.b16 %v793
        %v890 = vunpack.c.l.b16 %v794
        %v891 = vunpack.c.l.b16 %v795
        %v892 = vunpack.c.l.b16 %v796
        %v893 = vunpack.c.l.b16 %v797
        %v894 = vunpack.c.l.b16 %v798
        %v895 = vunpack.c.l.b16 %v799
        %v896 = vunpack.c.l.b16 %v800
        %v897 = vunpack.c.l.b16 %v801
        %v898 = vunpack.c.l.b16 %v802
        %v899 = vunpack.c.l.b16 %v803
        %v900 = vunpack.c.l.b16 %v804
        %v901 = vunpack.c.l.b16 %v805
        %v902 = vunpack.c.l.b16 %v806
        %v903 = vunpack.c.l.b16 %v807
        %v904 = vunpack.c.l.b16 %v808
        %v905 = vunpack.c.l.b16 %v809
        %v906 = vunpack.c.l.b16 %v810
        %v907 = vunpack.c.l.b16 %v811
        %v908 = vunpack.c.l.b16 %v812
        %v909 = vunpack.c.l.b16 %v813
        %v910 = vunpack.c.l.b16 %v814
        %v911 = vunpack.c.l.b16 %v815
        %v912 = vunpack.c.l.b16 %v816
        %v913 = vunpack.c.l.b16 %v817
        %v914 = vunpack.c.l.b16 %v818
        %v915 = vunpack.c.l.b16 %v819
        %v916 = vunpack.c.l.b16 %v820
        %v917 = vunpack.c.l.b16 %v821
        %v918 = vunpack.c.l.b16 %v822
        %v919 = vunpack.c.l.b16 %v823
        %v920 = vunpack.c.l.b16 %v824
        %v921 = vunpack.c.l.b16 %v825
        %v922 = vunpack.c.l.b16 %v826
        %v923 = vunpack.c.l.b16 %v827
        %v924 = vpack.c.b16 %v877, %v876
        %v925 = vpack.c.b16 %v879, %v878
        %v926 = vpack.c.b16 %v881, %v880
        %v927 = vpack.c.b16 %v883, %v882
        %v928 = vpack.c.b16 %v885, %v884
        %v929 = vpack.c.b16 %v887, %v886
        %v930 = vpack.c.b16 %v889, %v888
        %v931 = vpack.c.b16 %v891, %v890
        %v932 = vpack.c.b16 %v893, %v892
        %v933 = vpack.c.b16 %v895, %v894
        %v934 = vpack.c.b16 %v897, %v896
        %v935 = vpack.c.b16 %v899, %v898
        %v936 = vpack.c.b16 %v901, %v900
        %v937 = vpack.c.b16 %v903, %v902
        %v938 = vpack.c.b16 %v905, %v904
        %v939 = vpack.c.b16 %v907, %v906
        %v940 = vpack.c.b16 %v909, %v908
        %v941 = vpack.c.b16 %v911, %v910
        %v942 = vpack.c.b16 %v913, %v912
        %v943 = vpack.c.b16 %v915, %v914
        %v944 = vpack.c.b16 %v917, %v916
        %v945 = vpack.c.b16 %v919, %v918
        %v946 = vpack.c.b16 %v921, %v920
        %v947 = vpack.c.b16 %v923, %v922
        %972 = vmatprep.subr.bf16.mxu0 0
        %973 = vmatpush1.bf16.msra.mxu0 %v924
        %974 = vmatprep.subr.bf16.mxu0 0
        %975 = vmatpush1.bf16.msra.mxu0 %v925
        %976 = vmatprep.subr.bf16.mxu0 0
        %977 = vmatpush1.bf16.msra.mxu0 %v926
        %978 = vmatprep.subr.bf16.mxu0 0
        %979 = vmatpush1.bf16.msra.mxu0 %v927
        %980 = vmatprep.subr.bf16.mxu0 0
        %981 = vmatpush1.bf16.msra.mxu0 %v928
        %982 = vmatprep.subr.bf16.mxu0 0
        %983 = vmatpush1.bf16.msra.mxu0 %v929
        %984 = vmatprep.subr.bf16.mxu0 0
        %985 = vmatpush1.bf16.msra.mxu0 %v930
        %986 = vmatprep.subr.bf16.mxu0 0
        %987 = vmatpush1.bf16.msra.mxu0 %v931
        %988 = vmatprep.subr.bf16.mxu0 0
        %989 = vmatpush1.bf16.msra.mxu0 %v932
        %990 = vmatprep.subr.bf16.mxu0 0
        %991 = vmatpush1.bf16.msra.mxu0 %v933
        %992 = vmatprep.subr.bf16.mxu0 0
        %993 = vmatpush1.bf16.msra.mxu0 %v934
        %994 = vmatprep.subr.bf16.mxu0 0
        %995 = vmatpush1.bf16.msra.mxu0 %v935
        %996 = vmatprep.subr.bf16.mxu0 0
        %997 = vmatpush1.bf16.msra.mxu0 %v936
        %998 = vmatprep.subr.bf16.mxu0 0
        %999 = vmatpush1.bf16.msra.mxu0 %v937
        %1000 = vmatprep.subr.bf16.mxu0 0
        %1001 = vmatpush1.bf16.msra.mxu0 %v938
        %1002 = vmatprep.subr.bf16.mxu0 0
        %1003 = vmatpush1.bf16.msra.mxu0 %v939
        %1004 = vmatprep.mubr.bf16.mxu0 %v756
        %1005 = vmatmul.mubr.bf16.gmra.mrb[0].mxu0 %v755
        %v1006 = vpop.f32.mrb[0].mxu0
        %v1007 = vadd.f32 0.0, %v1006
        %v1008 = vpop.f32.mrb[0].mxu0
        %v1009 = vpop.f32.mrb[0].mxu0
        %v1010 = vadd.f32 0.0, %v1009
        %v1011 = vpop.f32.mrb[0].mxu0
        %1012 = vmatprep.mubr.bf16.mxu0 %v759
        %1013 = vmatmul.mubr.bf16.gmra.mrb[0].mxu0 %v758
        %v1014 = vpop.f32.mrb[0].mxu0
        %v1015 = vadd.f32 0.0, %v1014
        %v1016 = vpop.f32.mrb[0].mxu0
        %v1017 = vpop.f32.mrb[0].mxu0
        %v1018 = vadd.f32 0.0, %v1017
        %v1019 = vpop.f32.mrb[0].mxu0
        %1020 = vmatprep.mubr.bf16.mxu0 %v762
        %1021 = vmatmul.mubr.bf16.gmra.mrb[0].mxu0 %v761
        %v1022 = vpop.f32.mrb[0].mxu0
        %v1023 = vadd.f32 0.0, %v1022
        %v1024 = vpop.f32.mrb[0].mxu0
        %v1025 = vpop.f32.mrb[0].mxu0
        %v1026 = vadd.f32 0.0, %v1025
        %v1027 = vpop.f32.mrb[0].mxu0
        %1028 = vmatprep.mubr.bf16.mxu0 %v765
        %1029 = vmatmul.mubr.bf16.gmra.mrb[0].mxu0 %v764
        %v1030 = vpop.f32.mrb[0].mxu0
        %v1031 = vadd.f32 0.0, %v1030
        %v1032 = vpop.f32.mrb[0].mxu0
        %v1033 = vpop.f32.mrb[0].mxu0
        %v1034 = vadd.f32 0.0, %v1033
        %v1035 = vpop.f32.mrb[0].mxu0
        %1036 = vmatprep.mubr.bf16.mxu0 %v768
        %1037 = vmatmul.mubr.bf16.gmra.mrb[0].mxu0 %v767
        %v1038 = vpop.f32.mrb[0].mxu0
        %v1039 = vadd.f32 0.0, %v1038
        %v1040 = vpop.f32.mrb[0].mxu0
        %v1041 = vpop.f32.mrb[0].mxu0
        %v1042 = vadd.f32 0.0, %v1041
        %v1043 = vpop.f32.mrb[0].mxu0
        %1044 = vmatprep.mubr.bf16.mxu0 %v771
        %1045 = vmatmul.mubr.bf16.gmra.mrb[0].mxu0 %v770
        %v1046 = vpop.f32.mrb[0].mxu0
        %v1047 = vadd.f32 0.0, %v1046
        %v1048 = vpop.f32.mrb[0].mxu0
        %v1049 = vpop.f32.mrb[0].mxu0
        %v1050 = vadd.f32 0.0, %v1049
        %v1051 = vpop.f32.mrb[0].mxu0
        %1052 = vmatprep.mubr.bf16.mxu0 %v774
        %1053 = vmatmul.mubr.bf16.gmra.mrb[0].mxu0 %v773
        %v1054 = vpop.f32.mrb[0].mxu0
        %v1055 = vadd.f32 0.0, %v1054
        %v1056 = vpop.f32.mrb[0].mxu0
        %v1057 = vpop.f32.mrb[0].mxu0
        %v1058 = vadd.f32 0.0, %v1057
        %v1059 = vpop.f32.mrb[0].mxu0
        %1060 = vmatprep.mubr.bf16.mxu0 %v777
        %1061 = vmatmul.mubr.bf16.gmra.mrb[0].mxu0 %v776
        %v1062 = vpop.f32.mrb[0].mxu0
        %v1063 = vadd.f32 0.0, %v1062
        %v1064 = vpop.f32.mrb[0].mxu0
        %v1065 = vpop.f32.mrb[0].mxu0
        %v1066 = vadd.f32 0.0, %v1065
        %v1067 = vpop.f32.mrb[0].mxu0
        %1068 = vdwg.mxu0
        %1069 = vmatprep.subr.bf16.mxu0 0
        %1070 = vmatpush1.bf16.msra.mxu0 %v940
        %1071 = vmatprep.subr.bf16.mxu0 0
        %1072 = vmatpush1.bf16.msra.mxu0 %v941
        %1073 = vmatprep.subr.bf16.mxu0 0
        %1074 = vmatpush1.bf16.msra.mxu0 %v942
        %1075 = vmatprep.subr.bf16.mxu0 0
        %1076 = vmatpush1.bf16.msra.mxu0 %v943
        %1077 = vmatprep.subr.bf16.mxu0 0
        %1078 = vmatpush1.bf16.msra.mxu0 %v944
        %1079 = vmatprep.subr.bf16.mxu0 0
        %1080 = vmatpush1.bf16.msra.mxu0 %v945
        %1081 = vmatprep.subr.bf16.mxu0 0
        %1082 = vmatpush1.bf16.msra.mxu0 %v946
        %1083 = vmatprep.subr.bf16.mxu0 0
        %1084 = vmatpush1.bf16.msra.mxu0 %v947
        %1085 = vmatprep.subr.bf16.mxu0 0
        %1086 = vmatpush1.bf16.msra.mxu0 0
        %1087 = vmatprep.subr.bf16.mxu0 0
        %1088 = vmatpush1.bf16.msra.mxu0 0
        %1089 = vmatprep.subr.bf16.mxu0 0
        %1090 = vmatpush1.bf16.msra.mxu0 0
        %1091 = vmatprep.subr.bf16.mxu0 0
        %1092 = vmatpush1.bf16.msra.mxu0 0
        %1093 = vmatprep.subr.bf16.mxu0 0
        %1094 = vmatpush1.bf16.msra.mxu0 0
        %1095 = vmatprep.subr.bf16.mxu0 0
        %1096 = vmatpush1.bf16.msra.mxu0 0
        %1097 = vmatprep.subr.bf16.mxu0 0
        %1098 = vmatpush1.bf16.msra.mxu0 0
        %1099 = vmatprep.subr.bf16.mxu0 0
        %1100 = vmatpush1.bf16.msra.mxu0 0
        %1101 = vmatprep.mubr.bf16.mxu0 0
        %1102 = vmatmul.mubr.bf16.gmra.mrb[0].mxu0 %v757
        %v1103 = vpop.f32.mrb[0].mxu0
        %v1104 = vadd.f32 %v1007, %v1103
        %v1105 = vpop.f32.mrb[0].mxu0
        %v1106 = vpop.f32.mrb[0].mxu0
        %v1107 = vadd.f32 %v1010, %v1106
        %v1108 = vpop.f32.mrb[0].mxu0
        %1109 = vmatprep.mubr.bf16.mxu0 0
        %1110 = vmatmul.mubr.bf16.gmra.mrb[0].mxu0 %v760
        %v1111 = vpop.f32.mrb[0].mxu0
        %v1112 = vadd.f32 %v1015, %v1111
        %v1113 = vpop.f32.mrb[0].mxu0
        %v1114 = vpop.f32.mrb[0].mxu0
        %v1115 = vadd.f32 %v1018, %v1114
        %v1116 = vpop.f32.mrb[0].mxu0
        %1117 = vmatprep.mubr.bf16.mxu0 0
        %1118 = vmatmul.mubr.bf16.gmra.mrb[0].mxu0 %v763
        %v1119 = vpop.f32.mrb[0].mxu0
        %v1120 = vadd.f32 %v1023, %v1119
        %v1121 = vpop.f32.mrb[0].mxu0
        %v1122 = vpop.f32.mrb[0].mxu0
        %v1123 = vadd.f32 %v1026, %v1122
        %v1124 = vpop.f32.mrb[0].mxu0
        %1125 = vmatprep.mubr.bf16.mxu0 0
        %1126 = vmatmul.mubr.bf16.gmra.mrb[0].mxu0 %v766
        %v1127 = vpop.f32.mrb[0].mxu0
        %v1128 = vadd.f32 %v1031, %v1127
        %v1129 = vpop.f32.mrb[0].mxu0
        %v1130 = vpop.f32.mrb[0].mxu0
        %v1131 = vadd.f32 %v1034, %v1130
        %v1132 = vpop.f32.mrb[0].mxu0
        %1133 = vmatprep.mubr.bf16.mxu0 0
        %1134 = vmatmul.mubr.bf16.gmra.mrb[0].mxu0 %v769
        %v1135 = vpop.f32.mrb[0].mxu0
        %v1136 = vadd.f32 %v1039, %v1135
        %v1137 = vpop.f32.mrb[0].mxu0
        %v1138 = vpop.f32.mrb[0].mxu0
        %v1139 = vadd.f32 %v1042, %v1138
        %v1140 = vpop.f32.mrb[0].mxu0
        %1141 = vmatprep.mubr.bf16.mxu0 0
        %1142 = vmatmul.mubr.bf16.gmra.mrb[0].mxu0 %v772
        %v1143 = vpop.f32.mrb[0].mxu0
        %v1144 = vadd.f32 %v1047, %v1143
        %v1145 = vpop.f32.mrb[0].mxu0
        %v1146 = vpop.f32.mrb[0].mxu0
        %v1147 = vadd.f32 %v1050, %v1146
        %v1148 = vpop.f32.mrb[0].mxu0
        %1149 = vmatprep.mubr.bf16.mxu0 0
        %1150 = vmatmul.mubr.bf16.gmra.mrb[0].mxu0 %v775
        %v1151 = vpop.f32.mrb[0].mxu0
        %v1152 = vadd.f32 %v1055, %v1151
        %v1153 = vpop.f32.mrb[0].mxu0
        %v1154 = vpop.f32.mrb[0].mxu0
        %v1155 = vadd.f32 %v1058, %v1154
        %v1156 = vpop.f32.mrb[0].mxu0
        %1157 = vmatprep.mubr.bf16.mxu0 0
        %1158 = vmatmul.mubr.bf16.gmra.mrb[0].mxu0 %v778
        %v1159 = vpop.f32.mrb[0].mxu0
        %v1160 = vadd.f32 %v1063, %v1159
        %v1161 = vpop.f32.mrb[0].mxu0
        %v1162 = vpop.f32.mrb[0].mxu0
        %v1163 = vadd.f32 %v1066, %v1162
        %v1164 = vpop.f32.mrb[0].mxu0
        %1165 = vdwg.mxu0
        %v1214 = vunpack.c.l.b16 %v706
        %v1215 = vunpack.c.l.b16 %v707
        %v1216 = vunpack.c.l.b16 %v708
        %v1217 = vunpack.c.l.b16 %v709
        %v1218 = vunpack.c.l.b16 %v710
        %v1219 = vunpack.c.l.b16 %v711
        %v1220 = vunpack.c.l.b16 %v712
        %v1221 = vunpack.c.l.b16 %v713
        %v1222 = vunpack.c.l.b16 %v714
        %v1223 = vunpack.c.l.b16 %v715
        %v1224 = vunpack.c.l.b16 %v716
        %v1225 = vunpack.c.l.b16 %v717
        %v1226 = vunpack.c.l.b16 %v718
        %v1227 = vunpack.c.l.b16 %v719
        %v1228 = vunpack.c.l.b16 %v720
        %v1229 = vunpack.c.l.b16 %v721
        %v1230 = vunpack.c.l.b16 %v722
        %v1231 = vunpack.c.l.b16 %v723
        %v1232 = vunpack.c.l.b16 %v724
        %v1233 = vunpack.c.l.b16 %v725
        %v1234 = vunpack.c.l.b16 %v726
        %v1235 = vunpack.c.l.b16 %v727
        %v1236 = vunpack.c.l.b16 %v728
        %v1237 = vunpack.c.l.b16 %v729
        %v1238 = vunpack.c.l.b16 %v730
        %v1239 = vunpack.c.l.b16 %v731
        %v1240 = vunpack.c.l.b16 %v732
        %v1241 = vunpack.c.l.b16 %v733
        %v1242 = vunpack.c.l.b16 %v734
        %v1243 = vunpack.c.l.b16 %v735
        %v1244 = vunpack.c.l.b16 %v736
        %v1245 = vunpack.c.l.b16 %v737
        %v1246 = vunpack.c.l.b16 %v738
        %v1247 = vunpack.c.l.b16 %v739
        %v1248 = vunpack.c.l.b16 %v740
        %v1249 = vunpack.c.l.b16 %v741
        %v1250 = vunpack.c.l.b16 %v742
        %v1251 = vunpack.c.l.b16 %v743
        %v1252 = vunpack.c.l.b16 %v744
        %v1253 = vunpack.c.l.b16 %v745
        %v1254 = vunpack.c.l.b16 %v746
        %v1255 = vunpack.c.l.b16 %v747
        %v1256 = vunpack.c.l.b16 %v748
        %v1257 = vunpack.c.l.b16 %v749
        %v1258 = vunpack.c.l.b16 %v750
        %v1259 = vunpack.c.l.b16 %v751
        %v1260 = vunpack.c.l.b16 %v752
        %v1261 = vunpack.c.l.b16 %v753
        %v1262 = vpack.c.b16 %v1215, %v1214
        %v1263 = vpack.c.b16 %v1217, %v1216
        %v1264 = vpack.c.b16 %v1219, %v1218
        %v1265 = vpack.c.b16 %v1221, %v1220
        %v1266 = vpack.c.b16 %v1223, %v1222
        %v1267 = vpack.c.b16 %v1225, %v1224
        %v1268 = vpack.c.b16 %v1227, %v1226
        %v1269 = vpack.c.b16 %v1229, %v1228
        %v1270 = vpack.c.b16 %v1231, %v1230
        %v1271 = vpack.c.b16 %v1233, %v1232
        %v1272 = vpack.c.b16 %v1235, %v1234
        %v1273 = vpack.c.b16 %v1237, %v1236
        %v1274 = vpack.c.b16 %v1239, %v1238
        %v1275 = vpack.c.b16 %v1241, %v1240
        %v1276 = vpack.c.b16 %v1243, %v1242
        %v1277 = vpack.c.b16 %v1245, %v1244
        %v1278 = vpack.c.b16 %v1247, %v1246
        %v1279 = vpack.c.b16 %v1249, %v1248
        %v1280 = vpack.c.b16 %v1251, %v1250
        %v1281 = vpack.c.b16 %v1253, %v1252
        %v1282 = vpack.c.b16 %v1255, %v1254
        %v1283 = vpack.c.b16 %v1257, %v1256
        %v1284 = vpack.c.b16 %v1259, %v1258
        %v1285 = vpack.c.b16 %v1261, %v1260
        %1310 = vmatprep.subr.bf16.mxu0 0
        %1311 = vmatpush1.bf16.msra.mxu0 %v1262
        %1312 = vmatprep.subr.bf16.mxu0 0
        %1313 = vmatpush1.bf16.msra.mxu0 %v1263
        %1314 = vmatprep.subr.bf16.mxu0 0
        %1315 = vmatpush1.bf16.msra.mxu0 %v1264
        %1316 = vmatprep.subr.bf16.mxu0 0
        %1317 = vmatpush1.bf16.msra.mxu0 %v1265
        %1318 = vmatprep.subr.bf16.mxu0 0
        %1319 = vmatpush1.bf16.msra.mxu0 %v1266
        %1320 = vmatprep.subr.bf16.mxu0 0
        %1321 = vmatpush1.bf16.msra.mxu0 %v1267
        %1322 = vmatprep.subr.bf16.mxu0 0
        %1323 = vmatpush1.bf16.msra.mxu0 %v1268
        %1324 = vmatprep.subr.bf16.mxu0 0
        %1325 = vmatpush1.bf16.msra.mxu0 %v1269
        %1326 = vmatprep.subr.bf16.mxu0 0
        %1327 = vmatpush1.bf16.msra.mxu0 %v1270
        %1328 = vmatprep.subr.bf16.mxu0 0
        %1329 = vmatpush1.bf16.msra.mxu0 %v1271
        %1330 = vmatprep.subr.bf16.mxu0 0
        %1331 = vmatpush1.bf16.msra.mxu0 %v1272
        %1332 = vmatprep.subr.bf16.mxu0 0
        %1333 = vmatpush1.bf16.msra.mxu0 %v1273
        %1334 = vmatprep.subr.bf16.mxu0 0
        %1335 = vmatpush1.bf16.msra.mxu0 %v1274
        %1336 = vmatprep.subr.bf16.mxu0 0
        %1337 = vmatpush1.bf16.msra.mxu0 %v1275
        %1338 = vmatprep.subr.bf16.mxu0 0
        %1339 = vmatpush1.bf16.msra.mxu0 %v1276
        %1340 = vmatprep.subr.bf16.mxu0 0
        %1341 = vmatpush1.bf16.msra.mxu0 %v1277
        %1342 = vmatprep.mubr.bf16.mxu0 %v683
        %1343 = vmatmul.mubr.bf16.gmra.mrb[0].mxu0 %v682
        %v1344 = vpop.f32.mrb[0].mxu0
        %v1345 = vadd.f32 %v1104, %v1344
        %v1346 = vpop.f32.mrb[0].mxu0
        %v1347 = vpop.f32.mrb[0].mxu0
        %v1348 = vadd.f32 %v1107, %v1347
        %v1349 = vpop.f32.mrb[0].mxu0
        %1350 = vmatprep.mubr.bf16.mxu0 %v686
        %1351 = vmatmul.mubr.bf16.gmra.mrb[0].mxu0 %v685
        %v1352 = vpop.f32.mrb[0].mxu0
        %v1353 = vadd.f32 %v1112, %v1352
        %v1354 = vpop.f32.mrb[0].mxu0
        %v1355 = vpop.f32.mrb[0].mxu0
        %v1356 = vadd.f32 %v1115, %v1355
        %v1357 = vpop.f32.mrb[0].mxu0
        %1358 = vmatprep.mubr.bf16.mxu0 %v689
        %1359 = vmatmul.mubr.bf16.gmra.mrb[0].mxu0 %v688
        %v1360 = vpop.f32.mrb[0].mxu0
        %v1361 = vadd.f32 %v1120, %v1360
        %v1362 = vpop.f32.mrb[0].mxu0
        %v1363 = vpop.f32.mrb[0].mxu0
        %v1364 = vadd.f32 %v1123, %v1363
        %v1365 = vpop.f32.mrb[0].mxu0
        %1366 = vmatprep.mubr.bf16.mxu0 %v692
        %1367 = vmatmul.mubr.bf16.gmra.mrb[0].mxu0 %v691
        %v1368 = vpop.f32.mrb[0].mxu0
        %v1369 = vadd.f32 %v1128, %v1368
        %v1370 = vpop.f32.mrb[0].mxu0
        %v1371 = vpop.f32.mrb[0].mxu0
        %v1372 = vadd.f32 %v1131, %v1371
        %v1373 = vpop.f32.mrb[0].mxu0
        %1374 = vmatprep.mubr.bf16.mxu0 %v695
        %1375 = vmatmul.mubr.bf16.gmra.mrb[0].mxu0 %v694
        %v1376 = vpop.f32.mrb[0].mxu0
        %v1377 = vadd.f32 %v1136, %v1376
        %v1378 = vpop.f32.mrb[0].mxu0
        %v1379 = vpop.f32.mrb[0].mxu0
        %v1380 = vadd.f32 %v1139, %v1379
        %v1381 = vpop.f32.mrb[0].mxu0
        %1382 = vmatprep.mubr.bf16.mxu0 %v698
        %1383 = vmatmul.mubr.bf16.gmra.mrb[0].mxu0 %v697
        %v1384 = vpop.f32.mrb[0].mxu0
        %v1385 = vadd.f32 %v1144, %v1384
        %v1386 = vpop.f32.mrb[0].mxu0
        %v1387 = vpop.f32.mrb[0].mxu0
        %v1388 = vadd.f32 %v1147, %v1387
        %v1389 = vpop.f32.mrb[0].mxu0
        %1390 = vmatprep.mubr.bf16.mxu0 %v701
        %1391 = vmatmul.mubr.bf16.gmra.mrb[0].mxu0 %v700
        %v1392 = vpop.f32.mrb[0].mxu0
        %v1393 = vadd.f32 %v1152, %v1392
        %v1394 = vpop.f32.mrb[0].mxu0
        %v1395 = vpop.f32.mrb[0].mxu0
        %v1396 = vadd.f32 %v1155, %v1395
        %v1397 = vpop.f32.mrb[0].mxu0
        %1398 = vmatprep.mubr.bf16.mxu0 %v704
        %1399 = vmatmul.mubr.bf16.gmra.mrb[0].mxu0 %v703
        %v1400 = vpop.f32.mrb[0].mxu0
        %v1401 = vadd.f32 %v1160, %v1400
        %v1402 = vpop.f32.mrb[0].mxu0
        %v1403 = vpop.f32.mrb[0].mxu0
        %v1404 = vadd.f32 %v1163, %v1403
        %v1405 = vpop.f32.mrb[0].mxu0
        %1406 = vdwg.mxu0
        %1407 = vmatprep.subr.bf16.mxu0 0
        %1408 = vmatpush1.bf16.msra.mxu0 %v1278
        %1409 = vmatprep.subr.bf16.mxu0 0
        %1410 = vmatpush1.bf16.msra.mxu0 %v1279
        %1411 = vmatprep.subr.bf16.mxu0 0
        %1412 = vmatpush1.bf16.msra.mxu0 %v1280
        %1413 = vmatprep.subr.bf16.mxu0 0
        %1414 = vmatpush1.bf16.msra.mxu0 %v1281
        %1415 = vmatprep.subr.bf16.mxu0 0
        %1416 = vmatpush1.bf16.msra.mxu0 %v1282
        %1417 = vmatprep.subr.bf16.mxu0 0
        %1418 = vmatpush1.bf16.msra.mxu0 %v1283
        %1419 = vmatprep.subr.bf16.mxu0 0
        %1420 = vmatpush1.bf16.msra.mxu0 %v1284
        %1421 = vmatprep.subr.bf16.mxu0 0
        %1422 = vmatpush1.bf16.msra.mxu0 %v1285
        %1423 = vmatprep.subr.bf16.mxu0 0
        %1424 = vmatpush1.bf16.msra.mxu0 0
        %1425 = vmatprep.subr.bf16.mxu0 0
        %1426 = vmatpush1.bf16.msra.mxu0 0
        %1427 = vmatprep.subr.bf16.mxu0 0
        %1428 = vmatpush1.bf16.msra.mxu0 0
        %1429 = vmatprep.subr.bf16.mxu0 0
        %1430 = vmatpush1.bf16.msra.mxu0 0
        %1431 = vmatprep.subr.bf16.mxu0 0
        %1432 = vmatpush1.bf16.msra.mxu0 0
        %1433 = vmatprep.subr.bf16.mxu0 0
        %1434 = vmatpush1.bf16.msra.mxu0 0
        %1435 = vmatprep.subr.bf16.mxu0 0
        %1436 = vmatpush1.bf16.msra.mxu0 0
        %1437 = vmatprep.subr.bf16.mxu0 0
        %1438 = vmatpush1.bf16.msra.mxu0 0
        %1439 = vmatprep.mubr.bf16.mxu0 0
        %1440 = vmatmul.mubr.bf16.gmra.mrb[0].mxu0 %v684
        %v1441 = vpop.f32.mrb[0].mxu0
        %v1442 = vadd.f32 %v1345, %v1441
        %v1443 = vpop.f32.mrb[0].mxu0
        %v1444 = vpop.f32.mrb[0].mxu0
        %v1445 = vadd.f32 %v1348, %v1444
        %v1446 = vpop.f32.mrb[0].mxu0
        %1447 = vmatprep.mubr.bf16.mxu0 0
        %1448 = vmatmul.mubr.bf16.gmra.mrb[0].mxu0 %v687
        %v1449 = vpop.f32.mrb[0].mxu0
        %v1450 = vadd.f32 %v1353, %v1449
        %v1451 = vpop.f32.mrb[0].mxu0
        %v1452 = vpop.f32.mrb[0].mxu0
        %v1453 = vadd.f32 %v1356, %v1452
        %v1454 = vpop.f32.mrb[0].mxu0
        %1455 = vmatprep.mubr.bf16.mxu0 0
        %1456 = vmatmul.mubr.bf16.gmra.mrb[0].mxu0 %v690
        %v1457 = vpop.f32.mrb[0].mxu0
        %v1458 = vadd.f32 %v1361, %v1457
        %v1459 = vpop.f32.mrb[0].mxu0
        %v1460 = vpop.f32.mrb[0].mxu0
        %v1461 = vadd.f32 %v1364, %v1460
        %v1462 = vpop.f32.mrb[0].mxu0
        %1463 = vmatprep.mubr.bf16.mxu0 0
        %1464 = vmatmul.mubr.bf16.gmra.mrb[0].mxu0 %v693
        %v1465 = vpop.f32.mrb[0].mxu0
        %v1466 = vadd.f32 %v1369, %v1465
        %v1467 = vpop.f32.mrb[0].mxu0
        %v1468 = vpop.f32.mrb[0].mxu0
        %v1469 = vadd.f32 %v1372, %v1468
        %v1470 = vpop.f32.mrb[0].mxu0
        %1471 = vmatprep.mubr.bf16.mxu0 0
        %1472 = vmatmul.mubr.bf16.gmra.mrb[0].mxu0 %v696
        %v1473 = vpop.f32.mrb[0].mxu0
        %v1474 = vadd.f32 %v1377, %v1473
        %v1475 = vpop.f32.mrb[0].mxu0
        %v1476 = vpop.f32.mrb[0].mxu0
        %v1477 = vadd.f32 %v1380, %v1476
        %v1478 = vpop.f32.mrb[0].mxu0
        %1479 = vmatprep.mubr.bf16.mxu0 0
        %1480 = vmatmul.mubr.bf16.gmra.mrb[0].mxu0 %v699
        %v1481 = vpop.f32.mrb[0].mxu0
        %v1482 = vadd.f32 %v1385, %v1481
        %v1483 = vpop.f32.mrb[0].mxu0
        %v1484 = vpop.f32.mrb[0].mxu0
        %v1485 = vadd.f32 %v1388, %v1484
        %v1486 = vpop.f32.mrb[0].mxu0
        %1487 = vmatprep.mubr.bf16.mxu0 0
        %1488 = vmatmul.mubr.bf16.gmra.mrb[0].mxu0 %v702
        %v1489 = vpop.f32.mrb[0].mxu0
        %v1490 = vadd.f32 %v1393, %v1489
        %v1491 = vpop.f32.mrb[0].mxu0
        %v1492 = vpop.f32.mrb[0].mxu0
        %v1493 = vadd.f32 %v1396, %v1492
        %v1494 = vpop.f32.mrb[0].mxu0
        %1495 = vmatprep.mubr.bf16.mxu0 0
        %1496 = vmatmul.mubr.bf16.gmra.mrb[0].mxu0 %v705
        %v1497 = vpop.f32.mrb[0].mxu0
        %v1498 = vadd.f32 %v1401, %v1497
        %v1499 = vpop.f32.mrb[0].mxu0
        %v1500 = vpop.f32.mrb[0].mxu0
        %v1501 = vadd.f32 %v1404, %v1500
        %v1502 = vpop.f32.mrb[0].mxu0
        %1503 = vdwg.mxu0
        %s1504 = scalar_lea.vmem [#allocation3], 48
        %v1505 = vld [vmem:[%s1504] sm:$0xff]
        %v1506 = vld [vmem:[%s1504 + $0x8] sm:$0xff]
        %v1507 = vld [vmem:[%s1504 + $0x10] sm:$0xff]
        %v1508 = vld [vmem:[%s1504 + $0x18] sm:$0xff]
        %v1509 = vld [vmem:[%s1504 + $0x20] sm:$0xff]
        %v1510 = vld [vmem:[%s1504 + $0x28] sm:$0xff]
        %v1511 = vld [vmem:[%s1504 + $0x30] sm:$0xff]
        %v1512 = vld [vmem:[%s1504 + $0x38] sm:$0xff]
        %v1513 = vld [vmem:[%s1504 + $0x40] sm:$0xff]
        %v1514 = vld [vmem:[%s1504 + $0x48] sm:$0xff]
        %v1515 = vld [vmem:[%s1504 + $0x50] sm:$0xff]
        %v1516 = vld [vmem:[%s1504 + $0x58] sm:$0xff]
        %v1517 = vld [vmem:[%s1504 + $0x60] sm:$0xff]
        %v1518 = vld [vmem:[%s1504 + $0x68] sm:$0xff]
        %v1519 = vld [vmem:[%s1504 + $0x70] sm:$0xff]
        %v1520 = vld [vmem:[%s1504 + $0x78] sm:$0xff]
        %v1521 = vld [vmem:[%s1504 + $0x80] sm:$0xff]
        %v1522 = vld [vmem:[%s1504 + $0x88] sm:$0xff]
        %v1523 = vld [vmem:[%s1504 + $0x90] sm:$0xff]
        %v1524 = vld [vmem:[%s1504 + $0x98] sm:$0xff]
        %v1525 = vld [vmem:[%s1504 + $0xa0] sm:$0xff]
        %v1526 = vld [vmem:[%s1504 + $0xa8] sm:$0xff]
        %v1527 = vld [vmem:[%s1504 + $0xb0] sm:$0xff]
        %v1528 = vld [vmem:[%s1504 + $0xb8] sm:$0xff]
        %s1529 = scalar_lea.vmem [#allocation14], 384
        %v1530 = vld [vmem:[%s1529] sm:$0xf]
        %v1531 = vld [vmem:[%s1529 + $0x4] sm:$0xf]
        %v1532 = vld [vmem:[%s1529 + $0x8] sm:$0xf]
        %v1533 = vld [vmem:[%s1529 + $0xc] sm:$0xf]
        %v1534 = vld [vmem:[%s1529 + $0x10] sm:$0xf]
        %v1535 = vld [vmem:[%s1529 + $0x14] sm:$0xf]
        %v1536 = vld [vmem:[%s1529 + $0x18] sm:$0xf]
        %v1537 = vld [vmem:[%s1529 + $0x1c] sm:$0xf]
        %v1538 = vld [vmem:[%s1529 + $0x20] sm:$0xf]
        %v1539 = vld [vmem:[%s1529 + $0x24] sm:$0xf]
        %v1540 = vld [vmem:[%s1529 + $0x28] sm:$0xf]
        %v1541 = vld [vmem:[%s1529 + $0x2c] sm:$0xf]
        %v1542 = vld [vmem:[%s1529 + $0x30] sm:$0xf]
        %v1543 = vld [vmem:[%s1529 + $0x34] sm:$0xf]
        %v1544 = vld [vmem:[%s1529 + $0x38] sm:$0xf]
        %v1545 = vld [vmem:[%s1529 + $0x3c] sm:$0xf]
        %v1546 = vld [vmem:[%s1529 + $0x40] sm:$0xf]
        %v1547 = vld [vmem:[%s1529 + $0x44] sm:$0xf]
        %v1548 = vld [vmem:[%s1529 + $0x48] sm:$0xf]
        %v1549 = vld [vmem:[%s1529 + $0x4c] sm:$0xf]
        %v1550 = vld [vmem:[%s1529 + $0x50] sm:$0xf]
        %v1551 = vld [vmem:[%s1529 + $0x54] sm:$0xf]
        %v1552 = vld [vmem:[%s1529 + $0x58] sm:$0xf]
        %v1553 = vld [vmem:[%s1529 + $0x5c] sm:$0xf]
        %v1554 = vld [vmem:[%s1529 + $0x60] sm:$0xf]
        %v1555 = vld [vmem:[%s1529 + $0x64] sm:$0xf]
        %v1556 = vld [vmem:[%s1529 + $0x68] sm:$0xf]
        %v1557 = vld [vmem:[%s1529 + $0x6c] sm:$0xf]
        %v1558 = vld [vmem:[%s1529 + $0x70] sm:$0xf]
        %v1559 = vld [vmem:[%s1529 + $0x74] sm:$0xf]
        %v1560 = vld [vmem:[%s1529 + $0x78] sm:$0xf]
        %v1561 = vld [vmem:[%s1529 + $0x7c] sm:$0xf]
        %v1562 = vld [vmem:[%s1529 + $0x80] sm:$0xf]
        %v1563 = vld [vmem:[%s1529 + $0x84] sm:$0xf]
        %v1564 = vld [vmem:[%s1529 + $0x88] sm:$0xf]
        %v1565 = vld [vmem:[%s1529 + $0x8c] sm:$0xf]
        %v1566 = vld [vmem:[%s1529 + $0x90] sm:$0xf]
        %v1567 = vld [vmem:[%s1529 + $0x94] sm:$0xf]
        %v1568 = vld [vmem:[%s1529 + $0x98] sm:$0xf]
        %v1569 = vld [vmem:[%s1529 + $0x9c] sm:$0xf]
        %v1570 = vld [vmem:[%s1529 + $0xa0] sm:$0xf]
        %v1571 = vld [vmem:[%s1529 + $0xa4] sm:$0xf]
        %v1572 = vld [vmem:[%s1529 + $0xa8] sm:$0xf]
        %v1573 = vld [vmem:[%s1529 + $0xac] sm:$0xf]
        %v1574 = vld [vmem:[%s1529 + $0xb0] sm:$0xf]
        %v1575 = vld [vmem:[%s1529 + $0xb4] sm:$0xf]
        %v1576 = vld [vmem:[%s1529 + $0xb8] sm:$0xf]
        %v1577 = vld [vmem:[%s1529 + $0xbc] sm:$0xf]
        %v1626 = vunpack.c.l.b16 %v1530
        %v1627 = vunpack.c.l.b16 %v1531
        %v1628 = vunpack.c.l.b16 %v1532
        %v1629 = vunpack.c.l.b16 %v1533
        %v1630 = vunpack.c.l.b16 %v1534
        %v1631 = vunpack.c.l.b16 %v1535
        %v1632 = vunpack.c.l.b16 %v1536
        %v1633 = vunpack.c.l.b16 %v1537
        %v1634 = vunpack.c.l.b16 %v1538
        %v1635 = vunpack.c.l.b16 %v1539
        %v1636 = vunpack.c.l.b16 %v1540
        %v1637 = vunpack.c.l.b16 %v1541
        %v1638 = vunpack.c.l.b16 %v1542
        %v1639 = vunpack.c.l.b16 %v1543
        %v1640 = vunpack.c.l.b16 %v1544
        %v1641 = vunpack.c.l.b16 %v1545
        %v1642 = vunpack.c.l.b16 %v1546
        %v1643 = vunpack.c.l.b16 %v1547
        %v1644 = vunpack.c.l.b16 %v1548
        %v1645 = vunpack.c.l.b16 %v1549
        %v1646 = vunpack.c.l.b16 %v1550
        %v1647 = vunpack.c.l.b16 %v1551
        %v1648 = vunpack.c.l.b16 %v1552
        %v1649 = vunpack.c.l.b16 %v1553
        %v1650 = vunpack.c.l.b16 %v1554
        %v1651 = vunpack.c.l.b16 %v1555
        %v1652 = vunpack.c.l.b16 %v1556
        %v1653 = vunpack.c.l.b16 %v1557
        %v1654 = vunpack.c.l.b16 %v1558
        %v1655 = vunpack.c.l.b16 %v1559
        %v1656 = vunpack.c.l.b16 %v1560
        %v1657 = vunpack.c.l.b16 %v1561
        %v1658 = vunpack.c.l.b16 %v1562
        %v1659 = vunpack.c.l.b16 %v1563
        %v1660 = vunpack.c.l.b16 %v1564
        %v1661 = vunpack.c.l.b16 %v1565
        %v1662 = vunpack.c.l.b16 %v1566
        %v1663 = vunpack.c.l.b16 %v1567
        %v1664 = vunpack.c.l.b16 %v1568
        %v1665 = vunpack.c.l.b16 %v1569
        %v1666 = vunpack.c.l.b16 %v1570
        %v1667 = vunpack.c.l.b16 %v1571
        %v1668 = vunpack.c.l.b16 %v1572
        %v1669 = vunpack.c.l.b16 %v1573
        %v1670 = vunpack.c.l.b16 %v1574
        %v1671 = vunpack.c.l.b16 %v1575
        %v1672 = vunpack.c.l.b16 %v1576
        %v1673 = vunpack.c.l.b16 %v1577
        %v1674 = vpack.c.b16 %v1627, %v1626
        %v1675 = vpack.c.b16 %v1629, %v1628
        %v1676 = vpack.c.b16 %v1631, %v1630
        %v1677 = vpack.c.b16 %v1633, %v1632
        %v1678 = vpack.c.b16 %v1635, %v1634
        %v1679 = vpack.c.b16 %v1637, %v1636
        %v1680 = vpack.c.b16 %v1639, %v1638
        %v1681 = vpack.c.b16 %v1641, %v1640
        %v1682 = vpack.c.b16 %v1643, %v1642
        %v1683 = vpack.c.b16 %v1645, %v1644
        %v1684 = vpack.c.b16 %v1647, %v1646
        %v1685 = vpack.c.b16 %v1649, %v1648
        %v1686 = vpack.c.b16 %v1651, %v1650
        %v1687 = vpack.c.b16 %v1653, %v1652
        %v1688 = vpack.c.b16 %v1655, %v1654
        %v1689 = vpack.c.b16 %v1657, %v1656
        %v1690 = vpack.c.b16 %v1659, %v1658
        %v1691 = vpack.c.b16 %v1661, %v1660
        %v1692 = vpack.c.b16 %v1663, %v1662
        %v1693 = vpack.c.b16 %v1665, %v1664
        %v1694 = vpack.c.b16 %v1667, %v1666
        %v1695 = vpack.c.b16 %v1669, %v1668
        %v1696 = vpack.c.b16 %v1671, %v1670
        %v1697 = vpack.c.b16 %v1673, %v1672
        %1722 = vmatprep.subr.bf16.mxu0 0
        %1723 = vmatpush1.bf16.msra.mxu0 %v1674
        %1724 = vmatprep.subr.bf16.mxu0 0
        %1725 = vmatpush1.bf16.msra.mxu0 %v1675
        %1726 = vmatprep.subr.bf16.mxu0 0
        %1727 = vmatpush1.bf16.msra.mxu0 %v1676
        %1728 = vmatprep.subr.bf16.mxu0 0
        %1729 = vmatpush1.bf16.msra.mxu0 %v1677
        %1730 = vmatprep.subr.bf16.mxu0 0
        %1731 = vmatpush1.bf16.msra.mxu0 %v1678
        %1732 = vmatprep.subr.bf16.mxu0 0
        %1733 = vmatpush1.bf16.msra.mxu0 %v1679
        %1734 = vmatprep.subr.bf16.mxu0 0
        %1735 = vmatpush1.bf16.msra.mxu0 %v1680
        %1736 = vmatprep.subr.bf16.mxu0 0
        %1737 = vmatpush1.bf16.msra.mxu0 %v1681
        %1738 = vmatprep.subr.bf16.mxu0 0
        %1739 = vmatpush1.bf16.msra.mxu0 %v1682
        %1740 = vmatprep.subr.bf16.mxu0 0
        %1741 = vmatpush1.bf16.msra.mxu0 %v1683
        %1742 = vmatprep.subr.bf16.mxu0 0
        %1743 = vmatpush1.bf16.msra.mxu0 %v1684
        %1744 = vmatprep.subr.bf16.mxu0 0
        %1745 = vmatpush1.bf16.msra.mxu0 %v1685
        %1746 = vmatprep.subr.bf16.mxu0 0
        %1747 = vmatpush1.bf16.msra.mxu0 %v1686
        %1748 = vmatprep.subr.bf16.mxu0 0
        %1749 = vmatpush1.bf16.msra.mxu0 %v1687
        %1750 = vmatprep.subr.bf16.mxu0 0
        %1751 = vmatpush1.bf16.msra.mxu0 %v1688
        %1752 = vmatprep.subr.bf16.mxu0 0
        %1753 = vmatpush1.bf16.msra.mxu0 %v1689
        %1754 = vmatprep.mubr.bf16.mxu0 %v1506
        %1755 = vmatmul.mubr.bf16.gmra.mrb[0].mxu0 %v1505
        %v1756 = vpop.f32.mrb[0].mxu0
        %v1757 = vadd.f32 0.0, %v1756
        %v1758 = vpop.f32.mrb[0].mxu0
        %v1759 = vpop.f32.mrb[0].mxu0
        %v1760 = vadd.f32 0.0, %v1759
        %v1761 = vpop.f32.mrb[0].mxu0
        %1762 = vmatprep.mubr.bf16.mxu0 %v1509
        %1763 = vmatmul.mubr.bf16.gmra.mrb[0].mxu0 %v1508
        %v1764 = vpop.f32.mrb[0].mxu0
        %v1765 = vadd.f32 0.0, %v1764
        %v1766 = vpop.f32.mrb[0].mxu0
        %v1767 = vpop.f32.mrb[0].mxu0
        %v1768 = vadd.f32 0.0, %v1767
        %v1769 = vpop.f32.mrb[0].mxu0
        %1770 = vmatprep.mubr.bf16.mxu0 %v1512
        %1771 = vmatmul.mubr.bf16.gmra.mrb[0].mxu0 %v1511
        %v1772 = vpop.f32.mrb[0].mxu0
        %v1773 = vadd.f32 0.0, %v1772
        %v1774 = vpop.f32.mrb[0].mxu0
        %v1775 = vpop.f32.mrb[0].mxu0
        %v1776 = vadd.f32 0.0, %v1775
        %v1777 = vpop.f32.mrb[0].mxu0
        %1778 = vmatprep.mubr.bf16.mxu0 %v1515
        %1779 = vmatmul.mubr.bf16.gmra.mrb[0].mxu0 %v1514
        %v1780 = vpop.f32.mrb[0].mxu0
        %v1781 = vadd.f32 0.0, %v1780
        %v1782 = vpop.f32.mrb[0].mxu0
        %v1783 = vpop.f32.mrb[0].mxu0
        %v1784 = vadd.f32 0.0, %v1783
        %v1785 = vpop.f32.mrb[0].mxu0
        %1786 = vmatprep.mubr.bf16.mxu0 %v1518
        %1787 = vmatmul.mubr.bf16.gmra.mrb[0].mxu0 %v1517
        %v1788 = vpop.f32.mrb[0].mxu0
        %v1789 = vadd.f32 0.0, %v1788
        %v1790 = vpop.f32.mrb[0].mxu0
        %v1791 = vpop.f32.mrb[0].mxu0
        %v1792 = vadd.f32 0.0, %v1791
        %v1793 = vpop.f32.mrb[0].mxu0
        %1794 = vmatprep.mubr.bf16.mxu0 %v1521
        %1795 = vmatmul.mubr.bf16.gmra.mrb[0].mxu0 %v1520
        %v1796 = vpop.f32.mrb[0].mxu0
        %v1797 = vadd.f32 0.0, %v1796
        %v1798 = vpop.f32.mrb[0].mxu0
        %v1799 = vpop.f32.mrb[0].mxu0
        %v1800 = vadd.f32 0.0, %v1799
        %v1801 = vpop.f32.mrb[0].mxu0
        %1802 = vmatprep.mubr.bf16.mxu0 %v1524
        %1803 = vmatmul.mubr.bf16.gmra.mrb[0].mxu0 %v1523
        %v1804 = vpop.f32.mrb[0].mxu0
        %v1805 = vadd.f32 0.0, %v1804
        %v1806 = vpop.f32.mrb[0].mxu0
        %v1807 = vpop.f32.mrb[0].mxu0
        %v1808 = vadd.f32 0.0, %v1807
        %v1809 = vpop.f32.mrb[0].mxu0
        %1810 = vmatprep.mubr.bf16.mxu0 %v1527
        %1811 = vmatmul.mubr.bf16.gmra.mrb[0].mxu0 %v1526
        %v1812 = vpop.f32.mrb[0].mxu0
        %v1813 = vadd.f32 0.0, %v1812
        %v1814 = vpop.f32.mrb[0].mxu0
        %v1815 = vpop.f32.mrb[0].mxu0
        %v1816 = vadd.f32 0.0, %v1815
        %v1817 = vpop.f32.mrb[0].mxu0
        %1818 = vdwg.mxu0
        %1819 = vmatprep.subr.bf16.mxu0 0
        %1820 = vmatpush1.bf16.msra.mxu0 %v1690
        %1821 = vmatprep.subr.bf16.mxu0 0
        %1822 = vmatpush1.bf16.msra.mxu0 %v1691
        %1823 = vmatprep.subr.bf16.mxu0 0
        %1824 = vmatpush1.bf16.msra.mxu0 %v1692
        %1825 = vmatprep.subr.bf16.mxu0 0
        %1826 = vmatpush1.bf16.msra.mxu0 %v1693
        %1827 = vmatprep.subr.bf16.mxu0 0
        %1828 = vmatpush1.bf16.msra.mxu0 %v1694
        %1829 = vmatprep.subr.bf16.mxu0 0
        %1830 = vmatpush1.bf16.msra.mxu0 %v1695
        %1831 = vmatprep.subr.bf16.mxu0 0
        %1832 = vmatpush1.bf16.msra.mxu0 %v1696
        %1833 = vmatprep.subr.bf16.mxu0 0
        %1834 = vmatpush1.bf16.msra.mxu0 %v1697
        %1835 = vmatprep.subr.bf16.mxu0 0
        %1836 = vmatpush1.bf16.msra.mxu0 0
        %1837 = vmatprep.subr.bf16.mxu0 0
        %1838 = vmatpush1.bf16.msra.mxu0 0
        %1839 = vmatprep.subr.bf16.mxu0 0
        %1840 = vmatpush1.bf16.msra.mxu0 0
        %1841 = vmatprep.subr.bf16.mxu0 0
        %1842 = vmatpush1.bf16.msra.mxu0 0
        %1843 = vmatprep.subr.bf16.mxu0 0
        %1844 = vmatpush1.bf16.msra.mxu0 0
        %1845 = vmatprep.subr.bf16.mxu0 0
        %1846 = vmatpush1.bf16.msra.mxu0 0
        %1847 = vmatprep.subr.bf16.mxu0 0
        %1848 = vmatpush1.bf16.msra.mxu0 0
        %1849 = vmatprep.subr.bf16.mxu0 0
        %1850 = vmatpush1.bf16.msra.mxu0 0
        %1851 = vmatprep.mubr.bf16.mxu0 0
        %1852 = vmatmul.mubr.bf16.gmra.mrb[0].mxu0 %v1507
        %v1853 = vpop.f32.mrb[0].mxu0
        %v1854 = vadd.f32 %v1757, %v1853
        %v1855 = vpop.f32.mrb[0].mxu0
        %v1856 = vpop.f32.mrb[0].mxu0
        %v1857 = vadd.f32 %v1760, %v1856
        %v1858 = vpop.f32.mrb[0].mxu0
        %1859 = vmatprep.mubr.bf16.mxu0 0
        %1860 = vmatmul.mubr.bf16.gmra.mrb[0].mxu0 %v1510
        %v1861 = vpop.f32.mrb[0].mxu0
        %v1862 = vadd.f32 %v1765, %v1861
        %v1863 = vpop.f32.mrb[0].mxu0
        %v1864 = vpop.f32.mrb[0].mxu0
        %v1865 = vadd.f32 %v1768, %v1864
        %v1866 = vpop.f32.mrb[0].mxu0
        %1867 = vmatprep.mubr.bf16.mxu0 0
        %1868 = vmatmul.mubr.bf16.gmra.mrb[0].mxu0 %v1513
        %v1869 = vpop.f32.mrb[0].mxu0
        %v1870 = vadd.f32 %v1773, %v1869
        %v1871 = vpop.f32.mrb[0].mxu0
        %v1872 = vpop.f32.mrb[0].mxu0
        %v1873 = vadd.f32 %v1776, %v1872
        %v1874 = vpop.f32.mrb[0].mxu0
        %1875 = vmatprep.mubr.bf16.mxu0 0
        %1876 = vmatmul.mubr.bf16.gmra.mrb[0].mxu0 %v1516
        %v1877 = vpop.f32.mrb[0].mxu0
        %v1878 = vadd.f32 %v1781, %v1877
        %v1879 = vpop.f32.mrb[0].mxu0
        %v1880 = vpop.f32.mrb[0].mxu0
        %v1881 = vadd.f32 %v1784, %v1880
        %v1882 = vpop.f32.mrb[0].mxu0
        %1883 = vmatprep.mubr.bf16.mxu0 0
        %1884 = vmatmul.mubr.bf16.gmra.mrb[0].mxu0 %v1519
        %v1885 = vpop.f32.mrb[0].mxu0
        %v1886 = vadd.f32 %v1789, %v1885
        %v1887 = vpop.f32.mrb[0].mxu0
        %v1888 = vpop.f32.mrb[0].mxu0
        %v1889 = vadd.f32 %v1792, %v1888
        %v1890 = vpop.f32.mrb[0].mxu0
        %1891 = vmatprep.mubr.bf16.mxu0 0
        %1892 = vmatmul.mubr.bf16.gmra.mrb[0].mxu0 %v1522
        %v1893 = vpop.f32.mrb[0].mxu0
        %v1894 = vadd.f32 %v1797, %v1893
        %v1895 = vpop.f32.mrb[0].mxu0
        %v1896 = vpop.f32.mrb[0].mxu0
        %v1897 = vadd.f32 %v1800, %v1896
        %v1898 = vpop.f32.mrb[0].mxu0
        %1899 = vmatprep.mubr.bf16.mxu0 0
        %1900 = vmatmul.mubr.bf16.gmra.mrb[0].mxu0 %v1525
        %v1901 = vpop.f32.mrb[0].mxu0
        %v1902 = vadd.f32 %v1805, %v1901
        %v1903 = vpop.f32.mrb[0].mxu0
        %v1904 = vpop.f32.mrb[0].mxu0
        %v1905 = vadd.f32 %v1808, %v1904
        %v1906 = vpop.f32.mrb[0].mxu0
        %1907 = vmatprep.mubr.bf16.mxu0 0
        %1908 = vmatmul.mubr.bf16.gmra.mrb[0].mxu0 %v1528
        %v1909 = vpop.f32.mrb[0].mxu0
        %v1910 = vadd.f32 %v1813, %v1909
        %v1911 = vpop.f32.mrb[0].mxu0
        %v1912 = vpop.f32.mrb[0].mxu0
        %v1913 = vadd.f32 %v1816, %v1912
        %v1914 = vpop.f32.mrb[0].mxu0
        %1915 = vdwg.mxu0
        %v1916 = vadd.f32 %v1442, %v1854
        %v1917 = vadd.f32 %v1445, %v1857
        %v1918 = vadd.f32 %v1450, %v1862
        %v1919 = vadd.f32 %v1453, %v1865
        %v1920 = vadd.f32 %v1458, %v1870
        %v1921 = vadd.f32 %v1461, %v1873
        %v1922 = vadd.f32 %v1466, %v1878
        %v1923 = vadd.f32 %v1469, %v1881
        %v1924 = vadd.f32 %v1474, %v1886
        %v1925 = vadd.f32 %v1477, %v1889
        %v1926 = vadd.f32 %v1482, %v1894
        %v1927 = vadd.f32 %v1485, %v1897
        %v1928 = vadd.f32 %v1490, %v1902
        %v1929 = vadd.f32 %v1493, %v1905
        %v1930 = vadd.f32 %v1498, %v1910
        %v1931 = vadd.f32 %v1501, %v1913
        %v1932 = vpack.c.bf16 %v1917, %v1916
        %v1933 = vpack.c.bf16 %v1919, %v1918
        %v1934 = vpack.c.bf16 %v1921, %v1920
        %v1935 = vpack.c.bf16 %v1923, %v1922
        %v1936 = vpack.c.bf16 %v1925, %v1924
        %v1937 = vpack.c.bf16 %v1927, %v1926
        %v1938 = vpack.c.bf16 %v1929, %v1928
        %v1939 = vpack.c.bf16 %v1931, %v1930
        %v1948 = vunpack.c.l.b16 %v1932
        %v1949 = vunpack.c.h.b16 %v1932
        %v1950 = vunpack.c.l.b16 %v1933
        %v1951 = vunpack.c.h.b16 %v1933
        %v1952 = vunpack.c.l.b16 %v1934
        %v1953 = vunpack.c.h.b16 %v1934
        %v1954 = vunpack.c.l.b16 %v1935
        %v1955 = vunpack.c.h.b16 %v1935
        %v1956 = vunpack.c.l.b16 %v1936
        %v1957 = vunpack.c.h.b16 %v1936
        %v1958 = vunpack.c.l.b16 %v1937
        %v1959 = vunpack.c.h.b16 %v1937
        %v1960 = vunpack.c.l.b16 %v1938
        %v1961 = vunpack.c.h.b16 %v1938
        %v1962 = vunpack.c.l.b16 %v1939
        %v1963 = vunpack.c.h.b16 %v1939
        %v1964 = vpack.c.b16 %v1948, %v1948
        %v1965 = vpack.c.b16 %v1949, %v1949
        %v1966 = vpack.c.b16 %v1950, %v1950
        %v1967 = vpack.c.b16 %v1951, %v1951
        %v1968 = vpack.c.b16 %v1952, %v1952
        %v1969 = vpack.c.b16 %v1953, %v1953
        %v1970 = vpack.c.b16 %v1954, %v1954
        %v1971 = vpack.c.b16 %v1955, %v1955
        %v1972 = vpack.c.b16 %v1956, %v1956
        %v1973 = vpack.c.b16 %v1957, %v1957
        %v1974 = vpack.c.b16 %v1958, %v1958
        %v1975 = vpack.c.b16 %v1959, %v1959
        %v1976 = vpack.c.b16 %v1960, %v1960
        %v1977 = vpack.c.b16 %v1961, %v1961
        %v1978 = vpack.c.b16 %v1962, %v1962
        %v1979 = vpack.c.b16 %v1963, %v1963
        %1996 = vst [vmem:[%s306] sm:$0xf] %v1964
        %1997 = vst [vmem:[%s306 + $0x4] sm:$0xf] %v1965
        %1998 = vst [vmem:[%s306 + $0x8] sm:$0xf] %v1966
        %1999 = vst [vmem:[%s306 + $0xc] sm:$0xf] %v1967
        %2000 = vst [vmem:[%s306 + $0x10] sm:$0xf] %v1968
        %2001 = vst [vmem:[%s306 + $0x14] sm:$0xf] %v1969
        %2002 = vst [vmem:[%s306 + $0x18] sm:$0xf] %v1970
        %2003 = vst [vmem:[%s306 + $0x1c] sm:$0xf] %v1971
        %2004 = vst [vmem:[%s306 + $0x20] sm:$0xf] %v1972
        %2005 = vst [vmem:[%s306 + $0x24] sm:$0xf] %v1973
        %2006 = vst [vmem:[%s306 + $0x28] sm:$0xf] %v1974
        %2007 = vst [vmem:[%s306 + $0x2c] sm:$0xf] %v1975
        %2008 = vst [vmem:[%s306 + $0x30] sm:$0xf] %v1976
        %2009 = vst [vmem:[%s306 + $0x34] sm:$0xf] %v1977
        %2010 = vst [vmem:[%s306 + $0x38] sm:$0xf] %v1978
        %2011 = vst [vmem:[%s306 + $0x3c] sm:$0xf] %v1979
        %v2012 = vld [vmem:[#allocation5] sm:$0xff]
        %v2013 = vadd.f32 %v1916, %v1917
        %v2014 = vrot.slane %v2013, 4
        %v2015 = vadd.f32 %v2013, %v2014
        %v2016 = vrot.slane %v2015, 2
        %v2017 = vadd.f32 %v2015, %v2016
        %v2018 = vrot.slane %v2017, 1
        %v2019 = vadd.f32 %v2017, %v2018
        %v2020 = vadd.f32 %v1918, %v1919
        %v2021 = vrot.slane %v2020, 4
        %v2022 = vadd.f32 %v2020, %v2021
        %v2023 = vrot.slane %v2022, 2
        %v2024 = vadd.f32 %v2022, %v2023
        %v2025 = vrot.slane %v2024, 1
        %v2026 = vadd.f32 %v2024, %v2025
        %v2027 = vadd.f32 %v1920, %v1921
        %v2028 = vrot.slane %v2027, 4
        %v2029 = vadd.f32 %v2027, %v2028
        %v2030 = vrot.slane %v2029, 2
        %v2031 = vadd.f32 %v2029, %v2030
        %v2032 = vrot.slane %v2031, 1
        %v2033 = vadd.f32 %v2031, %v2032
        %v2034 = vadd.f32 %v1922, %v1923
        %v2035 = vrot.slane %v2034, 4
        %v2036 = vadd.f32 %v2034, %v2035
        %v2037 = vrot.slane %v2036, 2
        %v2038 = vadd.f32 %v2036, %v2037
        %v2039 = vrot.slane %v2038, 1
        %v2040 = vadd.f32 %v2038, %v2039
        %v2041 = vadd.f32 %v1924, %v1925
        %v2042 = vrot.slane %v2041, 4
        %v2043 = vadd.f32 %v2041, %v2042
        %v2044 = vrot.slane %v2043, 2
        %v2045 = vadd.f32 %v2043, %v2044
        %v2046 = vrot.slane %v2045, 1
        %v2047 = vadd.f32 %v2045, %v2046
        %v2048 = vadd.f32 %v1926, %v1927
        %v2049 = vrot.slane %v2048, 4
        %v2050 = vadd.f32 %v2048, %v2049
        %v2051 = vrot.slane %v2050, 2
        %v2052 = vadd.f32 %v2050, %v2051
        %v2053 = vrot.slane %v2052, 1
        %v2054 = vadd.f32 %v2052, %v2053
        %v2055 = vadd.f32 %v1928, %v1929
        %v2056 = vrot.slane %v2055, 4
        %v2057 = vadd.f32 %v2055, %v2056
        %v2058 = vrot.slane %v2057, 2
        %v2059 = vadd.f32 %v2057, %v2058
        %v2060 = vrot.slane %v2059, 1
        %v2061 = vadd.f32 %v2059, %v2060
        %v2062 = vadd.f32 %v1930, %v1931
        %v2063 = vrot.slane %v2062, 4
        %v2064 = vadd.f32 %v2062, %v2063
        %v2065 = vrot.slane %v2064, 2
        %v2066 = vadd.f32 %v2064, %v2065
        %v2067 = vrot.slane %v2066, 1
        %v2068 = vadd.f32 %v2066, %v2067
        %vm2077 = vcmask 1041409
        %v2078 = vsel %vm2077, %v2026, %v2019
        %vm2079 = vcmask 1042434
        %v2080 = vsel %vm2079, %v2033, %v2078
        %vm2081 = vcmask 1043459
        %v2082 = vsel %vm2081, %v2040, %v2080
        %vm2083 = vcmask 1044484
        %v2084 = vsel %vm2083, %v2047, %v2082
        %vm2085 = vcmask 1045509
        %v2086 = vsel %vm2085, %v2054, %v2084
        %vm2087 = vcmask 1046534
        %v2088 = vsel %vm2087, %v2061, %v2086
        %vm2089 = vcmask 1047559
        %v2090 = vsel %vm2089, %v2068, %v2088
        %v2092 = vadd.f32 %v2012, %v2090
        %2093 = vst [vmem:[#allocation5] sm:$0xff] %v2092
        %v2094 = vld [vmem:[#allocation6] sm:$0xff]
        %v2095 = vmul.f32 %v1916, %v1916
        %v2096 = vmul.f32 %v1917, %v1917
        %v2097 = vmul.f32 %v1918, %v1918
        %v2098 = vmul.f32 %v1919, %v1919
        %v2099 = vmul.f32 %v1920, %v1920
        %v2100 = vmul.f32 %v1921, %v1921
        %v2101 = vmul.f32 %v1922, %v1922
        %v2102 = vmul.f32 %v1923, %v1923
        %v2103 = vmul.f32 %v1924, %v1924
        %v2104 = vmul.f32 %v1925, %v1925
        %v2105 = vmul.f32 %v1926, %v1926
        %v2106 = vmul.f32 %v1927, %v1927
        %v2107 = vmul.f32 %v1928, %v1928
        %v2108 = vmul.f32 %v1929, %v1929
        %v2109 = vmul.f32 %v1930, %v1930
        %v2110 = vmul.f32 %v1931, %v1931
        %v2111 = vadd.f32 %v2095, %v2096
        %v2112 = vrot.slane %v2111, 4
        %v2113 = vadd.f32 %v2111, %v2112
        %v2114 = vrot.slane %v2113, 2
        %v2115 = vadd.f32 %v2113, %v2114
        %v2116 = vrot.slane %v2115, 1
        %v2117 = vadd.f32 %v2115, %v2116
        %v2118 = vadd.f32 %v2097, %v2098
        %v2119 = vrot.slane %v2118, 4
        %v2120 = vadd.f32 %v2118, %v2119
        %v2121 = vrot.slane %v2120, 2
        %v2122 = vadd.f32 %v2120, %v2121
        %v2123 = vrot.slane %v2122, 1
        %v2124 = vadd.f32 %v2122, %v2123
        %v2125 = vadd.f32 %v2099, %v2100
        %v2126 = vrot.slane %v2125, 4
        %v2127 = vadd.f32 %v2125, %v2126
        %v2128 = vrot.slane %v2127, 2
        %v2129 = vadd.f32 %v2127, %v2128
        %v2130 = vrot.slane %v2129, 1
        %v2131 = vadd.f32 %v2129, %v2130
        %v2132 = vadd.f32 %v2101, %v2102
        %v2133 = vrot.slane %v2132, 4
        %v2134 = vadd.f32 %v2132, %v2133
        %v2135 = vrot.slane %v2134, 2
        %v2136 = vadd.f32 %v2134, %v2135
        %v2137 = vrot.slane %v2136, 1
        %v2138 = vadd.f32 %v2136, %v2137
        %v2139 = vadd.f32 %v2103, %v2104
        %v2140 = vrot.slane %v2139, 4
        %v2141 = vadd.f32 %v2139, %v2140
        %v2142 = vrot.slane %v2141, 2
        %v2143 = vadd.f32 %v2141, %v2142
        %v2144 = vrot.slane %v2143, 1
        %v2145 = vadd.f32 %v2143, %v2144
        %v2146 = vadd.f32 %v2105, %v2106
        %v2147 = vrot.slane %v2146, 4
        %v2148 = vadd.f32 %v2146, %v2147
        %v2149 = vrot.slane %v2148, 2
        %v2150 = vadd.f32 %v2148, %v2149
        %v2151 = vrot.slane %v2150, 1
        %v2152 = vadd.f32 %v2150, %v2151
        %v2153 = vadd.f32 %v2107, %v2108
        %v2154 = vrot.slane %v2153, 4
        %v2155 = vadd.f32 %v2153, %v2154
        %v2156 = vrot.slane %v2155, 2
        %v2157 = vadd.f32 %v2155, %v2156
        %v2158 = vrot.slane %v2157, 1
        %v2159 = vadd.f32 %v2157, %v2158
        %v2160 = vadd.f32 %v2109, %v2110
        %v2161 = vrot.slane %v2160, 4
        %v2162 = vadd.f32 %v2160, %v2161
        %v2163 = vrot.slane %v2162, 2
        %v2164 = vadd.f32 %v2162, %v2163
        %v2165 = vrot.slane %v2164, 1
        %v2166 = vadd.f32 %v2164, %v2165
        %v2175 = vsel %vm2077, %v2124, %v2117
        %v2176 = vsel %vm2079, %v2131, %v2175
        %v2177 = vsel %vm2081, %v2138, %v2176
        %v2178 = vsel %vm2083, %v2145, %v2177
        %v2179 = vsel %vm2085, %v2152, %v2178
        %v2180 = vsel %vm2087, %v2159, %v2179
        %v2181 = vsel %vm2089, %v2166, %v2180
        %v2183 = vadd.f32 %v2094, %v2181
        %2184 = vst [vmem:[#allocation6] sm:$0xff] %v2183
        // Predicated region
        $region73: #{_lambda_.3} parent=35 // pred_check
          %p2185 = pneg %p556
        $region74: #{_lambda_.3} parent=35 // pred_check_branch
          %2187 = sbr.rel (%p2185) target = $region76
        $region75: #{_lambda_.3} parent=35 // pred_region
          %v2188 = vld [vmem:[#allocation5] sm:$0xff]
          %v2189 = vrot.slane %v2188, 4
          %v2190 = vadd.f32 %v2188, %v2189
          %v2191 = vrot.slane %v2190, 2
          %v2192 = vadd.f32 %v2190, %v2191
          %v2193 = vrot.slane %v2192, 1
          %v2194 = vadd.f32 %v2192, %v2193
          %v2195 = vld [vmem:[#allocation6] sm:$0xff]
          %v2196 = vrot.slane %v2195, 4
          %v2197 = vadd.f32 %v2195, %v2196
          %v2198 = vrot.slane %v2197, 2
          %v2199 = vadd.f32 %v2197, %v2198
          %v2200 = vrot.slane %v2199, 1
          %v2201 = vadd.f32 %v2199, %v2200
          %vm2202 = vcmask 1040384
          %v2203 = vsel %vm2202, %v2194, %v2201
          %2204 = vst [vmem:[%s313] sm:$0x3] %v2203
        $region76: #{_lambda_.3} parent=35 // pred_fallthru
          _
        %s2205 = sand.u32 %s142, 1
        %s2206 = scalar_lea.sflag [#allocation10], %s2205
        %s2207 = sand.u32 %s142, 1
        %s2208 = smul.addr %s2207, 64
        %s2209 = scalar_lea.vmem [#allocation16], %s2208
        %s2210 = sand.u32 %s168, 1
        %s2211 = scalar_lea.sflag [#allocation18], %s2210
        %s2212 = sand.u32 %s168, 1
        %s2213 = smul.addr %s2212, 2
        %s2214 = scalar_lea.vmem [#allocation17], %s2213
        // Predicated region
        $region77: #{_lambda_.3} parent=35 // pred_check
          %p2215 = pneg %p152
        $region78: #{_lambda_.3} parent=35 // pred_check_branch
          %2217 = sbr.rel (%p2215) target = $region80
        $region79: #{_lambda_.3} parent=35 // pred_region
          %s2218 = smul.u32 8, %s34
          %s2220 = ssub.s32 1024, 1024
          %2221 = vsyncadd %s2206, %s2220
          %s2222 = smul.addr %s2218, 2
          %s2223 = smul.addr %s33, 32
          %s2224 = sadd.s32 %s2222, %s2223
          %s2225 = smul.addr %s2224, 64
          %s2226 = scalar_lea.hbm %s5, %s2225
          %s2227 = sshll.u32 %s2209, 4
          %s2228 = int_to_ptr.vmem [resolvable:$true] %s2227
          %2233 = dma.vmem_to_hbm [thread:$0]  %s2228, 1024, %s2226, %s2206, 64, 64, 4
        $region80: #{_lambda_.3} parent=35 // pred_fallthru
          _
        // Predicated region
        $region81: #{_lambda_.3} parent=35 // pred_check
          %p2234 = pneg %p178
        $region82: #{_lambda_.3} parent=35 // pred_check_branch
          %2236 = sbr.rel (%p2234) target = $region84
        $region83: #{_lambda_.3} parent=35 // pred_region
          %s2238 = ssub.s32 32, 32
          %2239 = vsyncadd %s2211, %s2238
          %s2240 = smul.addr %s33, 32
          %s2241 = scalar_lea.hbm %s6, %s2240
          %s2243 = sshll.u32 %s2214, 4
          %s2244 = int_to_ptr.vmem [resolvable:$true] %s2243
          %2246 = dma.vmem_to_hbm [thread:$0]  %s2244, 32, %s2241, %s2211
        $region84: #{_lambda_.3} parent=35 // pred_fallthru
          _
      $region36: #{_lambda_.3} parent=5 // pred_fallthru
        _
      %p2247 = scmp.le.s32.totalorder 2, %s24
      // Predicated region
      $region85: #{_lambda_.3} parent=5 // pred_check
        %p2248 = pneg %p2247
      $region86: #{_lambda_.3} parent=5 // pred_check_branch
        %2250 = sbr.rel (%p2248) target = $region88
      $region87: #{_lambda_.3} parent=5 // pred_region
        %s2251 = ssub.s32 %s24, 2
        // Predicated region
        $region89: #{_lambda_.3} parent=87 // pred_check
          %p2252 = pneg %p158
        $region90: #{_lambda_.3} parent=87 // pred_check_branch
          %2254 = sbr.rel (%p2252) target = $region92
        $region91: #{_lambda_.3} parent=87 // pred_region
          %s2255 = sand.u32 %s143, 1
          %s2256 = scalar_lea.sflag [#allocation10], %s2255
          %s2257 = sand.u32 %s143, 1
          %s2258 = smul.addr %s2257, 64
          %s2259 = scalar_lea.vmem [#allocation16], %s2258
          %2260 = dma.done %s2256, 1024
        $region92: #{_lambda_.3} parent=87 // pred_fallthru
          _
        // Predicated region
        $region93: #{_lambda_.3} parent=87 // pred_check
          %p2261 = pneg %p184
        $region94: #{_lambda_.3} parent=87 // pred_check_branch
          %2263 = sbr.rel (%p2261) target = $region96
        $region95: #{_lambda_.3} parent=87 // pred_region
          %s2264 = sand.u32 %s169, 1
          %s2265 = scalar_lea.sflag [#allocation18], %s2264
          %s2266 = sand.u32 %s169, 1
          %s2267 = smul.addr %s2266, 2
          %s2268 = scalar_lea.vmem [#allocation17], %s2267
          %2269 = dma.done %s2265, 32
        $region96: #{_lambda_.3} parent=87 // pred_fallthru
          _
      $region88: #{_lambda_.3} parent=5 // pred_fallthru
        _
    $region6: #{_lambda_.3} parent=1 // loop_footer
      %s28 = sadd.s32 1, %s24
    $region7: #{_lambda_.3} parent=1 // loop_footer_branch
      %23 = sbr.rel target = $region3
    $region8: #{_lambda_.3} parent=1 // loop_exit
      _
    %2270 = vsyncpa [#allocation9], 1
    %s2271 = scalar_lea.sflag [#allocation9], 1
    %2272 = vsyncpa %s2271, 1
    %2273 = vsyncpa [#allocation12], 1
    %2274 = vsyncpa [#allocation15], 1
    %2275 = vsyncpa [#allocation10], 1
    %s2276 = scalar_lea.sflag [#allocation10], 1
    %2277 = vsyncpa %s2276, 1
    %2278 = vsyncpa [#allocation18], 1
    %s2279 = scalar_lea.sflag [#allocation18], 1
    %2280 = vsyncpa %s2279, 1
  %2281 = vsyncmov [#allocation7]
  %s2282 = vpop.sfrf %2281
  %p2283 = scmp.eq.s32.totalorder %s2282, 0
  %p2284 = pneg %p2283
  %2286 = shalt.err (%p2284)
  %s2287 = scalar_lea.sflag [#allocation7], 1
  %2288 = vsyncmov %s2287
  %s2289 = vpop.sfrf %2288
  %p2290 = scmp.eq.s32.totalorder %s2289, 0
  %p2291 = pneg %p2290
  %2293 = shalt.err (%p2291)

// kernel: _lambda_.2
$region0: #{_lambda_.2}
  #allocation0 [shape = 'u32[]', space=smem, size = 0x4, offset = 0x4, fixed_abs, tag = 'smem constant byte address 0x4 - core index']
  #allocation1 [shape = 'u32[144,128]{1,0:T(1,128)}', space=vmem, size = 0x12000, scoped, tag = 'internal scratch']
  #allocation2 [shape = 'f32[10,18,128]{2,1,0:T(8,128)}', space=vmem, size = 0x1e000, scoped, tag = 'scratch operand']
  #allocation3 [shape = 'bf16[10,16,384]{2,1,0:T(16,128)(2,1)}', space=vmem, size = 0x1e000, scoped, tag = 'scratch operand']
  #allocation4 [shape = 'bf16[2,16,128]{2,1,0:T(16,128)(2,1)}', space=vmem, size = 0x2000, scoped, tag = 'scratch operand']
  #allocation5 [shape = 'f32[8,128]{1,0:T(8,128)}', space=vmem, size = 0x1000, scoped, tag = 'scratch operand']
  #allocation6 [shape = 'f32[8,128]{1,0:T(8,128)}', space=vmem, size = 0x1000, scoped, tag = 'scratch operand']
  #allocation7 [shape = 's32[2]{0}', space=sflag, size = 0x8, scoped, tag = 'scratch operand']
  #allocation16 [shape = 's32[]', space=sflag, size = 0x4, offset = 0, fixed_abs, tag = 'sflag constant byte address 0x0 - dummy sync flag']
  #allocation17 [shape = 's32[]', space=sflag, size = 0x4, offset = 0, fixed_abs, tag = 'sflag constant byte address 0x0 - dummy sync flag']
  #allocation18 [shape = 'u32[]', space=smem, size = 0x4, offset = 0x44, fixed_abs, tag = 'smem constant byte address 0x44 - assertion arg 0']
  #allocation19 [shape = 'u32[]', space=smem, size = 0x4, offset = 0x48, fixed_abs, tag = 'smem constant byte address 0x48 - assertion arg 1']
  #allocation20 [shape = 's32[]', space=sflag, size = 0x4, offset = 0, fixed_abs, tag = 'sflag constant byte address 0x0 - dummy sync flag']
  #allocation21 [shape = 's32[]', space=sflag, size = 0x4, offset = 0, fixed_abs, tag = 'sflag constant byte address 0x0 - dummy sync flag']
  %s0 = inlined_call_operand.hbm [shape: bf16[2,16,16,128], index: 0, kind: input, shape index: {}, may-alias: {0,1}]
  %s1 = inlined_call_operand.hbm [shape: bf16[2,16,16,128], index: 1, kind: input, shape index: {}, may-alias: {0,1}]
  %s2 = inlined_call_operand.hbm [shape: bf16[3,384,128], index: 2, kind: input, shape index: {}]
  %s3 = inlined_call_operand.hbm [shape: bf16[2,16,16,128], index: 3, kind: output, shape index: {0}]
  %s4 = inlined_call_operand.hbm [shape: f32[2,2,128], index: 4, kind: output, shape index: {1}]
  %5 = xla_tuple %s3, %s4
  %s6 = sld [smem:[#allocation0]]
  $region81: #{_lambda_.2} parent=0
    _
  %s8 = ssub.s32 1, %s6
  %s9 = scalar_select 0, %s8, %s6
  $region1: #{_lambda_.2} parent=0
    #allocation8 [shape = 'u8[65536]{0}', space=vmem, size = 0x10000, scoped, tag = 'input window, operand 0']
    #allocation9 [shape = 's32[2]{0}', space=sflag, size = 0x8, scoped, tag = 'scoped memory for _lambda_.2']
    #allocation10 [shape = 's32[2]{0}', space=sflag, size = 0x8, scoped, tag = 'scoped memory for _lambda_.2']
    #allocation11 [shape = 'u8[294912]{0}', space=vmem, size = 0x48000, scoped, tag = 'input window, operand 2, single buffered']
    #allocation12 [shape = 's32[1]{0}', space=sflag, size = 0x4, scoped, tag = 'scoped memory for _lambda_.2']
    #allocation13 [shape = 'u8[65536]{0}', space=vmem, size = 0x10000, scoped, tag = 'output window, operand 0']
    #allocation14 [shape = 'u8[2048]{0}', space=vmem, size = 0x800, scoped, tag = 'output window, operand 1']
    #allocation15 [shape = 's32[2]{0}', space=sflag, size = 0x8, scoped, tag = 'scoped memory for _lambda_.2']
    %10 = vsyncpa [#allocation9], 0
    %s11 = scalar_lea.sflag [#allocation9], 1
    %12 = vsyncpa %s11, 0
    %13 = vsyncpa [#allocation12], 0
    %14 = vsyncpa [#allocation10], 0
    %s15 = scalar_lea.sflag [#allocation10], 1
    %16 = vsyncpa %s15, 0
    %17 = vsyncpa [#allocation15], 0
    %s18 = scalar_lea.sflag [#allocation15], 1
    %19 = vsyncpa %s18, 0
    loop: start=0, step=1, limit=6
    $region2: #{_lambda_.2} parent=1 // loop_pre_header
      _
    $region3: #{_lambda_.2} parent=1 // loop_header
      %s21 = sphi 0, %s25
      %p22 = scmp.ge.s32.totalorder %s21, 6
      %s28 = sphi 0, %s40
      %s29 = sphi 0, %s36
      %s30 = sphi 0, %s28
      %s31 = sphi 0, %s29
      %s32 = sphi 0, %s30
      %s33 = sphi 0, %s31
      %s45 = sphi 0, %s47
      %s48 = sphi 0, %s45
      %s49 = sphi 0, %s48
      %s65 = sphi 0, %s49
      %s69 = sphi 0, %s69
      %s71 = sphi 0, %s69
      %s72 = sphi 0, %s71
      %s86 = sphi 0, %s72
      %s94 = sphi 0, %s96
      %s97 = sphi 0, %s94
      %s98 = sphi 0, %s97
      %s114 = sphi 0, %s98
      %s120 = sphi 0, %s122
      %s123 = sphi 0, %s120
      %s124 = sphi 0, %s123
      %s140 = sphi 0, %s124
    $region4: #{_lambda_.2} parent=1 // loop_header_branch
      %24 = sbr.rel (%p22) target = $region8
    $region5: #{_lambda_.2} parent=1 // loop_body
      %s26 = ssub.s32 %s21, 1
      %s27 = ssub.s32 %s21, 2
      %s34 = sadd.s32 1, %s29
      %p35 = scmp.ge.s32.totalorder %s34, 2
      %s36 = scalar_select %p35, 0, %s34
      %s37 = sadd.s32 1, %s28
      %s38 = scalar_select %p35, %s37, %s28
      %p39 = scmp.ge.s32.totalorder %s38, 2
      %s40 = scalar_select %p39, 0, %s38
      %s41 = ssub.s32 %s28, %s40
      %s42 = ssub.s32 %s29, %s36
      %s43 = sor.u32 %s41, %s42
      %p44 = scmp.eq.s32.totalorder %s43, 0
      %s46 = sadd.s32 %s45, 1
      %s47 = scalar_select %p44, %s45, %s46
      %p50 = pneg %p44
      %p51 = scmp.eq.s32.totalorder %s21, 3
      %p52 = por %p50, %p51
      %p53 = scmp.ne.s32.totalorder %s45, %s48
      %p54 = scmp.eq.s32.totalorder %s21, 0
      %p55 = por %p53, %p54
      %p56 = scmp.ne.s32.totalorder %s45, %s48
      %p57 = scmp.eq.s32.totalorder %s26, 3
      %p58 = por %p56, %p57
      %p59 = scmp.ne.s32.totalorder %s48, %s49
      %p60 = scmp.eq.s32.totalorder %s26, 0
      %p61 = por %p59, %p60
      %p62 = scmp.ne.s32.totalorder %s48, %s49
      %p63 = scmp.eq.s32.totalorder %s27, 3
      %p64 = por %p62, %p63
      %p66 = scmp.ne.s32.totalorder %s49, %s65
      %p67 = scmp.eq.s32.totalorder %s27, 0
      %p68 = por %p66, %p67
      %s70 = sadd.s32 %s69, 1
      %p73 = scmp.eq.s32.totalorder %s21, 3
      %p74 = scmp.ne.s32.totalorder %s69, %s71
      %p75 = scmp.eq.s32.totalorder %s21, 0
      %p76 = por %p74, %p75
      %p77 = scmp.ne.s32.totalorder %s69, %s71
      %p78 = scmp.eq.s32.totalorder %s26, 3
      %p79 = por %p77, %p78
      %p80 = scmp.ne.s32.totalorder %s71, %s72
      %p81 = scmp.eq.s32.totalorder %s26, 0
      %p82 = por %p80, %p81
      %p83 = scmp.ne.s32.totalorder %s71, %s72
      %p84 = scmp.eq.s32.totalorder %s27, 3
      %p85 = por %p83, %p84
      %p87 = scmp.ne.s32.totalorder %s72, %s86
      %p88 = scmp.eq.s32.totalorder %s27, 0
      %p89 = por %p87, %p88
      %s90 = ssub.s32 %s28, %s40
      %s91 = ssub.s32 %s29, %s36
      %s92 = sor.u32 %s90, %s91
      %p93 = scmp.eq.s32.totalorder %s92, 0
      %s95 = sadd.s32 %s94, 1
      %s96 = scalar_select %p93, %s94, %s95
      %p99 = pneg %p93
      %p100 = scmp.eq.s32.totalorder %s21, 3
      %p101 = por %p99, %p100
      %p102 = scmp.ne.s32.totalorder %s94, %s97
      %p103 = scmp.eq.s32.totalorder %s21, 0
      %p104 = por %p102, %p103
      %p105 = scmp.ne.s32.totalorder %s94, %s97
      %p106 = scmp.eq.s32.totalorder %s26, 3
      %p107 = por %p105, %p106
      %p108 = scmp.ne.s32.totalorder %s97, %s98
      %p109 = scmp.eq.s32.totalorder %s26, 0
      %p110 = por %p108, %p109
      %p111 = scmp.ne.s32.totalorder %s97, %s98
      %p112 = scmp.eq.s32.totalorder %s27, 3
      %p113 = por %p111, %p112
      %p115 = scmp.ne.s32.totalorder %s98, %s114
      %p116 = scmp.eq.s32.totalorder %s27, 0
      %p117 = por %p115, %p116
      %s118 = ssub.s32 %s28, %s40
      %p119 = scmp.eq.s32.totalorder %s118, 0
      %s121 = sadd.s32 %s120, 1
      %s122 = scalar_select %p119, %s120, %s121
      %p125 = pneg %p119
      %p126 = scmp.eq.s32.totalorder %s21, 3
      %p127 = por %p125, %p126
      %p128 = scmp.ne.s32.totalorder %s120, %s123
      %p129 = scmp.eq.s32.totalorder %s21, 0
      %p130 = por %p128, %p129
      %p131 = scmp.ne.s32.totalorder %s120, %s123
      %p132 = scmp.eq.s32.totalorder %s26, 3
      %p133 = por %p131, %p132
      %p134 = scmp.ne.s32.totalorder %s123, %s124
      %p135 = scmp.eq.s32.totalorder %s26, 0
      %p136 = por %p134, %p135
      %p137 = scmp.ne.s32.totalorder %s123, %s124
      %p138 = scmp.eq.s32.totalorder %s27, 3
      %p139 = por %p137, %p138
      %p141 = scmp.ne.s32.totalorder %s124, %s140
      %p142 = scmp.eq.s32.totalorder %s27, 0
      %p143 = por %p141, %p142
      %p144 = scmp.le.s32.totalorder 1, %s21
      %p145 = scmp.lt.s32.totalorder %s21, 5
      %p146 = pnand %p144, %p145
      %p147 = pneg %p146
      // Predicated region
      $region9: #{_lambda_.2} parent=5 // pred_check
        _
      $region10: #{_lambda_.2} parent=5 // pred_check_branch
        %149 = sbr.rel (%p146) target = $region12
      $region11: #{_lambda_.2} parent=5 // pred_region
        %s150 = ssub.s32 %s21, 1
        // Predicated region
        $region13: #{_lambda_.2} parent=11 // pred_check
          %p151 = pneg %p82
        $region14: #{_lambda_.2} parent=11 // pred_check_branch
          %153 = sbr.rel (%p151) target = $region16
        $region15: #{_lambda_.2} parent=11 // pred_region
          %s155 = ssub.s32 9216, 9216
          %156 = vsyncadd [#allocation12], %s155
          %s157 = sshll.u32 [#allocation11], 4
          %s158 = int_to_ptr.vmem [resolvable:$true] %s157
          %163 = dma.hbm_to_vmem [thread:$0]  %s2, 9216, %s158, [#allocation12], 64, 64, 4
        $region16: #{_lambda_.2} parent=11 // pred_fallthru
          _
      $region12: #{_lambda_.2} parent=5 // pred_fallthru
        _
      %p164 = scmp.lt.s32.totalorder %s21, 4
      // Predicated region
      $region17: #{_lambda_.2} parent=5 // pred_check
        %p165 = pneg %p164
      $region18: #{_lambda_.2} parent=5 // pred_check_branch
        %167 = sbr.rel (%p165) target = $region20
      $region19: #{_lambda_.2} parent=5 // pred_region
        // Predicated region
        $region21: #{_lambda_.2} parent=19 // pred_check
          %p168 = pneg %p55
        $region22: #{_lambda_.2} parent=19 // pred_check_branch
          %170 = sbr.rel (%p168) target = $region24
        $region23: #{_lambda_.2} parent=19 // pred_region
          %s171 = sand.u32 %s45, 1
          %s172 = scalar_lea.sflag [#allocation9], %s171
          %s173 = sand.u32 %s45, 1
          %s174 = smul.addr %s173, 64
          %s175 = scalar_lea.vmem [#allocation8], %s174
          %s176 = smul.u32 8, %s29
          %s178 = ssub.s32 1024, 1024
          %179 = vsyncadd %s172, %s178
          %s180 = smul.addr %s176, 2
          %s181 = smul.addr %s28, 32
          %s182 = sadd.s32 %s180, %s181
          %s183 = smul.addr %s182, 64
          %s184 = scalar_lea.hbm %s0, %s183
          %s185 = sshll.u32 %s175, 4
          %s186 = int_to_ptr.vmem [resolvable:$true] %s185
          %191 = dma.hbm_to_vmem [thread:$0]  %s184, 1024, %s186, %s172, 64, 64, 4
        $region24: #{_lambda_.2} parent=19 // pred_fallthru
          _
      $region20: #{_lambda_.2} parent=5 // pred_fallthru
        _
      %p192 = scmp.le.s32.totalorder 1, %s21
      %p193 = scmp.lt.s32.totalorder %s21, 5
      %p194 = pnand %p192, %p193
      %p195 = pneg %p194
      // Predicated region
      $region25: #{_lambda_.2} parent=5 // pred_check
        _
      $region26: #{_lambda_.2} parent=5 // pred_check_branch
        %197 = sbr.rel (%p194) target = $region28
      $region27: #{_lambda_.2} parent=5 // pred_region
        %s198 = ssub.s32 %s21, 1
        %s199 = sand.u32 %s48, 1
        %s200 = scalar_lea.sflag [#allocation9], %s199
        %s201 = sand.u32 %s48, 1
        %s202 = smul.addr %s201, 64
        %s203 = scalar_lea.vmem [#allocation8], %s202
        // Predicated region
        $region29: #{_lambda_.2} parent=27 // pred_check
          %p204 = pneg %p61
        $region30: #{_lambda_.2} parent=27 // pred_check_branch
          %206 = sbr.rel (%p204) target = $region32
        $region31: #{_lambda_.2} parent=27 // pred_region
          %207 = dma.done %s200, 1024
        $region32: #{_lambda_.2} parent=27 // pred_fallthru
          _
        // Predicated region
        $region33: #{_lambda_.2} parent=27 // pred_check
          %p208 = pneg %p82
        $region34: #{_lambda_.2} parent=27 // pred_check_branch
          %210 = sbr.rel (%p208) target = $region36
        $region35: #{_lambda_.2} parent=27 // pred_region
          %211 = dma.done [#allocation12], 9216
        $region36: #{_lambda_.2} parent=27 // pred_fallthru
          _
        %s212 = sand.u32 %s48, 1
        %s213 = scalar_lea.sflag [#allocation9], %s212
        %s214 = sand.u32 %s48, 1
        %s215 = smul.addr %s214, 64
        %s216 = scalar_lea.vmem [#allocation8], %s215
        %p217 = pneg %p61
        %p218 = pneg %p58
        %p219 = pneg %p82
        %p220 = pneg %p79
        %p221 = pneg %p110
        %p222 = pneg %p107
        %s223 = sand.u32 %s97, 1
        %s224 = scalar_lea.sflag [#allocation10], %s223
        %s225 = sand.u32 %s97, 1
        %s226 = smul.addr %s225, 64
        %s227 = scalar_lea.vmem [#allocation13], %s226
        %p228 = pneg %p136
        %p229 = pneg %p133
        %s230 = sand.u32 %s123, 1
        %s231 = scalar_lea.sflag [#allocation15], %s230
        %s232 = sand.u32 %s123, 1
        %s233 = smul.addr %s232, 2
        %s234 = scalar_lea.vmem [#allocation14], %s233
        %s235 = smul.u32 8, %s31
        %s236 = smul.u32 8, %s31
        %s238 = smul.u32 %s31, 8
        %s239 = ssub.s32 %s238, 1
        %p240 = scmp.gt.s32.totalorder %s239, 0
        %s241 = scalar_select %p240, %s239, 0
        %s242 = sadd.s32 %s238, 8
        %p243 = scmp.lt.s32.totalorder %s242, 15
        %s244 = scalar_select %p243, %s242, 15
        %s245 = smul.u32 %s241, 2
        %s246 = smul.u32 %s30, 32
        %s247 = sadd.s32 %s245, %s246
        %s248 = smul.addr %s247, 64
        %s249 = scalar_lea.hbm %s1, %s248
        // Predicated region
        $region37: #{_lambda_.2} parent=27 // pred_check
          _
        $region38: #{_lambda_.2} parent=27 // pred_check_branch
          %251 = sbr.rel target = $region40
        $region39: #{_lambda_.2} parent=27 // pred_region
          %252 = sst [smem:[#allocation18]] [#allocation17]
          %253 = sst [smem:[#allocation19]] [#allocation16]
        $region40: #{_lambda_.2} parent=27 // pred_fallthru
          _
        %255 = shalt.err (0)
        %s257 = sshll.u32 [#allocation4], 4
        %s258 = int_to_ptr.vmem [resolvable:$true] %s257
        %260 = dma.hbm_to_vmem [thread:$0]  %s249, 128, %s258, [#allocation7]
        %s261 = smul.u32 %s244, 2
        %s262 = sadd.s32 %s261, %s246
        %s263 = smul.addr %s262, 64
        %s264 = scalar_lea.hbm %s1, %s263
        %s265 = scalar_lea.vmem [#allocation4], 8
        %s266 = scalar_lea.sflag [#allocation7], 1
        // Predicated region
        $region41: #{_lambda_.2} parent=27 // pred_check
          _
        $region42: #{_lambda_.2} parent=27 // pred_check_branch
          %268 = sbr.rel target = $region44
        $region43: #{_lambda_.2} parent=27 // pred_region
          %269 = sst [smem:[#allocation18]] [#allocation21]
          %270 = sst [smem:[#allocation19]] [#allocation20]
        $region44: #{_lambda_.2} parent=27 // pred_fallthru
          _
        %272 = shalt.err (0)
        %s274 = sshll.u32 %s265, 4
        %s275 = int_to_ptr.vmem [resolvable:$true] %s274
        %277 = dma.hbm_to_vmem [thread:$0]  %s264, 128, %s275, %s266
        %p278 = scmp.eq.s32.totalorder %s31, 0
        // Predicated region
        $region45: #{_lambda_.2} parent=27 // pred_check
          %p279 = pneg %p278
        $region46: #{_lambda_.2} parent=27 // pred_check_branch
          %281 = sbr.rel (%p279) target = $region48
        $region47: #{_lambda_.2} parent=27 // pred_region
          %282 = vst [vmem:[#allocation2] sm:$0x1] 0.0
          %283 = vst [vmem:[#allocation2 + $0x18] sm:$0x1] 0.0
          %284 = vst [vmem:[#allocation2 + $0x30] sm:$0x1] 0.0
          %285 = vst [vmem:[#allocation2 + $0x48] sm:$0x1] 0.0
          %286 = vst [vmem:[#allocation2 + $0x60] sm:$0x1] 0.0
          %287 = vst [vmem:[#allocation2 + $0x78] sm:$0x1] 0.0
          %288 = vst [vmem:[#allocation2 + $0x90] sm:$0x1] 0.0
          %289 = vst [vmem:[#allocation2 + $0xa8] sm:$0x1] 0.0
          %290 = vst [vmem:[#allocation2 + $0xc0] sm:$0x1] 0.0
          %291 = vst [vmem:[#allocation2 + $0xd8] sm:$0x1] 0.0
          %292 = vst [vmem:[#allocation2 + $0x11] sm:$0x1] 0.0
          %293 = vst [vmem:[#allocation2 + $0x29] sm:$0x1] 0.0
          %294 = vst [vmem:[#allocation2 + $0x41] sm:$0x1] 0.0
          %295 = vst [vmem:[#allocation2 + $0x59] sm:$0x1] 0.0
          %296 = vst [vmem:[#allocation2 + $0x71] sm:$0x1] 0.0
          %297 = vst [vmem:[#allocation2 + $0x89] sm:$0x1] 0.0
          %298 = vst [vmem:[#allocation2 + $0xa1] sm:$0x1] 0.0
          %299 = vst [vmem:[#allocation2 + $0xb9] sm:$0x1] 0.0
          %300 = vst [vmem:[#allocation2 + $0xd1] sm:$0x1] 0.0
          %301 = vst [vmem:[#allocation2 + $0xe9] sm:$0x1] 0.0
          %302 = vst [vmem:[#allocation5] sm:$0xff] 0.0
          %303 = vst [vmem:[#allocation6] sm:$0xff] 0.0
        $region48: #{_lambda_.2} parent=27 // pred_fallthru
          _
        %v304 = vld [vmem:[%s203] sm:$0xf]
        %v305 = vld [vmem:[%s203 + $0x4] sm:$0xf]
        %v306 = vld [vmem:[%s203 + $0x8] sm:$0xf]
        %v307 = vld [vmem:[%s203 + $0xc] sm:$0xf]
        %v308 = vld [vmem:[%s203 + $0x10] sm:$0xf]
        %v309 = vld [vmem:[%s203 + $0x14] sm:$0xf]
        %v310 = vld [vmem:[%s203 + $0x18] sm:$0xf]
        %v311 = vld [vmem:[%s203 + $0x1c] sm:$0xf]
        %v312 = vld [vmem:[%s203 + $0x20] sm:$0xf]
        %v313 = vld [vmem:[%s203 + $0x24] sm:$0xf]
        %v314 = vld [vmem:[%s203 + $0x28] sm:$0xf]
        %v315 = vld [vmem:[%s203 + $0x2c] sm:$0xf]
        %v316 = vld [vmem:[%s203 + $0x30] sm:$0xf]
        %v317 = vld [vmem:[%s203 + $0x34] sm:$0xf]
        %v318 = vld [vmem:[%s203 + $0x38] sm:$0xf]
        %v319 = vld [vmem:[%s203 + $0x3c] sm:$0xf]
        %v320 = vunpack.c.l.bf16 %v304
        %v321 = vunpack.c.l.bf16 %v305
        %v322 = vunpack.c.l.bf16 %v306
        %v323 = vunpack.c.l.bf16 %v307
        %v324 = vunpack.c.l.bf16 %v308
        %v325 = vunpack.c.l.bf16 %v309
        %v326 = vunpack.c.l.bf16 %v310
        %v327 = vunpack.c.l.bf16 %v311
        %v328 = vunpack.c.l.bf16 %v312
        %v329 = vunpack.c.l.bf16 %v313
        %v330 = vunpack.c.l.bf16 %v314
        %v331 = vunpack.c.l.bf16 %v315
        %v332 = vunpack.c.l.bf16 %v316
        %v333 = vunpack.c.l.bf16 %v317
        %v334 = vunpack.c.l.bf16 %v318
        %v335 = vunpack.c.l.bf16 %v319
        %s336 = scalar_lea.vmem [#allocation2], 24
        %337 = vst [vmem:[%s336 + $0x1] sm:$0xff] %v320
        %338 = vst [vmem:[%s336 + $0x9] sm:$0xff] %v321
        %339 = vst [vmem:[%s336 + $0x19] sm:$0xff] %v322
        %340 = vst [vmem:[%s336 + $0x21] sm:$0xff] %v323
        %341 = vst [vmem:[%s336 + $0x31] sm:$0xff] %v324
        %342 = vst [vmem:[%s336 + $0x39] sm:$0xff] %v325
        %343 = vst [vmem:[%s336 + $0x49] sm:$0xff] %v326
        %344 = vst [vmem:[%s336 + $0x51] sm:$0xff] %v327
        %345 = vst [vmem:[%s336 + $0x61] sm:$0xff] %v328
        %346 = vst [vmem:[%s336 + $0x69] sm:$0xff] %v329
        %347 = vst [vmem:[%s336 + $0x79] sm:$0xff] %v330
        %348 = vst [vmem:[%s336 + $0x81] sm:$0xff] %v331
        %349 = vst [vmem:[%s336 + $0x91] sm:$0xff] %v332
        %350 = vst [vmem:[%s336 + $0x99] sm:$0xff] %v333
        %351 = vst [vmem:[%s336 + $0xa9] sm:$0xff] %v334
        %352 = vst [vmem:[%s336 + $0xb1] sm:$0xff] %v335
        %s353 = smul.u32 4, 2
        %s354 = smul.u32 %s353, 1
        %s355 = sshll.u32 %s354, 4
        %356 = dma.done [#allocation7], %s355
        %s357 = sshll.u32 %s354, 4
        %358 = dma.done %s266, %s357
        %v359 = vld [vmem:[#allocation4] sm:$0xff]
        %v360 = vunpack.c.l.bf16 %v359
        %v361 = vunpack.c.h.bf16 %v359
        %362 = vst [vmem:[#allocation2 + $0x1] sm:$0xff] %v360
        %363 = vst [vmem:[#allocation2 + $0x9] sm:$0xff] %v361
        %v364 = vld [vmem:[%s265] sm:$0xff]
        %v365 = vunpack.c.l.bf16 %v364
        %v366 = vunpack.c.h.bf16 %v364
        %s367 = scalar_lea.vmem [#allocation2], 216
        %368 = vst [vmem:[%s367 + $0x1] sm:$0xff] %v365
        %369 = vst [vmem:[%s367 + $0x9] sm:$0xff] %v366
        // Predicated region
        $region49: #{_lambda_.2} parent=27 // pred_check
          %p370 = pneg %p278
        $region50: #{_lambda_.2} parent=27 // pred_check_branch
          %372 = sbr.rel (%p370) target = $region52
        $region51: #{_lambda_.2} parent=27 // pred_region
          %373 = vst [vmem:[#allocation2 + $0x1] sm:$0xff] 0.0
          %374 = vst [vmem:[#allocation2 + $0x9] sm:$0xff] 0.0
        $region52: #{_lambda_.2} parent=27 // pred_fallthru
          _
        %p375 = scmp.eq.s32.totalorder %s31, 1
        // Predicated region
        $region53: #{_lambda_.2} parent=27 // pred_check
          %p376 = pneg %p375
        $region54: #{_lambda_.2} parent=27 // pred_check_branch
          %378 = sbr.rel (%p376) target = $region56
        $region55: #{_lambda_.2} parent=27 // pred_region
          %379 = vst [vmem:[%s367 + $0x1] sm:$0xff] 0.0
          %380 = vst [vmem:[%s367 + $0x9] sm:$0xff] 0.0
        $region56: #{_lambda_.2} parent=27 // pred_fallthru
          _
        %v381 = vld [vmem:[#allocation2] sm:$0xff]
        %v382 = vld [vmem:[#allocation2 + $0x8] sm:$0xff]
        %v383 = vld [vmem:[#allocation2 + $0x18] sm:$0xff]
        %v384 = vld [vmem:[#allocation2 + $0x20] sm:$0xff]
        %v385 = vld [vmem:[#allocation2 + $0x30] sm:$0xff]
        %v386 = vld [vmem:[#allocation2 + $0x38] sm:$0xff]
        %v387 = vld [vmem:[#allocation2 + $0x48] sm:$0xff]
        %v388 = vld [vmem:[#allocation2 + $0x50] sm:$0xff]
        %v389 = vld [vmem:[#allocation2 + $0x60] sm:$0xff]
        %v390 = vld [vmem:[#allocation2 + $0x68] sm:$0xff]
        %v391 = vld [vmem:[#allocation2 + $0x78] sm:$0xff]
        %v392 = vld [vmem:[#allocation2 + $0x80] sm:$0xff]
        %v393 = vld [vmem:[#allocation2 + $0x90] sm:$0xff]
        %v394 = vld [vmem:[#allocation2 + $0x98] sm:$0xff]
        %v395 = vld [vmem:[#allocation2 + $0xa8] sm:$0xff]
        %v396 = vld [vmem:[#allocation2 + $0xb0] sm:$0xff]
        %v397 = vld [vmem:[#allocation2 + $0xc0] sm:$0xff]
        %v398 = vld [vmem:[#allocation2 + $0xc8] sm:$0xff]
        %v399 = vld [vmem:[#allocation2 + $0xd8] sm:$0xff]
        %v400 = vld [vmem:[#allocation2 + $0xe0] sm:$0xff]
        %v401 = vpack.c.bf16 %v382, %v381
        %v402 = vpack.c.bf16 %v384, %v383
        %v403 = vpack.c.bf16 %v386, %v385
        %v404 = vpack.c.bf16 %v388, %v387
        %v405 = vpack.c.bf16 %v390, %v389
        %v406 = vpack.c.bf16 %v392, %v391
        %v407 = vpack.c.bf16 %v394, %v393
        %v408 = vpack.c.bf16 %v396, %v395
        %v409 = vpack.c.bf16 %v398, %v397
        %v410 = vpack.c.bf16 %v400, %v399
        %411 = vst [vmem:[#allocation3] sm:$0xff] %v401
        %412 = vst [vmem:[#allocation3 + $0x18] sm:$0xff] %v402
        %413 = vst [vmem:[#allocation3 + $0x30] sm:$0xff] %v403
        %414 = vst [vmem:[#allocation3 + $0x48] sm:$0xff] %v404
        %415 = vst [vmem:[#allocation3 + $0x60] sm:$0xff] %v405
        %416 = vst [vmem:[#allocation3 + $0x78] sm:$0xff] %v406
        %417 = vst [vmem:[#allocation3 + $0x90] sm:$0xff] %v407
        %418 = vst [vmem:[#allocation3 + $0xa8] sm:$0xff] %v408
        %419 = vst [vmem:[#allocation3 + $0xc0] sm:$0xff] %v409
        %420 = vst [vmem:[#allocation3 + $0xd8] sm:$0xff] %v410
        %v421 = vld [vmem:[#allocation2 + $0x1] sm:$0xff]
        %v422 = vld [vmem:[#allocation2 + $0x9] sm:$0xff]
        %v423 = vld [vmem:[#allocation2 + $0x19] sm:$0xff]
        %v424 = vld [vmem:[#allocation2 + $0x21] sm:$0xff]
        %v425 = vld [vmem:[#allocation2 + $0x31] sm:$0xff]
        %v426 = vld [vmem:[#allocation2 + $0x39] sm:$0xff]
        %v427 = vld [vmem:[#allocation2 + $0x49] sm:$0xff]
        %v428 = vld [vmem:[#allocation2 + $0x51] sm:$0xff]
        %v429 = vld [vmem:[#allocation2 + $0x61] sm:$0xff]
        %v430 = vld [vmem:[#allocation2 + $0x69] sm:$0xff]
        %v431 = vld [vmem:[#allocation2 + $0x79] sm:$0xff]
        %v432 = vld [vmem:[#allocation2 + $0x81] sm:$0xff]
        %v433 = vld [vmem:[#allocation2 + $0x91] sm:$0xff]
        %v434 = vld [vmem:[#allocation2 + $0x99] sm:$0xff]
        %v435 = vld [vmem:[#allocation2 + $0xa9] sm:$0xff]
        %v436 = vld [vmem:[#allocation2 + $0xb1] sm:$0xff]
        %v437 = vld [vmem:[#allocation2 + $0xc1] sm:$0xff]
        %v438 = vld [vmem:[#allocation2 + $0xc9] sm:$0xff]
        %v439 = vld [vmem:[#allocation2 + $0xd9] sm:$0xff]
        %v440 = vld [vmem:[#allocation2 + $0xe1] sm:$0xff]
        %v441 = vpack.c.bf16 %v422, %v421
        %v442 = vpack.c.bf16 %v424, %v423
        %v443 = vpack.c.bf16 %v426, %v425
        %v444 = vpack.c.bf16 %v428, %v427
        %v445 = vpack.c.bf16 %v430, %v429
        %v446 = vpack.c.bf16 %v432, %v431
        %v447 = vpack.c.bf16 %v434, %v433
        %v448 = vpack.c.bf16 %v436, %v435
        %v449 = vpack.c.bf16 %v438, %v437
        %v450 = vpack.c.bf16 %v440, %v439
        %451 = vst [vmem:[#allocation3 + $0x8] sm:$0xff] %v441
        %452 = vst [vmem:[#allocation3 + $0x20] sm:$0xff] %v442
        %453 = vst [vmem:[#allocation3 + $0x38] sm:$0xff] %v443
        %454 = vst [vmem:[#allocation3 + $0x50] sm:$0xff] %v444
        %455 = vst [vmem:[#allocation3 + $0x68] sm:$0xff] %v445
        %456 = vst [vmem:[#allocation3 + $0x80] sm:$0xff] %v446
        %457 = vst [vmem:[#allocation3 + $0x98] sm:$0xff] %v447
        %458 = vst [vmem:[#allocation3 + $0xb0] sm:$0xff] %v448
        %459 = vst [vmem:[#allocation3 + $0xc8] sm:$0xff] %v449
        %460 = vst [vmem:[#allocation3 + $0xe0] sm:$0xff] %v450
        %v461 = vld [vmem:[#allocation2 + $0x2] sm:$0xff]
        %v462 = vld [vmem:[#allocation2 + $0xa] sm:$0xff]
        %v463 = vld [vmem:[#allocation2 + $0x1a] sm:$0xff]
        %v464 = vld [vmem:[#allocation2 + $0x22] sm:$0xff]
        %v465 = vld [vmem:[#allocation2 + $0x32] sm:$0xff]
        %v466 = vld [vmem:[#allocation2 + $0x3a] sm:$0xff]
        %v467 = vld [vmem:[#allocation2 + $0x4a] sm:$0xff]
        %v468 = vld [vmem:[#allocation2 + $0x52] sm:$0xff]
        %v469 = vld [vmem:[#allocation2 + $0x62] sm:$0xff]
        %v470 = vld [vmem:[#allocation2 + $0x6a] sm:$0xff]
        %v471 = vld [vmem:[#allocation2 + $0x7a] sm:$0xff]
        %v472 = vld [vmem:[#allocation2 + $0x82] sm:$0xff]
        %v473 = vld [vmem:[#allocation2 + $0x92] sm:$0xff]
        %v474 = vld [vmem:[#allocation2 + $0x9a] sm:$0xff]
        %v475 = vld [vmem:[#allocation2 + $0xaa] sm:$0xff]
        %v476 = vld [vmem:[#allocation2 + $0xb2] sm:$0xff]
        %v477 = vld [vmem:[#allocation2 + $0xc2] sm:$0xff]
        %v478 = vld [vmem:[#allocation2 + $0xca] sm:$0xff]
        %v479 = vld [vmem:[#allocation2 + $0xda] sm:$0xff]
        %v480 = vld [vmem:[#allocation2 + $0xe2] sm:$0xff]
        %v481 = vpack.c.bf16 %v462, %v461
        %v482 = vpack.c.bf16 %v464, %v463
        %v483 = vpack.c.bf16 %v466, %v465
        %v484 = vpack.c.bf16 %v468, %v467
        %v485 = vpack.c.bf16 %v470, %v469
        %v486 = vpack.c.bf16 %v472, %v471
        %v487 = vpack.c.bf16 %v474, %v473
        %v488 = vpack.c.bf16 %v476, %v475
        %v489 = vpack.c.bf16 %v478, %v477
        %v490 = vpack.c.bf16 %v480, %v479
        %491 = vst [vmem:[#allocation3 + $0x10] sm:$0xff] %v481
        %492 = vst [vmem:[#allocation3 + $0x28] sm:$0xff] %v482
        %493 = vst [vmem:[#allocation3 + $0x40] sm:$0xff] %v483
        %494 = vst [vmem:[#allocation3 + $0x58] sm:$0xff] %v484
        %495 = vst [vmem:[#allocation3 + $0x70] sm:$0xff] %v485
        %496 = vst [vmem:[#allocation3 + $0x88] sm:$0xff] %v486
        %497 = vst [vmem:[#allocation3 + $0xa0] sm:$0xff] %v487
        %498 = vst [vmem:[#allocation3 + $0xb8] sm:$0xff] %v488
        %499 = vst [vmem:[#allocation3 + $0xd0] sm:$0xff] %v489
        %500 = vst [vmem:[#allocation3 + $0xe8] sm:$0xff] %v490
        %v501 = vld [vmem:[#allocation3] sm:$0xff]
        %v502 = vld [vmem:[#allocation3 + $0x8] sm:$0xff]
        %v503 = vld [vmem:[#allocation3 + $0x10] sm:$0xff]
        %v504 = vld [vmem:[#allocation3 + $0x18] sm:$0xff]
        %v505 = vld [vmem:[#allocation3 + $0x20] sm:$0xff]
        %v506 = vld [vmem:[#allocation3 + $0x28] sm:$0xff]
        %v507 = vld [vmem:[#allocation3 + $0x30] sm:$0xff]
        %v508 = vld [vmem:[#allocation3 + $0x38] sm:$0xff]
        %v509 = vld [vmem:[#allocation3 + $0x40] sm:$0xff]
        %v510 = vld [vmem:[#allocation3 + $0x48] sm:$0xff]
        %v511 = vld [vmem:[#allocation3 + $0x50] sm:$0xff]
        %v512 = vld [vmem:[#allocation3 + $0x58] sm:$0xff]
        %v513 = vld [vmem:[#allocation3 + $0x60] sm:$0xff]
        %v514 = vld [vmem:[#allocation3 + $0x68] sm:$0xff]
        %v515 = vld [vmem:[#allocation3 + $0x70] sm:$0xff]
        %v516 = vld [vmem:[#allocation3 + $0x78] sm:$0xff]
        %v517 = vld [vmem:[#allocation3 + $0x80] sm:$0xff]
        %v518 = vld [vmem:[#allocation3 + $0x88] sm:$0xff]
        %v519 = vld [vmem:[#allocation3 + $0x90] sm:$0xff]
        %v520 = vld [vmem:[#allocation3 + $0x98] sm:$0xff]
        %v521 = vld [vmem:[#allocation3 + $0xa0] sm:$0xff]
        %v522 = vld [vmem:[#allocation3 + $0xa8] sm:$0xff]
        %v523 = vld [vmem:[#allocation3 + $0xb0] sm:$0xff]
        %v524 = vld [vmem:[#allocation3 + $0xb8] sm:$0xff]
        %v525 = vld [vmem:[#allocation11] sm:$0xf]
        %v526 = vld [vmem:[#allocation11 + $0x4] sm:$0xf]
        %v527 = vld [vmem:[#allocation11 + $0x8] sm:$0xf]
        %v528 = vld [vmem:[#allocation11 + $0xc] sm:$0xf]
        %v529 = vld [vmem:[#allocation11 + $0x10] sm:$0xf]
        %v530 = vld [vmem:[#allocation11 + $0x14] sm:$0xf]
        %v531 = vld [vmem:[#allocation11 + $0x18] sm:$0xf]
        %v532 = vld [vmem:[#allocation11 + $0x1c] sm:$0xf]
        %v533 = vld [vmem:[#allocation11 + $0x20] sm:$0xf]
        %v534 = vld [vmem:[#allocation11 + $0x24] sm:$0xf]
        %v535 = vld [vmem:[#allocation11 + $0x28] sm:$0xf]
        %v536 = vld [vmem:[#allocation11 + $0x2c] sm:$0xf]
        %v537 = vld [vmem:[#allocation11 + $0x30] sm:$0xf]
        %v538 = vld [vmem:[#allocation11 + $0x34] sm:$0xf]
        %v539 = vld [vmem:[#allocation11 + $0x38] sm:$0xf]
        %v540 = vld [vmem:[#allocation11 + $0x3c] sm:$0xf]
        %v541 = vld [vmem:[#allocation11 + $0x40] sm:$0xf]
        %v542 = vld [vmem:[#allocation11 + $0x44] sm:$0xf]
        %v543 = vld [vmem:[#allocation11 + $0x48] sm:$0xf]
        %v544 = vld [vmem:[#allocation11 + $0x4c] sm:$0xf]
        %v545 = vld [vmem:[#allocation11 + $0x50] sm:$0xf]
        %v546 = vld [vmem:[#allocation11 + $0x54] sm:$0xf]
        %v547 = vld [vmem:[#allocation11 + $0x58] sm:$0xf]
        %v548 = vld [vmem:[#allocation11 + $0x5c] sm:$0xf]
        %v549 = vld [vmem:[#allocation11 + $0x60] sm:$0xf]
        %v550 = vld [vmem:[#allocation11 + $0x64] sm:$0xf]
        %v551 = vld [vmem:[#allocation11 + $0x68] sm:$0xf]
        %v552 = vld [vmem:[#allocation11 + $0x6c] sm:$0xf]
        %v553 = vld [vmem:[#allocation11 + $0x70] sm:$0xf]
        %v554 = vld [vmem:[#allocation11 + $0x74] sm:$0xf]
        %v555 = vld [vmem:[#allocation11 + $0x78] sm:$0xf]
        %v556 = vld [vmem:[#allocation11 + $0x7c] sm:$0xf]
        %v557 = vld [vmem:[#allocation11 + $0x80] sm:$0xf]
        %v558 = vld [vmem:[#allocation11 + $0x84] sm:$0xf]
        %v559 = vld [vmem:[#allocation11 + $0x88] sm:$0xf]
        %v560 = vld [vmem:[#allocation11 + $0x8c] sm:$0xf]
        %v561 = vld [vmem:[#allocation11 + $0x90] sm:$0xf]
        %v562 = vld [vmem:[#allocation11 + $0x94] sm:$0xf]
        %v563 = vld [vmem:[#allocation11 + $0x98] sm:$0xf]
        %v564 = vld [vmem:[#allocation11 + $0x9c] sm:$0xf]
        %v565 = vld [vmem:[#allocation11 + $0xa0] sm:$0xf]
        %v566 = vld [vmem:[#allocation11 + $0xa4] sm:$0xf]
        %v567 = vld [vmem:[#allocation11 + $0xa8] sm:$0xf]
        %v568 = vld [vmem:[#allocation11 + $0xac] sm:$0xf]
        %v569 = vld [vmem:[#allocation11 + $0xb0] sm:$0xf]
        %v570 = vld [vmem:[#allocation11 + $0xb4] sm:$0xf]
        %v571 = vld [vmem:[#allocation11 + $0xb8] sm:$0xf]
        %v572 = vld [vmem:[#allocation11 + $0xbc] sm:$0xf]
        %s573 = scalar_lea.vmem [#allocation3], 24
        %v574 = vld [vmem:[%s573] sm:$0xff]
        %v575 = vld [vmem:[%s573 + $0x8] sm:$0xff]
        %v576 = vld [vmem:[%s573 + $0x10] sm:$0xff]
        %v577 = vld [vmem:[%s573 + $0x18] sm:$0xff]
        %v578 = vld [vmem:[%s573 + $0x20] sm:$0xff]
        %v579 = vld [vmem:[%s573 + $0x28] sm:$0xff]
        %v580 = vld [vmem:[%s573 + $0x30] sm:$0xff]
        %v581 = vld [vmem:[%s573 + $0x38] sm:$0xff]
        %v582 = vld [vmem:[%s573 + $0x40] sm:$0xff]
        %v583 = vld [vmem:[%s573 + $0x48] sm:$0xff]
        %v584 = vld [vmem:[%s573 + $0x50] sm:$0xff]
        %v585 = vld [vmem:[%s573 + $0x58] sm:$0xff]
        %v586 = vld [vmem:[%s573 + $0x60] sm:$0xff]
        %v587 = vld [vmem:[%s573 + $0x68] sm:$0xff]
        %v588 = vld [vmem:[%s573 + $0x70] sm:$0xff]
        %v589 = vld [vmem:[%s573 + $0x78] sm:$0xff]
        %v590 = vld [vmem:[%s573 + $0x80] sm:$0xff]
        %v591 = vld [vmem:[%s573 + $0x88] sm:$0xff]
        %v592 = vld [vmem:[%s573 + $0x90] sm:$0xff]
        %v593 = vld [vmem:[%s573 + $0x98] sm:$0xff]
        %v594 = vld [vmem:[%s573 + $0xa0] sm:$0xff]
        %v595 = vld [vmem:[%s573 + $0xa8] sm:$0xff]
        %v596 = vld [vmem:[%s573 + $0xb0] sm:$0xff]
        %v597 = vld [vmem:[%s573 + $0xb8] sm:$0xff]
        %s598 = scalar_lea.vmem [#allocation11], 192
        %v599 = vld [vmem:[%s598] sm:$0xf]
        %v600 = vld [vmem:[%s598 + $0x4] sm:$0xf]
        %v601 = vld [vmem:[%s598 + $0x8] sm:$0xf]
        %v602 = vld [vmem:[%s598 + $0xc] sm:$0xf]
        %v603 = vld [vmem:[%s598 + $0x10] sm:$0xf]
        %v604 = vld [vmem:[%s598 + $0x14] sm:$0xf]
        %v605 = vld [vmem:[%s598 + $0x18] sm:$0xf]
        %v606 = vld [vmem:[%s598 + $0x1c] sm:$0xf]
        %v607 = vld [vmem:[%s598 + $0x20] sm:$0xf]
        %v608 = vld [vmem:[%s598 + $0x24] sm:$0xf]
        %v609 = vld [vmem:[%s598 + $0x28] sm:$0xf]
        %v610 = vld [vmem:[%s598 + $0x2c] sm:$0xf]
        %v611 = vld [vmem:[%s598 + $0x30] sm:$0xf]
        %v612 = vld [vmem:[%s598 + $0x34] sm:$0xf]
        %v613 = vld [vmem:[%s598 + $0x38] sm:$0xf]
        %v614 = vld [vmem:[%s598 + $0x3c] sm:$0xf]
        %v615 = vld [vmem:[%s598 + $0x40] sm:$0xf]
        %v616 = vld [vmem:[%s598 + $0x44] sm:$0xf]
        %v617 = vld [vmem:[%s598 + $0x48] sm:$0xf]
        %v618 = vld [vmem:[%s598 + $0x4c] sm:$0xf]
        %v619 = vld [vmem:[%s598 + $0x50] sm:$0xf]
        %v620 = vld [vmem:[%s598 + $0x54] sm:$0xf]
        %v621 = vld [vmem:[%s598 + $0x58] sm:$0xf]
        %v622 = vld [vmem:[%s598 + $0x5c] sm:$0xf]
        %v623 = vld [vmem:[%s598 + $0x60] sm:$0xf]
        %v624 = vld [vmem:[%s598 + $0x64] sm:$0xf]
        %v625 = vld [vmem:[%s598 + $0x68] sm:$0xf]
        %v626 = vld [vmem:[%s598 + $0x6c] sm:$0xf]
        %v627 = vld [vmem:[%s598 + $0x70] sm:$0xf]
        %v628 = vld [vmem:[%s598 + $0x74] sm:$0xf]
        %v629 = vld [vmem:[%s598 + $0x78] sm:$0xf]
        %v630 = vld [vmem:[%s598 + $0x7c] sm:$0xf]
        %v631 = vld [vmem:[%s598 + $0x80] sm:$0xf]
        %v632 = vld [vmem:[%s598 + $0x84] sm:$0xf]
        %v633 = vld [vmem:[%s598 + $0x88] sm:$0xf]
        %v634 = vld [vmem:[%s598 + $0x8c] sm:$0xf]
        %v635 = vld [vmem:[%s598 + $0x90] sm:$0xf]
        %v636 = vld [vmem:[%s598 + $0x94] sm:$0xf]
        %v637 = vld [vmem:[%s598 + $0x98] sm:$0xf]
        %v638 = vld [vmem:[%s598 + $0x9c] sm:$0xf]
        %v639 = vld [vmem:[%s598 + $0xa0] sm:$0xf]
        %v640 = vld [vmem:[%s598 + $0xa4] sm:$0xf]
        %v641 = vld [vmem:[%s598 + $0xa8] sm:$0xf]
        %v642 = vld [vmem:[%s598 + $0xac] sm:$0xf]
        %v643 = vld [vmem:[%s598 + $0xb0] sm:$0xf]
        %v644 = vld [vmem:[%s598 + $0xb4] sm:$0xf]
        %v645 = vld [vmem:[%s598 + $0xb8] sm:$0xf]
        %v646 = vld [vmem:[%s598 + $0xbc] sm:$0xf]
        %v695 = vunpack.c.l.b16 %v599
        %v696 = vunpack.c.l.b16 %v600
        %v697 = vunpack.c.l.b16 %v601
        %v698 = vunpack.c.l.b16 %v602
        %v699 = vunpack.c.l.b16 %v603
        %v700 = vunpack.c.l.b16 %v604
        %v701 = vunpack.c.l.b16 %v605
        %v702 = vunpack.c.l.b16 %v606
        %v703 = vunpack.c.l.b16 %v607
        %v704 = vunpack.c.l.b16 %v608
        %v705 = vunpack.c.l.b16 %v609
        %v706 = vunpack.c.l.b16 %v610
        %v707 = vunpack.c.l.b16 %v611
        %v708 = vunpack.c.l.b16 %v612
        %v709 = vunpack.c.l.b16 %v613
        %v710 = vunpack.c.l.b16 %v614
        %v711 = vunpack.c.l.b16 %v615
        %v712 = vunpack.c.l.b16 %v616
        %v713 = vunpack.c.l.b16 %v617
        %v714 = vunpack.c.l.b16 %v618
        %v715 = vunpack.c.l.b16 %v619
        %v716 = vunpack.c.l.b16 %v620
        %v717 = vunpack.c.l.b16 %v621
        %v718 = vunpack.c.l.b16 %v622
        %v719 = vunpack.c.l.b16 %v623
        %v720 = vunpack.c.l.b16 %v624
        %v721 = vunpack.c.l.b16 %v625
        %v722 = vunpack.c.l.b16 %v626
        %v723 = vunpack.c.l.b16 %v627
        %v724 = vunpack.c.l.b16 %v628
        %v725 = vunpack.c.l.b16 %v629
        %v726 = vunpack.c.l.b16 %v630
        %v727 = vunpack.c.l.b16 %v631
        %v728 = vunpack.c.l.b16 %v632
        %v729 = vunpack.c.l.b16 %v633
        %v730 = vunpack.c.l.b16 %v634
        %v731 = vunpack.c.l.b16 %v635
        %v732 = vunpack.c.l.b16 %v636
        %v733 = vunpack.c.l.b16 %v637
        %v734 = vunpack.c.l.b16 %v638
        %v735 = vunpack.c.l.b16 %v639
        %v736 = vunpack.c.l.b16 %v640
        %v737 = vunpack.c.l.b16 %v641
        %v738 = vunpack.c.l.b16 %v642
        %v739 = vunpack.c.l.b16 %v643
        %v740 = vunpack.c.l.b16 %v644
        %v741 = vunpack.c.l.b16 %v645
        %v742 = vunpack.c.l.b16 %v646
        %v743 = vpack.c.b16 %v696, %v695
        %v744 = vpack.c.b16 %v698, %v697
        %v745 = vpack.c.b16 %v700, %v699
        %v746 = vpack.c.b16 %v702, %v701
        %v747 = vpack.c.b16 %v704, %v703
        %v748 = vpack.c.b16 %v706, %v705
        %v749 = vpack.c.b16 %v708, %v707
        %v750 = vpack.c.b16 %v710, %v709
        %v751 = vpack.c.b16 %v712, %v711
        %v752 = vpack.c.b16 %v714, %v713
        %v753 = vpack.c.b16 %v716, %v715
        %v754 = vpack.c.b16 %v718, %v717
        %v755 = vpack.c.b16 %v720, %v719
        %v756 = vpack.c.b16 %v722, %v721
        %v757 = vpack.c.b16 %v724, %v723
        %v758 = vpack.c.b16 %v726, %v725
        %v759 = vpack.c.b16 %v728, %v727
        %v760 = vpack.c.b16 %v730, %v729
        %v761 = vpack.c.b16 %v732, %v731
        %v762 = vpack.c.b16 %v734, %v733
        %v763 = vpack.c.b16 %v736, %v735
        %v764 = vpack.c.b16 %v738, %v737
        %v765 = vpack.c.b16 %v740, %v739
        %v766 = vpack.c.b16 %v742, %v741
        %791 = vmatprep.subr.bf16.mxu0 0
        %792 = vmatpush1.bf16.msra.mxu0 %v743
        %793 = vmatprep.subr.bf16.mxu0 0
        %794 = vmatpush1.bf16.msra.mxu0 %v744
        %795 = vmatprep.subr.bf16.mxu0 0
        %796 = vmatpush1.bf16.msra.mxu0 %v745
        %797 = vmatprep.subr.bf16.mxu0 0
        %798 = vmatpush1.bf16.msra.mxu0 %v746
        %799 = vmatprep.subr.bf16.mxu0 0
        %800 = vmatpush1.bf16.msra.mxu0 %v747
        %801 = vmatprep.subr.bf16.mxu0 0
        %802 = vmatpush1.bf16.msra.mxu0 %v748
        %803 = vmatprep.subr.bf16.mxu0 0
        %804 = vmatpush1.bf16.msra.mxu0 %v749
        %805 = vmatprep.subr.bf16.mxu0 0
        %806 = vmatpush1.bf16.msra.mxu0 %v750
        %807 = vmatprep.subr.bf16.mxu0 0
        %808 = vmatpush1.bf16.msra.mxu0 %v751
        %809 = vmatprep.subr.bf16.mxu0 0
        %810 = vmatpush1.bf16.msra.mxu0 %v752
        %811 = vmatprep.subr.bf16.mxu0 0
        %812 = vmatpush1.bf16.msra.mxu0 %v753
        %813 = vmatprep.subr.bf16.mxu0 0
        %814 = vmatpush1.bf16.msra.mxu0 %v754
        %815 = vmatprep.subr.bf16.mxu0 0
        %816 = vmatpush1.bf16.msra.mxu0 %v755
        %817 = vmatprep.subr.bf16.mxu0 0
        %818 = vmatpush1.bf16.msra.mxu0 %v756
        %819 = vmatprep.subr.bf16.mxu0 0
        %820 = vmatpush1.bf16.msra.mxu0 %v757
        %821 = vmatprep.subr.bf16.mxu0 0
        %822 = vmatpush1.bf16.msra.mxu0 %v758
        %823 = vmatprep.mubr.bf16.mxu0 %v575
        %824 = vmatmul.mubr.bf16.gmra.mrb[0].mxu0 %v574
        %v825 = vpop.f32.mrb[0].mxu0
        %v826 = vadd.f32 0.0, %v825
        %v827 = vpop.f32.mrb[0].mxu0
        %v828 = vpop.f32.mrb[0].mxu0
        %v829 = vadd.f32 0.0, %v828
        %v830 = vpop.f32.mrb[0].mxu0
        %831 = vmatprep.mubr.bf16.mxu0 %v578
        %832 = vmatmul.mubr.bf16.gmra.mrb[0].mxu0 %v577
        %v833 = vpop.f32.mrb[0].mxu0
        %v834 = vadd.f32 0.0, %v833
        %v835 = vpop.f32.mrb[0].mxu0
        %v836 = vpop.f32.mrb[0].mxu0
        %v837 = vadd.f32 0.0, %v836
        %v838 = vpop.f32.mrb[0].mxu0
        %839 = vmatprep.mubr.bf16.mxu0 %v581
        %840 = vmatmul.mubr.bf16.gmra.mrb[0].mxu0 %v580
        %v841 = vpop.f32.mrb[0].mxu0
        %v842 = vadd.f32 0.0, %v841
        %v843 = vpop.f32.mrb[0].mxu0
        %v844 = vpop.f32.mrb[0].mxu0
        %v845 = vadd.f32 0.0, %v844
        %v846 = vpop.f32.mrb[0].mxu0
        %847 = vmatprep.mubr.bf16.mxu0 %v584
        %848 = vmatmul.mubr.bf16.gmra.mrb[0].mxu0 %v583
        %v849 = vpop.f32.mrb[0].mxu0
        %v850 = vadd.f32 0.0, %v849
        %v851 = vpop.f32.mrb[0].mxu0
        %v852 = vpop.f32.mrb[0].mxu0
        %v853 = vadd.f32 0.0, %v852
        %v854 = vpop.f32.mrb[0].mxu0
        %855 = vmatprep.mubr.bf16.mxu0 %v587
        %856 = vmatmul.mubr.bf16.gmra.mrb[0].mxu0 %v586
        %v857 = vpop.f32.mrb[0].mxu0
        %v858 = vadd.f32 0.0, %v857
        %v859 = vpop.f32.mrb[0].mxu0
        %v860 = vpop.f32.mrb[0].mxu0
        %v861 = vadd.f32 0.0, %v860
        %v862 = vpop.f32.mrb[0].mxu0
        %863 = vmatprep.mubr.bf16.mxu0 %v590
        %864 = vmatmul.mubr.bf16.gmra.mrb[0].mxu0 %v589
        %v865 = vpop.f32.mrb[0].mxu0
        %v866 = vadd.f32 0.0, %v865
        %v867 = vpop.f32.mrb[0].mxu0
        %v868 = vpop.f32.mrb[0].mxu0
        %v869 = vadd.f32 0.0, %v868
        %v870 = vpop.f32.mrb[0].mxu0
        %871 = vmatprep.mubr.bf16.mxu0 %v593
        %872 = vmatmul.mubr.bf16.gmra.mrb[0].mxu0 %v592
        %v873 = vpop.f32.mrb[0].mxu0
        %v874 = vadd.f32 0.0, %v873
        %v875 = vpop.f32.mrb[0].mxu0
        %v876 = vpop.f32.mrb[0].mxu0
        %v877 = vadd.f32 0.0, %v876
        %v878 = vpop.f32.mrb[0].mxu0
        %879 = vmatprep.mubr.bf16.mxu0 %v596
        %880 = vmatmul.mubr.bf16.gmra.mrb[0].mxu0 %v595
        %v881 = vpop.f32.mrb[0].mxu0
        %v882 = vadd.f32 0.0, %v881
        %v883 = vpop.f32.mrb[0].mxu0
        %v884 = vpop.f32.mrb[0].mxu0
        %v885 = vadd.f32 0.0, %v884
        %v886 = vpop.f32.mrb[0].mxu0
        %887 = vdwg.mxu0
        %888 = vmatprep.subr.bf16.mxu0 0
        %889 = vmatpush1.bf16.msra.mxu0 %v759
        %890 = vmatprep.subr.bf16.mxu0 0
        %891 = vmatpush1.bf16.msra.mxu0 %v760
        %892 = vmatprep.subr.bf16.mxu0 0
        %893 = vmatpush1.bf16.msra.mxu0 %v761
        %894 = vmatprep.subr.bf16.mxu0 0
        %895 = vmatpush1.bf16.msra.mxu0 %v762
        %896 = vmatprep.subr.bf16.mxu0 0
        %897 = vmatpush1.bf16.msra.mxu0 %v763
        %898 = vmatprep.subr.bf16.mxu0 0
        %899 = vmatpush1.bf16.msra.mxu0 %v764
        %900 = vmatprep.subr.bf16.mxu0 0
        %901 = vmatpush1.bf16.msra.mxu0 %v765
        %902 = vmatprep.subr.bf16.mxu0 0
        %903 = vmatpush1.bf16.msra.mxu0 %v766
        %904 = vmatprep.subr.bf16.mxu0 0
        %905 = vmatpush1.bf16.msra.mxu0 0
        %906 = vmatprep.subr.bf16.mxu0 0
        %907 = vmatpush1.bf16.msra.mxu0 0
        %908 = vmatprep.subr.bf16.mxu0 0
        %909 = vmatpush1.bf16.msra.mxu0 0
        %910 = vmatprep.subr.bf16.mxu0 0
        %911 = vmatpush1.bf16.msra.mxu0 0
        %912 = vmatprep.subr.bf16.mxu0 0
        %913 = vmatpush1.bf16.msra.mxu0 0
        %914 = vmatprep.subr.bf16.mxu0 0
        %915 = vmatpush1.bf16.msra.mxu0 0
        %916 = vmatprep.subr.bf16.mxu0 0
        %917 = vmatpush1.bf16.msra.mxu0 0
        %918 = vmatprep.subr.bf16.mxu0 0
        %919 = vmatpush1.bf16.msra.mxu0 0
        %920 = vmatprep.mubr.bf16.mxu0 0
        %921 = vmatmul.mubr.bf16.gmra.mrb[0].mxu0 %v576
        %v922 = vpop.f32.mrb[0].mxu0
        %v923 = vadd.f32 %v826, %v922
        %v924 = vpop.f32.mrb[0].mxu0
        %v925 = vpop.f32.mrb[0].mxu0
        %v926 = vadd.f32 %v829, %v925
        %v927 = vpop.f32.mrb[0].mxu0
        %928 = vmatprep.mubr.bf16.mxu0 0
        %929 = vmatmul.mubr.bf16.gmra.mrb[0].mxu0 %v579
        %v930 = vpop.f32.mrb[0].mxu0
        %v931 = vadd.f32 %v834, %v930
        %v932 = vpop.f32.mrb[0].mxu0
        %v933 = vpop.f32.mrb[0].mxu0
        %v934 = vadd.f32 %v837, %v933
        %v935 = vpop.f32.mrb[0].mxu0
        %936 = vmatprep.mubr.bf16.mxu0 0
        %937 = vmatmul.mubr.bf16.gmra.mrb[0].mxu0 %v582
        %v938 = vpop.f32.mrb[0].mxu0
        %v939 = vadd.f32 %v842, %v938
        %v940 = vpop.f32.mrb[0].mxu0
        %v941 = vpop.f32.mrb[0].mxu0
        %v942 = vadd.f32 %v845, %v941
        %v943 = vpop.f32.mrb[0].mxu0
        %944 = vmatprep.mubr.bf16.mxu0 0
        %945 = vmatmul.mubr.bf16.gmra.mrb[0].mxu0 %v585
        %v946 = vpop.f32.mrb[0].mxu0
        %v947 = vadd.f32 %v850, %v946
        %v948 = vpop.f32.mrb[0].mxu0
        %v949 = vpop.f32.mrb[0].mxu0
        %v950 = vadd.f32 %v853, %v949
        %v951 = vpop.f32.mrb[0].mxu0
        %952 = vmatprep.mubr.bf16.mxu0 0
        %953 = vmatmul.mubr.bf16.gmra.mrb[0].mxu0 %v588
        %v954 = vpop.f32.mrb[0].mxu0
        %v955 = vadd.f32 %v858, %v954
        %v956 = vpop.f32.mrb[0].mxu0
        %v957 = vpop.f32.mrb[0].mxu0
        %v958 = vadd.f32 %v861, %v957
        %v959 = vpop.f32.mrb[0].mxu0
        %960 = vmatprep.mubr.bf16.mxu0 0
        %961 = vmatmul.mubr.bf16.gmra.mrb[0].mxu0 %v591
        %v962 = vpop.f32.mrb[0].mxu0
        %v963 = vadd.f32 %v866, %v962
        %v964 = vpop.f32.mrb[0].mxu0
        %v965 = vpop.f32.mrb[0].mxu0
        %v966 = vadd.f32 %v869, %v965
        %v967 = vpop.f32.mrb[0].mxu0
        %968 = vmatprep.mubr.bf16.mxu0 0
        %969 = vmatmul.mubr.bf16.gmra.mrb[0].mxu0 %v594
        %v970 = vpop.f32.mrb[0].mxu0
        %v971 = vadd.f32 %v874, %v970
        %v972 = vpop.f32.mrb[0].mxu0
        %v973 = vpop.f32.mrb[0].mxu0
        %v974 = vadd.f32 %v877, %v973
        %v975 = vpop.f32.mrb[0].mxu0
        %976 = vmatprep.mubr.bf16.mxu0 0
        %977 = vmatmul.mubr.bf16.gmra.mrb[0].mxu0 %v597
        %v978 = vpop.f32.mrb[0].mxu0
        %v979 = vadd.f32 %v882, %v978
        %v980 = vpop.f32.mrb[0].mxu0
        %v981 = vpop.f32.mrb[0].mxu0
        %v982 = vadd.f32 %v885, %v981
        %v983 = vpop.f32.mrb[0].mxu0
        %984 = vdwg.mxu0
        %v1033 = vunpack.c.l.b16 %v525
        %v1034 = vunpack.c.l.b16 %v526
        %v1035 = vunpack.c.l.b16 %v527
        %v1036 = vunpack.c.l.b16 %v528
        %v1037 = vunpack.c.l.b16 %v529
        %v1038 = vunpack.c.l.b16 %v530
        %v1039 = vunpack.c.l.b16 %v531
        %v1040 = vunpack.c.l.b16 %v532
        %v1041 = vunpack.c.l.b16 %v533
        %v1042 = vunpack.c.l.b16 %v534
        %v1043 = vunpack.c.l.b16 %v535
        %v1044 = vunpack.c.l.b16 %v536
        %v1045 = vunpack.c.l.b16 %v537
        %v1046 = vunpack.c.l.b16 %v538
        %v1047 = vunpack.c.l.b16 %v539
        %v1048 = vunpack.c.l.b16 %v540
        %v1049 = vunpack.c.l.b16 %v541
        %v1050 = vunpack.c.l.b16 %v542
        %v1051 = vunpack.c.l.b16 %v543
        %v1052 = vunpack.c.l.b16 %v544
        %v1053 = vunpack.c.l.b16 %v545
        %v1054 = vunpack.c.l.b16 %v546
        %v1055 = vunpack.c.l.b16 %v547
        %v1056 = vunpack.c.l.b16 %v548
        %v1057 = vunpack.c.l.b16 %v549
        %v1058 = vunpack.c.l.b16 %v550
        %v1059 = vunpack.c.l.b16 %v551
        %v1060 = vunpack.c.l.b16 %v552
        %v1061 = vunpack.c.l.b16 %v553
        %v1062 = vunpack.c.l.b16 %v554
        %v1063 = vunpack.c.l.b16 %v555
        %v1064 = vunpack.c.l.b16 %v556
        %v1065 = vunpack.c.l.b16 %v557
        %v1066 = vunpack.c.l.b16 %v558
        %v1067 = vunpack.c.l.b16 %v559
        %v1068 = vunpack.c.l.b16 %v560
        %v1069 = vunpack.c.l.b16 %v561
        %v1070 = vunpack.c.l.b16 %v562
        %v1071 = vunpack.c.l.b16 %v563
        %v1072 = vunpack.c.l.b16 %v564
        %v1073 = vunpack.c.l.b16 %v565
        %v1074 = vunpack.c.l.b16 %v566
        %v1075 = vunpack.c.l.b16 %v567
        %v1076 = vunpack.c.l.b16 %v568
        %v1077 = vunpack.c.l.b16 %v569
        %v1078 = vunpack.c.l.b16 %v570
        %v1079 = vunpack.c.l.b16 %v571
        %v1080 = vunpack.c.l.b16 %v572
        %v1081 = vpack.c.b16 %v1034, %v1033
        %v1082 = vpack.c.b16 %v1036, %v1035
        %v1083 = vpack.c.b16 %v1038, %v1037
        %v1084 = vpack.c.b16 %v1040, %v1039
        %v1085 = vpack.c.b16 %v1042, %v1041
        %v1086 = vpack.c.b16 %v1044, %v1043
        %v1087 = vpack.c.b16 %v1046, %v1045
        %v1088 = vpack.c.b16 %v1048, %v1047
        %v1089 = vpack.c.b16 %v1050, %v1049
        %v1090 = vpack.c.b16 %v1052, %v1051
        %v1091 = vpack.c.b16 %v1054, %v1053
        %v1092 = vpack.c.b16 %v1056, %v1055
        %v1093 = vpack.c.b16 %v1058, %v1057
        %v1094 = vpack.c.b16 %v1060, %v1059
        %v1095 = vpack.c.b16 %v1062, %v1061
        %v1096 = vpack.c.b16 %v1064, %v1063
        %v1097 = vpack.c.b16 %v1066, %v1065
        %v1098 = vpack.c.b16 %v1068, %v1067
        %v1099 = vpack.c.b16 %v1070, %v1069
        %v1100 = vpack.c.b16 %v1072, %v1071
        %v1101 = vpack.c.b16 %v1074, %v1073
        %v1102 = vpack.c.b16 %v1076, %v1075
        %v1103 = vpack.c.b16 %v1078, %v1077
        %v1104 = vpack.c.b16 %v1080, %v1079
        %1129 = vmatprep.subr.bf16.mxu0 0
        %1130 = vmatpush1.bf16.msra.mxu0 %v1081
        %1131 = vmatprep.subr.bf16.mxu0 0
        %1132 = vmatpush1.bf16.msra.mxu0 %v1082
        %1133 = vmatprep.subr.bf16.mxu0 0
        %1134 = vmatpush1.bf16.msra.mxu0 %v1083
        %1135 = vmatprep.subr.bf16.mxu0 0
        %1136 = vmatpush1.bf16.msra.mxu0 %v1084
        %1137 = vmatprep.subr.bf16.mxu0 0
        %1138 = vmatpush1.bf16.msra.mxu0 %v1085
        %1139 = vmatprep.subr.bf16.mxu0 0
        %1140 = vmatpush1.bf16.msra.mxu0 %v1086
        %1141 = vmatprep.subr.bf16.mxu0 0
        %1142 = vmatpush1.bf16.msra.mxu0 %v1087
        %1143 = vmatprep.subr.bf16.mxu0 0
        %1144 = vmatpush1.bf16.msra.mxu0 %v1088
        %1145 = vmatprep.subr.bf16.mxu0 0
        %1146 = vmatpush1.bf16.msra.mxu0 %v1089
        %1147 = vmatprep.subr.bf16.mxu0 0
        %1148 = vmatpush1.bf16.msra.mxu0 %v1090
        %1149 = vmatprep.subr.bf16.mxu0 0
        %1150 = vmatpush1.bf16.msra.mxu0 %v1091
        %1151 = vmatprep.subr.bf16.mxu0 0
        %1152 = vmatpush1.bf16.msra.mxu0 %v1092
        %1153 = vmatprep.subr.bf16.mxu0 0
        %1154 = vmatpush1.bf16.msra.mxu0 %v1093
        %1155 = vmatprep.subr.bf16.mxu0 0
        %1156 = vmatpush1.bf16.msra.mxu0 %v1094
        %1157 = vmatprep.subr.bf16.mxu0 0
        %1158 = vmatpush1.bf16.msra.mxu0 %v1095
        %1159 = vmatprep.subr.bf16.mxu0 0
        %1160 = vmatpush1.bf16.msra.mxu0 %v1096
        %1161 = vmatprep.mubr.bf16.mxu0 %v502
        %1162 = vmatmul.mubr.bf16.gmra.mrb[0].mxu0 %v501
        %v1163 = vpop.f32.mrb[0].mxu0
        %v1164 = vadd.f32 %v923, %v1163
        %v1165 = vpop.f32.mrb[0].mxu0
        %v1166 = vpop.f32.mrb[0].mxu0
        %v1167 = vadd.f32 %v926, %v1166
        %v1168 = vpop.f32.mrb[0].mxu0
        %1169 = vmatprep.mubr.bf16.mxu0 %v505
        %1170 = vmatmul.mubr.bf16.gmra.mrb[0].mxu0 %v504
        %v1171 = vpop.f32.mrb[0].mxu0
        %v1172 = vadd.f32 %v931, %v1171
        %v1173 = vpop.f32.mrb[0].mxu0
        %v1174 = vpop.f32.mrb[0].mxu0
        %v1175 = vadd.f32 %v934, %v1174
        %v1176 = vpop.f32.mrb[0].mxu0
        %1177 = vmatprep.mubr.bf16.mxu0 %v508
        %1178 = vmatmul.mubr.bf16.gmra.mrb[0].mxu0 %v507
        %v1179 = vpop.f32.mrb[0].mxu0
        %v1180 = vadd.f32 %v939, %v1179
        %v1181 = vpop.f32.mrb[0].mxu0
        %v1182 = vpop.f32.mrb[0].mxu0
        %v1183 = vadd.f32 %v942, %v1182
        %v1184 = vpop.f32.mrb[0].mxu0
        %1185 = vmatprep.mubr.bf16.mxu0 %v511
        %1186 = vmatmul.mubr.bf16.gmra.mrb[0].mxu0 %v510
        %v1187 = vpop.f32.mrb[0].mxu0
        %v1188 = vadd.f32 %v947, %v1187
        %v1189 = vpop.f32.mrb[0].mxu0
        %v1190 = vpop.f32.mrb[0].mxu0
        %v1191 = vadd.f32 %v950, %v1190
        %v1192 = vpop.f32.mrb[0].mxu0
        %1193 = vmatprep.mubr.bf16.mxu0 %v514
        %1194 = vmatmul.mubr.bf16.gmra.mrb[0].mxu0 %v513
        %v1195 = vpop.f32.mrb[0].mxu0
        %v1196 = vadd.f32 %v955, %v1195
        %v1197 = vpop.f32.mrb[0].mxu0
        %v1198 = vpop.f32.mrb[0].mxu0
        %v1199 = vadd.f32 %v958, %v1198
        %v1200 = vpop.f32.mrb[0].mxu0
        %1201 = vmatprep.mubr.bf16.mxu0 %v517
        %1202 = vmatmul.mubr.bf16.gmra.mrb[0].mxu0 %v516
        %v1203 = vpop.f32.mrb[0].mxu0
        %v1204 = vadd.f32 %v963, %v1203
        %v1205 = vpop.f32.mrb[0].mxu0
        %v1206 = vpop.f32.mrb[0].mxu0
        %v1207 = vadd.f32 %v966, %v1206
        %v1208 = vpop.f32.mrb[0].mxu0
        %1209 = vmatprep.mubr.bf16.mxu0 %v520
        %1210 = vmatmul.mubr.bf16.gmra.mrb[0].mxu0 %v519
        %v1211 = vpop.f32.mrb[0].mxu0
        %v1212 = vadd.f32 %v971, %v1211
        %v1213 = vpop.f32.mrb[0].mxu0
        %v1214 = vpop.f32.mrb[0].mxu0
        %v1215 = vadd.f32 %v974, %v1214
        %v1216 = vpop.f32.mrb[0].mxu0
        %1217 = vmatprep.mubr.bf16.mxu0 %v523
        %1218 = vmatmul.mubr.bf16.gmra.mrb[0].mxu0 %v522
        %v1219 = vpop.f32.mrb[0].mxu0
        %v1220 = vadd.f32 %v979, %v1219
        %v1221 = vpop.f32.mrb[0].mxu0
        %v1222 = vpop.f32.mrb[0].mxu0
        %v1223 = vadd.f32 %v982, %v1222
        %v1224 = vpop.f32.mrb[0].mxu0
        %1225 = vdwg.mxu0
        %1226 = vmatprep.subr.bf16.mxu0 0
        %1227 = vmatpush1.bf16.msra.mxu0 %v1097
        %1228 = vmatprep.subr.bf16.mxu0 0
        %1229 = vmatpush1.bf16.msra.mxu0 %v1098
        %1230 = vmatprep.subr.bf16.mxu0 0
        %1231 = vmatpush1.bf16.msra.mxu0 %v1099
        %1232 = vmatprep.subr.bf16.mxu0 0
        %1233 = vmatpush1.bf16.msra.mxu0 %v1100
        %1234 = vmatprep.subr.bf16.mxu0 0
        %1235 = vmatpush1.bf16.msra.mxu0 %v1101
        %1236 = vmatprep.subr.bf16.mxu0 0
        %1237 = vmatpush1.bf16.msra.mxu0 %v1102
        %1238 = vmatprep.subr.bf16.mxu0 0
        %1239 = vmatpush1.bf16.msra.mxu0 %v1103
        %1240 = vmatprep.subr.bf16.mxu0 0
        %1241 = vmatpush1.bf16.msra.mxu0 %v1104
        %1242 = vmatprep.subr.bf16.mxu0 0
        %1243 = vmatpush1.bf16.msra.mxu0 0
        %1244 = vmatprep.subr.bf16.mxu0 0
        %1245 = vmatpush1.bf16.msra.mxu0 0
        %1246 = vmatprep.subr.bf16.mxu0 0
        %1247 = vmatpush1.bf16.msra.mxu0 0
        %1248 = vmatprep.subr.bf16.mxu0 0
        %1249 = vmatpush1.bf16.msra.mxu0 0
        %1250 = vmatprep.subr.bf16.mxu0 0
        %1251 = vmatpush1.bf16.msra.mxu0 0
        %1252 = vmatprep.subr.bf16.mxu0 0
        %1253 = vmatpush1.bf16.msra.mxu0 0
        %1254 = vmatprep.subr.bf16.mxu0 0
        %1255 = vmatpush1.bf16.msra.mxu0 0
        %1256 = vmatprep.subr.bf16.mxu0 0
        %1257 = vmatpush1.bf16.msra.mxu0 0
        %1258 = vmatprep.mubr.bf16.mxu0 0
        %1259 = vmatmul.mubr.bf16.gmra.mrb[0].mxu0 %v503
        %v1260 = vpop.f32.mrb[0].mxu0
        %v1261 = vadd.f32 %v1164, %v1260
        %v1262 = vpop.f32.mrb[0].mxu0
        %v1263 = vpop.f32.mrb[0].mxu0
        %v1264 = vadd.f32 %v1167, %v1263
        %v1265 = vpop.f32.mrb[0].mxu0
        %1266 = vmatprep.mubr.bf16.mxu0 0
        %1267 = vmatmul.mubr.bf16.gmra.mrb[0].mxu0 %v506
        %v1268 = vpop.f32.mrb[0].mxu0
        %v1269 = vadd.f32 %v1172, %v1268
        %v1270 = vpop.f32.mrb[0].mxu0
        %v1271 = vpop.f32.mrb[0].mxu0
        %v1272 = vadd.f32 %v1175, %v1271
        %v1273 = vpop.f32.mrb[0].mxu0
        %1274 = vmatprep.mubr.bf16.mxu0 0
        %1275 = vmatmul.mubr.bf16.gmra.mrb[0].mxu0 %v509
        %v1276 = vpop.f32.mrb[0].mxu0
        %v1277 = vadd.f32 %v1180, %v1276
        %v1278 = vpop.f32.mrb[0].mxu0
        %v1279 = vpop.f32.mrb[0].mxu0
        %v1280 = vadd.f32 %v1183, %v1279
        %v1281 = vpop.f32.mrb[0].mxu0
        %1282 = vmatprep.mubr.bf16.mxu0 0
        %1283 = vmatmul.mubr.bf16.gmra.mrb[0].mxu0 %v512
        %v1284 = vpop.f32.mrb[0].mxu0
        %v1285 = vadd.f32 %v1188, %v1284
        %v1286 = vpop.f32.mrb[0].mxu0
        %v1287 = vpop.f32.mrb[0].mxu0
        %v1288 = vadd.f32 %v1191, %v1287
        %v1289 = vpop.f32.mrb[0].mxu0
        %1290 = vmatprep.mubr.bf16.mxu0 0
        %1291 = vmatmul.mubr.bf16.gmra.mrb[0].mxu0 %v515
        %v1292 = vpop.f32.mrb[0].mxu0
        %v1293 = vadd.f32 %v1196, %v1292
        %v1294 = vpop.f32.mrb[0].mxu0
        %v1295 = vpop.f32.mrb[0].mxu0
        %v1296 = vadd.f32 %v1199, %v1295
        %v1297 = vpop.f32.mrb[0].mxu0
        %1298 = vmatprep.mubr.bf16.mxu0 0
        %1299 = vmatmul.mubr.bf16.gmra.mrb[0].mxu0 %v518
        %v1300 = vpop.f32.mrb[0].mxu0
        %v1301 = vadd.f32 %v1204, %v1300
        %v1302 = vpop.f32.mrb[0].mxu0
        %v1303 = vpop.f32.mrb[0].mxu0
        %v1304 = vadd.f32 %v1207, %v1303
        %v1305 = vpop.f32.mrb[0].mxu0
        %1306 = vmatprep.mubr.bf16.mxu0 0
        %1307 = vmatmul.mubr.bf16.gmra.mrb[0].mxu0 %v521
        %v1308 = vpop.f32.mrb[0].mxu0
        %v1309 = vadd.f32 %v1212, %v1308
        %v1310 = vpop.f32.mrb[0].mxu0
        %v1311 = vpop.f32.mrb[0].mxu0
        %v1312 = vadd.f32 %v1215, %v1311
        %v1313 = vpop.f32.mrb[0].mxu0
        %1314 = vmatprep.mubr.bf16.mxu0 0
        %1315 = vmatmul.mubr.bf16.gmra.mrb[0].mxu0 %v524
        %v1316 = vpop.f32.mrb[0].mxu0
        %v1317 = vadd.f32 %v1220, %v1316
        %v1318 = vpop.f32.mrb[0].mxu0
        %v1319 = vpop.f32.mrb[0].mxu0
        %v1320 = vadd.f32 %v1223, %v1319
        %v1321 = vpop.f32.mrb[0].mxu0
        %1322 = vdwg.mxu0
        %s1323 = scalar_lea.vmem [#allocation3], 48
        %v1324 = vld [vmem:[%s1323] sm:$0xff]
        %v1325 = vld [vmem:[%s1323 + $0x8] sm:$0xff]
        %v1326 = vld [vmem:[%s1323 + $0x10] sm:$0xff]
        %v1327 = vld [vmem:[%s1323 + $0x18] sm:$0xff]
        %v1328 = vld [vmem:[%s1323 + $0x20] sm:$0xff]
        %v1329 = vld [vmem:[%s1323 + $0x28] sm:$0xff]
        %v1330 = vld [vmem:[%s1323 + $0x30] sm:$0xff]
        %v1331 = vld [vmem:[%s1323 + $0x38] sm:$0xff]
        %v1332 = vld [vmem:[%s1323 + $0x40] sm:$0xff]
        %v1333 = vld [vmem:[%s1323 + $0x48] sm:$0xff]
        %v1334 = vld [vmem:[%s1323 + $0x50] sm:$0xff]
        %v1335 = vld [vmem:[%s1323 + $0x58] sm:$0xff]
        %v1336 = vld [vmem:[%s1323 + $0x60] sm:$0xff]
        %v1337 = vld [vmem:[%s1323 + $0x68] sm:$0xff]
        %v1338 = vld [vmem:[%s1323 + $0x70] sm:$0xff]
        %v1339 = vld [vmem:[%s1323 + $0x78] sm:$0xff]
        %v1340 = vld [vmem:[%s1323 + $0x80] sm:$0xff]
        %v1341 = vld [vmem:[%s1323 + $0x88] sm:$0xff]
        %v1342 = vld [vmem:[%s1323 + $0x90] sm:$0xff]
        %v1343 = vld [vmem:[%s1323 + $0x98] sm:$0xff]
        %v1344 = vld [vmem:[%s1323 + $0xa0] sm:$0xff]
        %v1345 = vld [vmem:[%s1323 + $0xa8] sm:$0xff]
        %v1346 = vld [vmem:[%s1323 + $0xb0] sm:$0xff]
        %v1347 = vld [vmem:[%s1323 + $0xb8] sm:$0xff]
        %s1348 = scalar_lea.vmem [#allocation11], 384
        %v1349 = vld [vmem:[%s1348] sm:$0xf]
        %v1350 = vld [vmem:[%s1348 + $0x4] sm:$0xf]
        %v1351 = vld [vmem:[%s1348 + $0x8] sm:$0xf]
        %v1352 = vld [vmem:[%s1348 + $0xc] sm:$0xf]
        %v1353 = vld [vmem:[%s1348 + $0x10] sm:$0xf]
        %v1354 = vld [vmem:[%s1348 + $0x14] sm:$0xf]
        %v1355 = vld [vmem:[%s1348 + $0x18] sm:$0xf]
        %v1356 = vld [vmem:[%s1348 + $0x1c] sm:$0xf]
        %v1357 = vld [vmem:[%s1348 + $0x20] sm:$0xf]
        %v1358 = vld [vmem:[%s1348 + $0x24] sm:$0xf]
        %v1359 = vld [vmem:[%s1348 + $0x28] sm:$0xf]
        %v1360 = vld [vmem:[%s1348 + $0x2c] sm:$0xf]
        %v1361 = vld [vmem:[%s1348 + $0x30] sm:$0xf]
        %v1362 = vld [vmem:[%s1348 + $0x34] sm:$0xf]
        %v1363 = vld [vmem:[%s1348 + $0x38] sm:$0xf]
        %v1364 = vld [vmem:[%s1348 + $0x3c] sm:$0xf]
        %v1365 = vld [vmem:[%s1348 + $0x40] sm:$0xf]
        %v1366 = vld [vmem:[%s1348 + $0x44] sm:$0xf]
        %v1367 = vld [vmem:[%s1348 + $0x48] sm:$0xf]
        %v1368 = vld [vmem:[%s1348 + $0x4c] sm:$0xf]
        %v1369 = vld [vmem:[%s1348 + $0x50] sm:$0xf]
        %v1370 = vld [vmem:[%s1348 + $0x54] sm:$0xf]
        %v1371 = vld [vmem:[%s1348 + $0x58] sm:$0xf]
        %v1372 = vld [vmem:[%s1348 + $0x5c] sm:$0xf]
        %v1373 = vld [vmem:[%s1348 + $0x60] sm:$0xf]
        %v1374 = vld [vmem:[%s1348 + $0x64] sm:$0xf]
        %v1375 = vld [vmem:[%s1348 + $0x68] sm:$0xf]
        %v1376 = vld [vmem:[%s1348 + $0x6c] sm:$0xf]
        %v1377 = vld [vmem:[%s1348 + $0x70] sm:$0xf]
        %v1378 = vld [vmem:[%s1348 + $0x74] sm:$0xf]
        %v1379 = vld [vmem:[%s1348 + $0x78] sm:$0xf]
        %v1380 = vld [vmem:[%s1348 + $0x7c] sm:$0xf]
        %v1381 = vld [vmem:[%s1348 + $0x80] sm:$0xf]
        %v1382 = vld [vmem:[%s1348 + $0x84] sm:$0xf]
        %v1383 = vld [vmem:[%s1348 + $0x88] sm:$0xf]
        %v1384 = vld [vmem:[%s1348 + $0x8c] sm:$0xf]
        %v1385 = vld [vmem:[%s1348 + $0x90] sm:$0xf]
        %v1386 = vld [vmem:[%s1348 + $0x94] sm:$0xf]
        %v1387 = vld [vmem:[%s1348 + $0x98] sm:$0xf]
        %v1388 = vld [vmem:[%s1348 + $0x9c] sm:$0xf]
        %v1389 = vld [vmem:[%s1348 + $0xa0] sm:$0xf]
        %v1390 = vld [vmem:[%s1348 + $0xa4] sm:$0xf]
        %v1391 = vld [vmem:[%s1348 + $0xa8] sm:$0xf]
        %v1392 = vld [vmem:[%s1348 + $0xac] sm:$0xf]
        %v1393 = vld [vmem:[%s1348 + $0xb0] sm:$0xf]
        %v1394 = vld [vmem:[%s1348 + $0xb4] sm:$0xf]
        %v1395 = vld [vmem:[%s1348 + $0xb8] sm:$0xf]
        %v1396 = vld [vmem:[%s1348 + $0xbc] sm:$0xf]
        %v1445 = vunpack.c.l.b16 %v1349
        %v1446 = vunpack.c.l.b16 %v1350
        %v1447 = vunpack.c.l.b16 %v1351
        %v1448 = vunpack.c.l.b16 %v1352
        %v1449 = vunpack.c.l.b16 %v1353
        %v1450 = vunpack.c.l.b16 %v1354
        %v1451 = vunpack.c.l.b16 %v1355
        %v1452 = vunpack.c.l.b16 %v1356
        %v1453 = vunpack.c.l.b16 %v1357
        %v1454 = vunpack.c.l.b16 %v1358
        %v1455 = vunpack.c.l.b16 %v1359
        %v1456 = vunpack.c.l.b16 %v1360
        %v1457 = vunpack.c.l.b16 %v1361
        %v1458 = vunpack.c.l.b16 %v1362
        %v1459 = vunpack.c.l.b16 %v1363
        %v1460 = vunpack.c.l.b16 %v1364
        %v1461 = vunpack.c.l.b16 %v1365
        %v1462 = vunpack.c.l.b16 %v1366
        %v1463 = vunpack.c.l.b16 %v1367
        %v1464 = vunpack.c.l.b16 %v1368
        %v1465 = vunpack.c.l.b16 %v1369
        %v1466 = vunpack.c.l.b16 %v1370
        %v1467 = vunpack.c.l.b16 %v1371
        %v1468 = vunpack.c.l.b16 %v1372
        %v1469 = vunpack.c.l.b16 %v1373
        %v1470 = vunpack.c.l.b16 %v1374
        %v1471 = vunpack.c.l.b16 %v1375
        %v1472 = vunpack.c.l.b16 %v1376
        %v1473 = vunpack.c.l.b16 %v1377
        %v1474 = vunpack.c.l.b16 %v1378
        %v1475 = vunpack.c.l.b16 %v1379
        %v1476 = vunpack.c.l.b16 %v1380
        %v1477 = vunpack.c.l.b16 %v1381
        %v1478 = vunpack.c.l.b16 %v1382
        %v1479 = vunpack.c.l.b16 %v1383
        %v1480 = vunpack.c.l.b16 %v1384
        %v1481 = vunpack.c.l.b16 %v1385
        %v1482 = vunpack.c.l.b16 %v1386
        %v1483 = vunpack.c.l.b16 %v1387
        %v1484 = vunpack.c.l.b16 %v1388
        %v1485 = vunpack.c.l.b16 %v1389
        %v1486 = vunpack.c.l.b16 %v1390
        %v1487 = vunpack.c.l.b16 %v1391
        %v1488 = vunpack.c.l.b16 %v1392
        %v1489 = vunpack.c.l.b16 %v1393
        %v1490 = vunpack.c.l.b16 %v1394
        %v1491 = vunpack.c.l.b16 %v1395
        %v1492 = vunpack.c.l.b16 %v1396
        %v1493 = vpack.c.b16 %v1446, %v1445
        %v1494 = vpack.c.b16 %v1448, %v1447
        %v1495 = vpack.c.b16 %v1450, %v1449
        %v1496 = vpack.c.b16 %v1452, %v1451
        %v1497 = vpack.c.b16 %v1454, %v1453
        %v1498 = vpack.c.b16 %v1456, %v1455
        %v1499 = vpack.c.b16 %v1458, %v1457
        %v1500 = vpack.c.b16 %v1460, %v1459
        %v1501 = vpack.c.b16 %v1462, %v1461
        %v1502 = vpack.c.b16 %v1464, %v1463
        %v1503 = vpack.c.b16 %v1466, %v1465
        %v1504 = vpack.c.b16 %v1468, %v1467
        %v1505 = vpack.c.b16 %v1470, %v1469
        %v1506 = vpack.c.b16 %v1472, %v1471
        %v1507 = vpack.c.b16 %v1474, %v1473
        %v1508 = vpack.c.b16 %v1476, %v1475
        %v1509 = vpack.c.b16 %v1478, %v1477
        %v1510 = vpack.c.b16 %v1480, %v1479
        %v1511 = vpack.c.b16 %v1482, %v1481
        %v1512 = vpack.c.b16 %v1484, %v1483
        %v1513 = vpack.c.b16 %v1486, %v1485
        %v1514 = vpack.c.b16 %v1488, %v1487
        %v1515 = vpack.c.b16 %v1490, %v1489
        %v1516 = vpack.c.b16 %v1492, %v1491
        %1541 = vmatprep.subr.bf16.mxu0 0
        %1542 = vmatpush1.bf16.msra.mxu0 %v1493
        %1543 = vmatprep.subr.bf16.mxu0 0
        %1544 = vmatpush1.bf16.msra.mxu0 %v1494
        %1545 = vmatprep.subr.bf16.mxu0 0
        %1546 = vmatpush1.bf16.msra.mxu0 %v1495
        %1547 = vmatprep.subr.bf16.mxu0 0
        %1548 = vmatpush1.bf16.msra.mxu0 %v1496
        %1549 = vmatprep.subr.bf16.mxu0 0
        %1550 = vmatpush1.bf16.msra.mxu0 %v1497
        %1551 = vmatprep.subr.bf16.mxu0 0
        %1552 = vmatpush1.bf16.msra.mxu0 %v1498
        %1553 = vmatprep.subr.bf16.mxu0 0
        %1554 = vmatpush1.bf16.msra.mxu0 %v1499
        %1555 = vmatprep.subr.bf16.mxu0 0
        %1556 = vmatpush1.bf16.msra.mxu0 %v1500
        %1557 = vmatprep.subr.bf16.mxu0 0
        %1558 = vmatpush1.bf16.msra.mxu0 %v1501
        %1559 = vmatprep.subr.bf16.mxu0 0
        %1560 = vmatpush1.bf16.msra.mxu0 %v1502
        %1561 = vmatprep.subr.bf16.mxu0 0
        %1562 = vmatpush1.bf16.msra.mxu0 %v1503
        %1563 = vmatprep.subr.bf16.mxu0 0
        %1564 = vmatpush1.bf16.msra.mxu0 %v1504
        %1565 = vmatprep.subr.bf16.mxu0 0
        %1566 = vmatpush1.bf16.msra.mxu0 %v1505
        %1567 = vmatprep.subr.bf16.mxu0 0
        %1568 = vmatpush1.bf16.msra.mxu0 %v1506
        %1569 = vmatprep.subr.bf16.mxu0 0
        %1570 = vmatpush1.bf16.msra.mxu0 %v1507
        %1571 = vmatprep.subr.bf16.mxu0 0
        %1572 = vmatpush1.bf16.msra.mxu0 %v1508
        %1573 = vmatprep.mubr.bf16.mxu0 %v1325
        %1574 = vmatmul.mubr.bf16.gmra.mrb[0].mxu0 %v1324
        %v1575 = vpop.f32.mrb[0].mxu0
        %v1576 = vadd.f32 0.0, %v1575
        %v1577 = vpop.f32.mrb[0].mxu0
        %v1578 = vpop.f32.mrb[0].mxu0
        %v1579 = vadd.f32 0.0, %v1578
        %v1580 = vpop.f32.mrb[0].mxu0
        %1581 = vmatprep.mubr.bf16.mxu0 %v1328
        %1582 = vmatmul.mubr.bf16.gmra.mrb[0].mxu0 %v1327
        %v1583 = vpop.f32.mrb[0].mxu0
        %v1584 = vadd.f32 0.0, %v1583
        %v1585 = vpop.f32.mrb[0].mxu0
        %v1586 = vpop.f32.mrb[0].mxu0
        %v1587 = vadd.f32 0.0, %v1586
        %v1588 = vpop.f32.mrb[0].mxu0
        %1589 = vmatprep.mubr.bf16.mxu0 %v1331
        %1590 = vmatmul.mubr.bf16.gmra.mrb[0].mxu0 %v1330
        %v1591 = vpop.f32.mrb[0].mxu0
        %v1592 = vadd.f32 0.0, %v1591
        %v1593 = vpop.f32.mrb[0].mxu0
        %v1594 = vpop.f32.mrb[0].mxu0
        %v1595 = vadd.f32 0.0, %v1594
        %v1596 = vpop.f32.mrb[0].mxu0
        %1597 = vmatprep.mubr.bf16.mxu0 %v1334
        %1598 = vmatmul.mubr.bf16.gmra.mrb[0].mxu0 %v1333
        %v1599 = vpop.f32.mrb[0].mxu0
        %v1600 = vadd.f32 0.0, %v1599
        %v1601 = vpop.f32.mrb[0].mxu0
        %v1602 = vpop.f32.mrb[0].mxu0
        %v1603 = vadd.f32 0.0, %v1602
        %v1604 = vpop.f32.mrb[0].mxu0
        %1605 = vmatprep.mubr.bf16.mxu0 %v1337
        %1606 = vmatmul.mubr.bf16.gmra.mrb[0].mxu0 %v1336
        %v1607 = vpop.f32.mrb[0].mxu0
        %v1608 = vadd.f32 0.0, %v1607
        %v1609 = vpop.f32.mrb[0].mxu0
        %v1610 = vpop.f32.mrb[0].mxu0
        %v1611 = vadd.f32 0.0, %v1610
        %v1612 = vpop.f32.mrb[0].mxu0
        %1613 = vmatprep.mubr.bf16.mxu0 %v1340
        %1614 = vmatmul.mubr.bf16.gmra.mrb[0].mxu0 %v1339
        %v1615 = vpop.f32.mrb[0].mxu0
        %v1616 = vadd.f32 0.0, %v1615
        %v1617 = vpop.f32.mrb[0].mxu0
        %v1618 = vpop.f32.mrb[0].mxu0
        %v1619 = vadd.f32 0.0, %v1618
        %v1620 = vpop.f32.mrb[0].mxu0
        %1621 = vmatprep.mubr.bf16.mxu0 %v1343
        %1622 = vmatmul.mubr.bf16.gmra.mrb[0].mxu0 %v1342
        %v1623 = vpop.f32.mrb[0].mxu0
        %v1624 = vadd.f32 0.0, %v1623
        %v1625 = vpop.f32.mrb[0].mxu0
        %v1626 = vpop.f32.mrb[0].mxu0
        %v1627 = vadd.f32 0.0, %v1626
        %v1628 = vpop.f32.mrb[0].mxu0
        %1629 = vmatprep.mubr.bf16.mxu0 %v1346
        %1630 = vmatmul.mubr.bf16.gmra.mrb[0].mxu0 %v1345
        %v1631 = vpop.f32.mrb[0].mxu0
        %v1632 = vadd.f32 0.0, %v1631
        %v1633 = vpop.f32.mrb[0].mxu0
        %v1634 = vpop.f32.mrb[0].mxu0
        %v1635 = vadd.f32 0.0, %v1634
        %v1636 = vpop.f32.mrb[0].mxu0
        %1637 = vdwg.mxu0
        %1638 = vmatprep.subr.bf16.mxu0 0
        %1639 = vmatpush1.bf16.msra.mxu0 %v1509
        %1640 = vmatprep.subr.bf16.mxu0 0
        %1641 = vmatpush1.bf16.msra.mxu0 %v1510
        %1642 = vmatprep.subr.bf16.mxu0 0
        %1643 = vmatpush1.bf16.msra.mxu0 %v1511
        %1644 = vmatprep.subr.bf16.mxu0 0
        %1645 = vmatpush1.bf16.msra.mxu0 %v1512
        %1646 = vmatprep.subr.bf16.mxu0 0
        %1647 = vmatpush1.bf16.msra.mxu0 %v1513
        %1648 = vmatprep.subr.bf16.mxu0 0
        %1649 = vmatpush1.bf16.msra.mxu0 %v1514
        %1650 = vmatprep.subr.bf16.mxu0 0
        %1651 = vmatpush1.bf16.msra.mxu0 %v1515
        %1652 = vmatprep.subr.bf16.mxu0 0
        %1653 = vmatpush1.bf16.msra.mxu0 %v1516
        %1654 = vmatprep.subr.bf16.mxu0 0
        %1655 = vmatpush1.bf16.msra.mxu0 0
        %1656 = vmatprep.subr.bf16.mxu0 0
        %1657 = vmatpush1.bf16.msra.mxu0 0
        %1658 = vmatprep.subr.bf16.mxu0 0
        %1659 = vmatpush1.bf16.msra.mxu0 0
        %1660 = vmatprep.subr.bf16.mxu0 0
        %1661 = vmatpush1.bf16.msra.mxu0 0
        %1662 = vmatprep.subr.bf16.mxu0 0
        %1663 = vmatpush1.bf16.msra.mxu0 0
        %1664 = vmatprep.subr.bf16.mxu0 0
        %1665 = vmatpush1.bf16.msra.mxu0 0
        %1666 = vmatprep.subr.bf16.mxu0 0
        %1667 = vmatpush1.bf16.msra.mxu0 0
        %1668 = vmatprep.subr.bf16.mxu0 0
        %1669 = vmatpush1.bf16.msra.mxu0 0
        %1670 = vmatprep.mubr.bf16.mxu0 0
        %1671 = vmatmul.mubr.bf16.gmra.mrb[0].mxu0 %v1326
        %v1672 = vpop.f32.mrb[0].mxu0
        %v1673 = vadd.f32 %v1576, %v1672
        %v1674 = vpop.f32.mrb[0].mxu0
        %v1675 = vpop.f32.mrb[0].mxu0
        %v1676 = vadd.f32 %v1579, %v1675
        %v1677 = vpop.f32.mrb[0].mxu0
        %1678 = vmatprep.mubr.bf16.mxu0 0
        %1679 = vmatmul.mubr.bf16.gmra.mrb[0].mxu0 %v1329
        %v1680 = vpop.f32.mrb[0].mxu0
        %v1681 = vadd.f32 %v1584, %v1680
        %v1682 = vpop.f32.mrb[0].mxu0
        %v1683 = vpop.f32.mrb[0].mxu0
        %v1684 = vadd.f32 %v1587, %v1683
        %v1685 = vpop.f32.mrb[0].mxu0
        %1686 = vmatprep.mubr.bf16.mxu0 0
        %1687 = vmatmul.mubr.bf16.gmra.mrb[0].mxu0 %v1332
        %v1688 = vpop.f32.mrb[0].mxu0
        %v1689 = vadd.f32 %v1592, %v1688
        %v1690 = vpop.f32.mrb[0].mxu0
        %v1691 = vpop.f32.mrb[0].mxu0
        %v1692 = vadd.f32 %v1595, %v1691
        %v1693 = vpop.f32.mrb[0].mxu0
        %1694 = vmatprep.mubr.bf16.mxu0 0
        %1695 = vmatmul.mubr.bf16.gmra.mrb[0].mxu0 %v1335
        %v1696 = vpop.f32.mrb[0].mxu0
        %v1697 = vadd.f32 %v1600, %v1696
        %v1698 = vpop.f32.mrb[0].mxu0
        %v1699 = vpop.f32.mrb[0].mxu0
        %v1700 = vadd.f32 %v1603, %v1699
        %v1701 = vpop.f32.mrb[0].mxu0
        %1702 = vmatprep.mubr.bf16.mxu0 0
        %1703 = vmatmul.mubr.bf16.gmra.mrb[0].mxu0 %v1338
        %v1704 = vpop.f32.mrb[0].mxu0
        %v1705 = vadd.f32 %v1608, %v1704
        %v1706 = vpop.f32.mrb[0].mxu0
        %v1707 = vpop.f32.mrb[0].mxu0
        %v1708 = vadd.f32 %v1611, %v1707
        %v1709 = vpop.f32.mrb[0].mxu0
        %1710 = vmatprep.mubr.bf16.mxu0 0
        %1711 = vmatmul.mubr.bf16.gmra.mrb[0].mxu0 %v1341
        %v1712 = vpop.f32.mrb[0].mxu0
        %v1713 = vadd.f32 %v1616, %v1712
        %v1714 = vpop.f32.mrb[0].mxu0
        %v1715 = vpop.f32.mrb[0].mxu0
        %v1716 = vadd.f32 %v1619, %v1715
        %v1717 = vpop.f32.mrb[0].mxu0
        %1718 = vmatprep.mubr.bf16.mxu0 0
        %1719 = vmatmul.mubr.bf16.gmra.mrb[0].mxu0 %v1344
        %v1720 = vpop.f32.mrb[0].mxu0
        %v1721 = vadd.f32 %v1624, %v1720
        %v1722 = vpop.f32.mrb[0].mxu0
        %v1723 = vpop.f32.mrb[0].mxu0
        %v1724 = vadd.f32 %v1627, %v1723
        %v1725 = vpop.f32.mrb[0].mxu0
        %1726 = vmatprep.mubr.bf16.mxu0 0
        %1727 = vmatmul.mubr.bf16.gmra.mrb[0].mxu0 %v1347
        %v1728 = vpop.f32.mrb[0].mxu0
        %v1729 = vadd.f32 %v1632, %v1728
        %v1730 = vpop.f32.mrb[0].mxu0
        %v1731 = vpop.f32.mrb[0].mxu0
        %v1732 = vadd.f32 %v1635, %v1731
        %v1733 = vpop.f32.mrb[0].mxu0
        %1734 = vdwg.mxu0
        %v1735 = vadd.f32 %v1261, %v1673
        %v1736 = vadd.f32 %v1264, %v1676
        %v1737 = vadd.f32 %v1269, %v1681
        %v1738 = vadd.f32 %v1272, %v1684
        %v1739 = vadd.f32 %v1277, %v1689
        %v1740 = vadd.f32 %v1280, %v1692
        %v1741 = vadd.f32 %v1285, %v1697
        %v1742 = vadd.f32 %v1288, %v1700
        %v1743 = vadd.f32 %v1293, %v1705
        %v1744 = vadd.f32 %v1296, %v1708
        %v1745 = vadd.f32 %v1301, %v1713
        %v1746 = vadd.f32 %v1304, %v1716
        %v1747 = vadd.f32 %v1309, %v1721
        %v1748 = vadd.f32 %v1312, %v1724
        %v1749 = vadd.f32 %v1317, %v1729
        %v1750 = vadd.f32 %v1320, %v1732
        %v1751 = vpack.c.bf16 %v1736, %v1735
        %v1752 = vpack.c.bf16 %v1738, %v1737
        %v1753 = vpack.c.bf16 %v1740, %v1739
        %v1754 = vpack.c.bf16 %v1742, %v1741
        %v1755 = vpack.c.bf16 %v1744, %v1743
        %v1756 = vpack.c.bf16 %v1746, %v1745
        %v1757 = vpack.c.bf16 %v1748, %v1747
        %v1758 = vpack.c.bf16 %v1750, %v1749
        %v1767 = vunpack.c.l.b16 %v1751
        %v1768 = vunpack.c.h.b16 %v1751
        %v1769 = vunpack.c.l.b16 %v1752
        %v1770 = vunpack.c.h.b16 %v1752
        %v1771 = vunpack.c.l.b16 %v1753
        %v1772 = vunpack.c.h.b16 %v1753
        %v1773 = vunpack.c.l.b16 %v1754
        %v1774 = vunpack.c.h.b16 %v1754
        %v1775 = vunpack.c.l.b16 %v1755
        %v1776 = vunpack.c.h.b16 %v1755
        %v1777 = vunpack.c.l.b16 %v1756
        %v1778 = vunpack.c.h.b16 %v1756
        %v1779 = vunpack.c.l.b16 %v1757
        %v1780 = vunpack.c.h.b16 %v1757
        %v1781 = vunpack.c.l.b16 %v1758
        %v1782 = vunpack.c.h.b16 %v1758
        %v1783 = vpack.c.b16 %v1767, %v1767
        %v1784 = vpack.c.b16 %v1768, %v1768
        %v1785 = vpack.c.b16 %v1769, %v1769
        %v1786 = vpack.c.b16 %v1770, %v1770
        %v1787 = vpack.c.b16 %v1771, %v1771
        %v1788 = vpack.c.b16 %v1772, %v1772
        %v1789 = vpack.c.b16 %v1773, %v1773
        %v1790 = vpack.c.b16 %v1774, %v1774
        %v1791 = vpack.c.b16 %v1775, %v1775
        %v1792 = vpack.c.b16 %v1776, %v1776
        %v1793 = vpack.c.b16 %v1777, %v1777
        %v1794 = vpack.c.b16 %v1778, %v1778
        %v1795 = vpack.c.b16 %v1779, %v1779
        %v1796 = vpack.c.b16 %v1780, %v1780
        %v1797 = vpack.c.b16 %v1781, %v1781
        %v1798 = vpack.c.b16 %v1782, %v1782
        %1815 = vst [vmem:[%s227] sm:$0xf] %v1783
        %1816 = vst [vmem:[%s227 + $0x4] sm:$0xf] %v1784
        %1817 = vst [vmem:[%s227 + $0x8] sm:$0xf] %v1785
        %1818 = vst [vmem:[%s227 + $0xc] sm:$0xf] %v1786
        %1819 = vst [vmem:[%s227 + $0x10] sm:$0xf] %v1787
        %1820 = vst [vmem:[%s227 + $0x14] sm:$0xf] %v1788
        %1821 = vst [vmem:[%s227 + $0x18] sm:$0xf] %v1789
        %1822 = vst [vmem:[%s227 + $0x1c] sm:$0xf] %v1790
        %1823 = vst [vmem:[%s227 + $0x20] sm:$0xf] %v1791
        %1824 = vst [vmem:[%s227 + $0x24] sm:$0xf] %v1792
        %1825 = vst [vmem:[%s227 + $0x28] sm:$0xf] %v1793
        %1826 = vst [vmem:[%s227 + $0x2c] sm:$0xf] %v1794
        %1827 = vst [vmem:[%s227 + $0x30] sm:$0xf] %v1795
        %1828 = vst [vmem:[%s227 + $0x34] sm:$0xf] %v1796
        %1829 = vst [vmem:[%s227 + $0x38] sm:$0xf] %v1797
        %1830 = vst [vmem:[%s227 + $0x3c] sm:$0xf] %v1798
        %v1831 = vld [vmem:[#allocation5] sm:$0xff]
        %v1832 = vadd.f32 %v1735, %v1736
        %v1833 = vrot.slane %v1832, 4
        %v1834 = vadd.f32 %v1832, %v1833
        %v1835 = vrot.slane %v1834, 2
        %v1836 = vadd.f32 %v1834, %v1835
        %v1837 = vrot.slane %v1836, 1
        %v1838 = vadd.f32 %v1836, %v1837
        %v1839 = vadd.f32 %v1737, %v1738
        %v1840 = vrot.slane %v1839, 4
        %v1841 = vadd.f32 %v1839, %v1840
        %v1842 = vrot.slane %v1841, 2
        %v1843 = vadd.f32 %v1841, %v1842
        %v1844 = vrot.slane %v1843, 1
        %v1845 = vadd.f32 %v1843, %v1844
        %v1846 = vadd.f32 %v1739, %v1740
        %v1847 = vrot.slane %v1846, 4
        %v1848 = vadd.f32 %v1846, %v1847
        %v1849 = vrot.slane %v1848, 2
        %v1850 = vadd.f32 %v1848, %v1849
        %v1851 = vrot.slane %v1850, 1
        %v1852 = vadd.f32 %v1850, %v1851
        %v1853 = vadd.f32 %v1741, %v1742
        %v1854 = vrot.slane %v1853, 4
        %v1855 = vadd.f32 %v1853, %v1854
        %v1856 = vrot.slane %v1855, 2
        %v1857 = vadd.f32 %v1855, %v1856
        %v1858 = vrot.slane %v1857, 1
        %v1859 = vadd.f32 %v1857, %v1858
        %v1860 = vadd.f32 %v1743, %v1744
        %v1861 = vrot.slane %v1860, 4
        %v1862 = vadd.f32 %v1860, %v1861
        %v1863 = vrot.slane %v1862, 2
        %v1864 = vadd.f32 %v1862, %v1863
        %v1865 = vrot.slane %v1864, 1
        %v1866 = vadd.f32 %v1864, %v1865
        %v1867 = vadd.f32 %v1745, %v1746
        %v1868 = vrot.slane %v1867, 4
        %v1869 = vadd.f32 %v1867, %v1868
        %v1870 = vrot.slane %v1869, 2
        %v1871 = vadd.f32 %v1869, %v1870
        %v1872 = vrot.slane %v1871, 1
        %v1873 = vadd.f32 %v1871, %v1872
        %v1874 = vadd.f32 %v1747, %v1748
        %v1875 = vrot.slane %v1874, 4
        %v1876 = vadd.f32 %v1874, %v1875
        %v1877 = vrot.slane %v1876, 2
        %v1878 = vadd.f32 %v1876, %v1877
        %v1879 = vrot.slane %v1878, 1
        %v1880 = vadd.f32 %v1878, %v1879
        %v1881 = vadd.f32 %v1749, %v1750
        %v1882 = vrot.slane %v1881, 4
        %v1883 = vadd.f32 %v1881, %v1882
        %v1884 = vrot.slane %v1883, 2
        %v1885 = vadd.f32 %v1883, %v1884
        %v1886 = vrot.slane %v1885, 1
        %v1887 = vadd.f32 %v1885, %v1886
        %vm1896 = vcmask 1041409
        %v1897 = vsel %vm1896, %v1845, %v1838
        %vm1898 = vcmask 1042434
        %v1899 = vsel %vm1898, %v1852, %v1897
        %vm1900 = vcmask 1043459
        %v1901 = vsel %vm1900, %v1859, %v1899
        %vm1902 = vcmask 1044484
        %v1903 = vsel %vm1902, %v1866, %v1901
        %vm1904 = vcmask 1045509
        %v1905 = vsel %vm1904, %v1873, %v1903
        %vm1906 = vcmask 1046534
        %v1907 = vsel %vm1906, %v1880, %v1905
        %vm1908 = vcmask 1047559
        %v1909 = vsel %vm1908, %v1887, %v1907
        %v1911 = vadd.f32 %v1831, %v1909
        %1912 = vst [vmem:[#allocation5] sm:$0xff] %v1911
        %v1913 = vld [vmem:[#allocation6] sm:$0xff]
        %v1914 = vmul.f32 %v1735, %v1735
        %v1915 = vmul.f32 %v1736, %v1736
        %v1916 = vmul.f32 %v1737, %v1737
        %v1917 = vmul.f32 %v1738, %v1738
        %v1918 = vmul.f32 %v1739, %v1739
        %v1919 = vmul.f32 %v1740, %v1740
        %v1920 = vmul.f32 %v1741, %v1741
        %v1921 = vmul.f32 %v1742, %v1742
        %v1922 = vmul.f32 %v1743, %v1743
        %v1923 = vmul.f32 %v1744, %v1744
        %v1924 = vmul.f32 %v1745, %v1745
        %v1925 = vmul.f32 %v1746, %v1746
        %v1926 = vmul.f32 %v1747, %v1747
        %v1927 = vmul.f32 %v1748, %v1748
        %v1928 = vmul.f32 %v1749, %v1749
        %v1929 = vmul.f32 %v1750, %v1750
        %v1930 = vadd.f32 %v1914, %v1915
        %v1931 = vrot.slane %v1930, 4
        %v1932 = vadd.f32 %v1930, %v1931
        %v1933 = vrot.slane %v1932, 2
        %v1934 = vadd.f32 %v1932, %v1933
        %v1935 = vrot.slane %v1934, 1
        %v1936 = vadd.f32 %v1934, %v1935
        %v1937 = vadd.f32 %v1916, %v1917
        %v1938 = vrot.slane %v1937, 4
        %v1939 = vadd.f32 %v1937, %v1938
        %v1940 = vrot.slane %v1939, 2
        %v1941 = vadd.f32 %v1939, %v1940
        %v1942 = vrot.slane %v1941, 1
        %v1943 = vadd.f32 %v1941, %v1942
        %v1944 = vadd.f32 %v1918, %v1919
        %v1945 = vrot.slane %v1944, 4
        %v1946 = vadd.f32 %v1944, %v1945
        %v1947 = vrot.slane %v1946, 2
        %v1948 = vadd.f32 %v1946, %v1947
        %v1949 = vrot.slane %v1948, 1
        %v1950 = vadd.f32 %v1948, %v1949
        %v1951 = vadd.f32 %v1920, %v1921
        %v1952 = vrot.slane %v1951, 4
        %v1953 = vadd.f32 %v1951, %v1952
        %v1954 = vrot.slane %v1953, 2
        %v1955 = vadd.f32 %v1953, %v1954
        %v1956 = vrot.slane %v1955, 1
        %v1957 = vadd.f32 %v1955, %v1956
        %v1958 = vadd.f32 %v1922, %v1923
        %v1959 = vrot.slane %v1958, 4
        %v1960 = vadd.f32 %v1958, %v1959
        %v1961 = vrot.slane %v1960, 2
        %v1962 = vadd.f32 %v1960, %v1961
        %v1963 = vrot.slane %v1962, 1
        %v1964 = vadd.f32 %v1962, %v1963
        %v1965 = vadd.f32 %v1924, %v1925
        %v1966 = vrot.slane %v1965, 4
        %v1967 = vadd.f32 %v1965, %v1966
        %v1968 = vrot.slane %v1967, 2
        %v1969 = vadd.f32 %v1967, %v1968
        %v1970 = vrot.slane %v1969, 1
        %v1971 = vadd.f32 %v1969, %v1970
        %v1972 = vadd.f32 %v1926, %v1927
        %v1973 = vrot.slane %v1972, 4
        %v1974 = vadd.f32 %v1972, %v1973
        %v1975 = vrot.slane %v1974, 2
        %v1976 = vadd.f32 %v1974, %v1975
        %v1977 = vrot.slane %v1976, 1
        %v1978 = vadd.f32 %v1976, %v1977
        %v1979 = vadd.f32 %v1928, %v1929
        %v1980 = vrot.slane %v1979, 4
        %v1981 = vadd.f32 %v1979, %v1980
        %v1982 = vrot.slane %v1981, 2
        %v1983 = vadd.f32 %v1981, %v1982
        %v1984 = vrot.slane %v1983, 1
        %v1985 = vadd.f32 %v1983, %v1984
        %v1994 = vsel %vm1896, %v1943, %v1936
        %v1995 = vsel %vm1898, %v1950, %v1994
        %v1996 = vsel %vm1900, %v1957, %v1995
        %v1997 = vsel %vm1902, %v1964, %v1996
        %v1998 = vsel %vm1904, %v1971, %v1997
        %v1999 = vsel %vm1906, %v1978, %v1998
        %v2000 = vsel %vm1908, %v1985, %v1999
        %v2002 = vadd.f32 %v1913, %v2000
        %2003 = vst [vmem:[#allocation6] sm:$0xff] %v2002
        // Predicated region
        $region57: #{_lambda_.2} parent=27 // pred_check
          %p2004 = pneg %p375
        $region58: #{_lambda_.2} parent=27 // pred_check_branch
          %2006 = sbr.rel (%p2004) target = $region60
        $region59: #{_lambda_.2} parent=27 // pred_region
          %v2007 = vld [vmem:[#allocation5] sm:$0xff]
          %v2008 = vrot.slane %v2007, 4
          %v2009 = vadd.f32 %v2007, %v2008
          %v2010 = vrot.slane %v2009, 2
          %v2011 = vadd.f32 %v2009, %v2010
          %v2012 = vrot.slane %v2011, 1
          %v2013 = vadd.f32 %v2011, %v2012
          %v2014 = vld [vmem:[#allocation6] sm:$0xff]
          %v2015 = vrot.slane %v2014, 4
          %v2016 = vadd.f32 %v2014, %v2015
          %v2017 = vrot.slane %v2016, 2
          %v2018 = vadd.f32 %v2016, %v2017
          %v2019 = vrot.slane %v2018, 1
          %v2020 = vadd.f32 %v2018, %v2019
          %vm2021 = vcmask 1040384
          %v2022 = vsel %vm2021, %v2013, %v2020
          %2023 = vst [vmem:[%s234] sm:$0x3] %v2022
        $region60: #{_lambda_.2} parent=27 // pred_fallthru
          _
        %s2024 = sand.u32 %s97, 1
        %s2025 = scalar_lea.sflag [#allocation10], %s2024
        %s2026 = sand.u32 %s97, 1
        %s2027 = smul.addr %s2026, 64
        %s2028 = scalar_lea.vmem [#allocation13], %s2027
        %s2029 = sand.u32 %s123, 1
        %s2030 = scalar_lea.sflag [#allocation15], %s2029
        %s2031 = sand.u32 %s123, 1
        %s2032 = smul.addr %s2031, 2
        %s2033 = scalar_lea.vmem [#allocation14], %s2032
        // Predicated region
        $region61: #{_lambda_.2} parent=27 // pred_check
          %p2034 = pneg %p107
        $region62: #{_lambda_.2} parent=27 // pred_check_branch
          %2036 = sbr.rel (%p2034) target = $region64
        $region63: #{_lambda_.2} parent=27 // pred_region
          %s2037 = smul.u32 8, %s31
          %s2039 = ssub.s32 1024, 1024
          %2040 = vsyncadd %s2025, %s2039
          %s2041 = smul.addr %s2037, 2
          %s2042 = smul.addr %s30, 32
          %s2043 = sadd.s32 %s2041, %s2042
          %s2044 = smul.addr %s2043, 64
          %s2045 = scalar_lea.hbm %s3, %s2044
          %s2046 = sshll.u32 %s2028, 4
          %s2047 = int_to_ptr.vmem [resolvable:$true] %s2046
          %2052 = dma.vmem_to_hbm [thread:$0]  %s2047, 1024, %s2045, %s2025, 64, 64, 4
        $region64: #{_lambda_.2} parent=27 // pred_fallthru
          _
        // Predicated region
        $region65: #{_lambda_.2} parent=27 // pred_check
          %p2053 = pneg %p133
        $region66: #{_lambda_.2} parent=27 // pred_check_branch
          %2055 = sbr.rel (%p2053) target = $region68
        $region67: #{_lambda_.2} parent=27 // pred_region
          %s2057 = ssub.s32 32, 32
          %2058 = vsyncadd %s2030, %s2057
          %s2059 = smul.addr %s30, 32
          %s2060 = scalar_lea.hbm %s4, %s2059
          %s2062 = sshll.u32 %s2033, 4
          %s2063 = int_to_ptr.vmem [resolvable:$true] %s2062
          %2065 = dma.vmem_to_hbm [thread:$0]  %s2063, 32, %s2060, %s2030
        $region68: #{_lambda_.2} parent=27 // pred_fallthru
          _
      $region28: #{_lambda_.2} parent=5 // pred_fallthru
        _
      %p2066 = scmp.le.s32.totalorder 2, %s21
      // Predicated region
      $region69: #{_lambda_.2} parent=5 // pred_check
        %p2067 = pneg %p2066
      $region70: #{_lambda_.2} parent=5 // pred_check_branch
        %2069 = sbr.rel (%p2067) target = $region72
      $region71: #{_lambda_.2} parent=5 // pred_region
        %s2070 = ssub.s32 %s21, 2
        // Predicated region
        $region73: #{_lambda_.2} parent=71 // pred_check
          %p2071 = pneg %p113
        $region74: #{_lambda_.2} parent=71 // pred_check_branch
          %2073 = sbr.rel (%p2071) target = $region76
        $region75: #{_lambda_.2} parent=71 // pred_region
          %s2074 = sand.u32 %s98, 1
          %s2075 = scalar_lea.sflag [#allocation10], %s2074
          %s2076 = sand.u32 %s98, 1
          %s2077 = smul.addr %s2076, 64
          %s2078 = scalar_lea.vmem [#allocation13], %s2077
          %2079 = dma.done %s2075, 1024
        $region76: #{_lambda_.2} parent=71 // pred_fallthru
          _
        // Predicated region
        $region77: #{_lambda_.2} parent=71 // pred_check
          %p2080 = pneg %p139
        $region78: #{_lambda_.2} parent=71 // pred_check_branch
          %2082 = sbr.rel (%p2080) target = $region80
        $region79: #{_lambda_.2} parent=71 // pred_region
          %s2083 = sand.u32 %s124, 1
          %s2084 = scalar_lea.sflag [#allocation15], %s2083
          %s2085 = sand.u32 %s124, 1
          %s2086 = smul.addr %s2085, 2
          %s2087 = scalar_lea.vmem [#allocation14], %s2086
          %2088 = dma.done %s2084, 32
        $region80: #{_lambda_.2} parent=71 // pred_fallthru
          _
      $region72: #{_lambda_.2} parent=5 // pred_fallthru
        _
    $region6: #{_lambda_.2} parent=1 // loop_footer
      %s25 = sadd.s32 1, %s21
    $region7: #{_lambda_.2} parent=1 // loop_footer_branch
      %20 = sbr.rel target = $region3
    $region8: #{_lambda_.2} parent=1 // loop_exit
      _
    %2089 = vsyncpa [#allocation9], 1
    %s2090 = scalar_lea.sflag [#allocation9], 1
    %2091 = vsyncpa %s2090, 1
    %2092 = vsyncpa [#allocation12], 1
    %2093 = vsyncpa [#allocation10], 1
    %s2094 = scalar_lea.sflag [#allocation10], 1
    %2095 = vsyncpa %s2094, 1
    %2096 = vsyncpa [#allocation15], 1
    %s2097 = scalar_lea.sflag [#allocation15], 1
    %2098 = vsyncpa %s2097, 1
  %2099 = vsyncmov [#allocation7]
  %s2100 = vpop.sfrf %2099
  %p2101 = scmp.eq.s32.totalorder %s2100, 0
  %p2102 = pneg %p2101
  %2104 = shalt.err (%p2102)
  %s2105 = scalar_lea.sflag [#allocation7], 1
  %2106 = vsyncmov %s2105
  %s2107 = vpop.sfrf %2106
  %p2108 = scmp.eq.s32.totalorder %s2107, 0
  %p2109 = pneg %p2108
  %2111 = shalt.err (%p2109)

</llo_original>
